<compile_context>
chip_gen: v5e
topology: v5e:2x2
jax: 0.10.0
libtpu: 0.0.40
codegen_flags: <defaults>
</compile_context>

<pallas_src>
import numpy as np
import jax
import jax.numpy as jnp
from jax.experimental import pallas as pl
from jax.experimental.pallas import tpu as pltpu


def _layer_norm(v, g, b, eps=1e-5):
    mu = jnp.mean(v, axis=-1, keepdims=True)
    var = jnp.mean(jnp.square(v - mu), axis=-1, keepdims=True)
    return (v - mu) * jax.lax.rsqrt(var + eps) * g + b


# --------------------------------------------------------------------------------------
# Pallas kernel: one S4 layer per grid step along the 'arbitrary' axis, batch tile of 1
# along the leading 'parallel' axis. Activations carried in a VMEM scratch.
# --------------------------------------------------------------------------------------
def s4_stack_kernel(h_in_ref, kT_ref, dskip_ref, wglu_ref, bglu_ref,
                    gln_ref, btln_ref, h_out_ref, h_carry):
    layer = pl.program_id(1)
    L, D = h_carry.shape

    # Layer 0: load the (post-norm'd) input activations for this batch tile.
    @pl.when(layer == 0)
    def _():
        h_carry[...] = h_in_ref[0]

    u = h_carry[...]                                           # (L, D) f32

    # ---- depthwise causal SSM convolution, on the MXU ----
    # conv[l, d] = sum_{s<=l} k[d, l-s] * u[s, d]
    #            = sum_{s,j} 1[l == s + j] * u[s, d] * k[d, j]   (one-hot Toeplitz matmul)
    row = jax.lax.broadcasted_iota(jnp.int32, (L, L * L), 0)   # l
    col = jax.lax.broadcasted_iota(jnp.int32, (L, L * L), 1)   # c = s*L + j
    if (L & (L - 1)) == 0:            # power-of-two L: shift/mask (robust int lowering)
        s_idx = col >> (L.bit_length() - 1)
        j_idx = col & (L - 1)
    else:
        s_idx = col // L
        j_idx = col - s_idx * L
    G = jnp.where(row == s_idx + j_idx, 1.0, 0.0).astype(jnp.bfloat16)   # (L, L*L)

    u_b = u.astype(jnp.bfloat16)                               # (L, D)  indexed by s
    k_b = kT_ref[0].astype(jnp.bfloat16)                       # (L, D)  indexed by j
    R = (u_b[:, None, :] * k_b[None, :, :]).reshape(L * L, D)  # [(s, j), d]
    conv = jnp.dot(G, R, preferred_element_type=jnp.float32)   # (L, D) f32, MXU

    # ---- D skip + GELU + fused GLU output linear ----
    y = conv + u * dskip_ref[0]
    y = jax.nn.gelu(y, approximate=True)   # TODO(synk): torch uses exact erf GELU
    z = jnp.dot(y.astype(jnp.bfloat16), wglu_ref[0].astype(jnp.bfloat16),
                preferred_element_type=jnp.float32) + bglu_ref[0]        # (L, 2D)
    glu = z[:, :D] * jax.nn.sigmoid(z[:, D:])

    # ---- SSM wrapper: residual add + LayerNorm ----
    h_new = _layer_norm(u + glu, gln_ref[0], btln_ref[0])
    h_carry[...] = h_new
    h_out_ref[...] = h_new[None]


def s4_layer_stack(h0, params):
    B, L, D = h0.shape
    k_t = params["k_t"]
    n_layers = k_t.shape[0]
    return pl.pallas_call(
        s4_stack_kernel,
        out_shape=jax.ShapeDtypeStruct((B, L, D), jnp.float32),
        grid_spec=pltpu.PrefetchScalarGridSpec(
            num_scalar_prefetch=0,
            grid=(B, n_layers),                                  # (parallel, arbitrary)
            in_specs=[
                pl.BlockSpec((1, L, D), lambda b, i: (b, 0, 0)),       # activations
                pl.BlockSpec((1, L, D), lambda b, i: (i, 0, 0)),       # conv kernel k^T
                pl.BlockSpec((1, 1, D), lambda b, i: (i, 0, 0)),       # D skip
                pl.BlockSpec((1, D, 2 * D), lambda b, i: (i, 0, 0)),   # fused GLU weight
                pl.BlockSpec((1, 1, 2 * D), lambda b, i: (i, 0, 0)),   # fused GLU bias
                pl.BlockSpec((1, 1, D), lambda b, i: (i, 0, 0)),       # LN gamma
                pl.BlockSpec((1, 1, D), lambda b, i: (i, 0, 0)),       # LN beta
            ],
            out_specs=pl.BlockSpec((1, L, D), lambda b, i: (b, 0, 0)),
            scratch_shapes=[pltpu.VMEM((L, D), jnp.float32)],          # layer carry
        ),
        compiler_params=pltpu.CompilerParams(
            dimension_semantics=("parallel", "arbitrary"),
            vmem_limit_bytes=32 * 1024 * 1024,
        ),
    )(h0, k_t, params["dskip"], params["wglu"], params["bglu"],
      params["g_ln"], params["bt_ln"])


@jax.jit
def ssm_forward(x, params):
    B, C, H, W = x.shape
    L = H * W
    xs = x.reshape(B, L, C).astype(jnp.float32)   # torch `.view(B, H*W, C)` semantics
    # Tiny input projection + post-norm: plain XLA (per perf review).
    h0 = _layer_norm(xs @ params["w_in"] + params["b_in"],
                     params["g_post"], params["bt_post"])
    h = s4_layer_stack(h0, params)                # Pallas: the S4 layer stack
    # Mean pool over sequence + tiny output Linear: plain XLA (per perf review).
    return jnp.mean(h, axis=1) @ params["w_out"] + params["b_out"]


# --------------------------------------------------------------------------------------
# Pure-JAX f32 reference of the same forward (gather-based Toeplitz) for validation.
# --------------------------------------------------------------------------------------
@jax.jit
def ref_forward(x, params):
    B, C, H, W = x.shape
    L = H * W
    xs = x.reshape(B, L, C).astype(jnp.float32)
    h = _layer_norm(xs @ params["w_in"] + params["b_in"],
                    params["g_post"], params["bt_post"])
    D = h.shape[-1]
    n_layers = params["k_t"].shape[0]
    idx = jnp.arange(L)
    diff = idx[:, None] - idx[None, :]
    for i in range(n_layers):
        k = params["k_t"][i].T                                   # (D, L)
        T = jnp.where(diff >= 0, k[:, jnp.clip(diff, 0, L - 1)], 0.0)  # (D, L, L)
        u = h
        conv = jnp.einsum("dls,bsd->bld", T, u)
        y = jax.nn.gelu(conv + u * params["dskip"][i], approximate=True)
        z = y @ params["wglu"][i] + params["bglu"][i]
        glu = z[..., :D] * jax.nn.sigmoid(z[..., D:])
        h = _layer_norm(u + glu, params["g_ln"][i], params["bt_ln"][i])
    return jnp.mean(h, axis=1) @ params["w_out"] + params["b_out"]


def make_params(d_input, d_model, d_state, d_output, n_layers, L, seed=42):
    """Deterministic synthetic parameters (shapes follow the PyTorch module)."""
    rng = np.random.default_rng(seed)
    p = {}
    p["w_in"] = (rng.standard_normal((d_input, d_model)) / np.sqrt(d_input)).astype(np.float32)
    p["b_in"] = np.zeros((d_model,), np.float32)
    p["g_post"] = np.ones((d_model,), np.float32)
    p["bt_post"] = np.zeros((d_model,), np.float32)

    k_t, dskip, wglu, bglu, g_ln, bt_ln = [], [], [], [], [], []
    for _ in range(n_layers):
        # Diagonal (S4D-style) SSM conv kernel, ZOH discretization, B = 1.
        log_dt = rng.uniform(np.log(1e-3), np.log(1e-1), size=(d_model, 1))
        dt = np.exp(log_dt)
        A = np.broadcast_to(-0.5 + 1j * np.pi * np.arange(d_state)[None, :],
                            (d_model, d_state))
        Cc = (rng.standard_normal((d_model, d_state))
              + 1j * rng.standard_normal((d_model, d_state))) * np.sqrt(0.5)
        dA = np.exp(dt * A)
        dBz = (dA - 1.0) / A
        pw = dA[:, :, None] ** np.arange(L)[None, None, :]                 # (D, N, L)
        k = (2.0 * np.real(np.einsum("dn,dnl->dl", Cc * dBz, pw))).astype(np.float32)
        k_t.append(np.ascontiguousarray(k.T))                              # (L, D)
        dskip.append(rng.standard_normal((1, d_model)).astype(np.float32))
        wa = (rng.standard_normal((d_model, d_model)) / np.sqrt(d_model)).astype(np.float32)
        wb = (rng.standard_normal((d_model, d_model)) / np.sqrt(d_model)).astype(np.float32)
        wglu.append(np.concatenate([wa, wb], axis=1))                      # fused (D, 2D)
        bglu.append(np.zeros((1, 2 * d_model), np.float32))
        g_ln.append(np.ones((1, d_model), np.float32))
        bt_ln.append(np.zeros((1, d_model), np.float32))

    p["k_t"] = np.stack(k_t)          # (n_layers, L, D)
    p["dskip"] = np.stack(dskip)      # (n_layers, 1, D)
    p["wglu"] = np.stack(wglu)        # (n_layers, D, 2D)
    p["bglu"] = np.stack(bglu)        # (n_layers, 1, 2D)
    p["g_ln"] = np.stack(g_ln)        # (n_layers, 1, D)
    p["bt_ln"] = np.stack(bt_ln)      # (n_layers, 1, D)
    p["w_out"] = (rng.standard_normal((d_model, d_output)) / np.sqrt(d_model)).astype(np.float32)
    p["b_out"] = np.zeros((d_output,), np.float32)
    return {name: jnp.asarray(v) for name, v in p.items()}


if __name__ == "__main__":
    # Small, module-consistent shapes: x is NCHW with C = d_input; d_model keeps the
    # module default 128 so activations are lane-dense.
    B, d_input, H, W = 2, 3, 8, 8
    d_model, d_state, d_output, n_layers = 128, 64, 10, 2
    L = H * W

    params = make_params(d_input, d_model, d_state, d_output, n_layers, L, seed=42)
    x = jax.random.normal(jax.random.PRNGKey(0), (B, d_input, H, W), dtype=jnp.float32)

    out = jax.block_until_ready(ssm_forward(x, params))
    assert out.shape == (B, d_output), out.shape
    assert bool(jnp.all(jnp.isfinite(out)))

    # Validate the Pallas kernel against the f32 pure-JAX reference (bf16 matmul drift
    # is the only expected difference).
    ref = jax.block_until_ready(ref_forward(x, params))
    err = float(jnp.max(jnp.abs(out - ref)))
    assert err < 0.25, f"kernel vs f32 reference: max abs err {err:.4f}"

    print("KERNEL_OK")
</pallas_src>

<mosaic_0001>
module attributes {stable_mosaic.version = 11 : i64} {
  func.func @s4_stack_kernel(%arg0: i32, %arg1: i32, %arg2: memref<1x64x128xf32, #tpu.memory_space<vmem>>, %arg3: memref<1x64x128xf32, #tpu.memory_space<vmem>>, %arg4: memref<1x1x128xf32, #tpu.memory_space<vmem>>, %arg5: memref<1x128x256xf32, #tpu.memory_space<vmem>>, %arg6: memref<1x1x256xf32, #tpu.memory_space<vmem>>, %arg7: memref<1x1x128xf32, #tpu.memory_space<vmem>>, %arg8: memref<1x1x128xf32, #tpu.memory_space<vmem>>, %arg9: memref<1x64x128xf32, #tpu.memory_space<vmem>>, %arg10: memref<64x128xf32, #tpu.memory_space<vmem>>) attributes {dimension_semantics = [#tpu.dimension_semantics<parallel>, #tpu.dimension_semantics<arbitrary>], iteration_bounds = array<i64: 2, 2>, scalar_prefetch = 0 : i64, scratch_operands = 1 : i64, tpu.core_type = #tpu.core_type<tc>, window_params = [{transform_indices = @transform_0, window_bounds = array<i64: 1, 64, 128>}, {transform_indices = @transform_1, window_bounds = array<i64: 1, 64, 128>}, {transform_indices = @transform_2, window_bounds = array<i64: 1, 1, 128>}, {transform_indices = @transform_3, window_bounds = array<i64: 1, 128, 256>}, {transform_indices = @transform_4, window_bounds = array<i64: 1, 1, 256>}, {transform_indices = @transform_5, window_bounds = array<i64: 1, 1, 128>}, {transform_indices = @transform_6, window_bounds = array<i64: 1, 1, 128>}, {transform_indices = @transform_7, window_bounds = array<i64: 1, 64, 128>}]} {
    %c0_i32 = arith.constant 0 : i32
    %0 = arith.cmpi eq, %arg1, %c0_i32 : i32
    %1 = arith.extui %0 : i1 to i32
    %c0_i32_0 = arith.constant 0 : i32
    %2 = arith.cmpi ne, %1, %c0_i32_0 : i32
    scf.if %2 {
      %c0_38 = arith.constant 0 : index
      %c0_39 = arith.constant 0 : index
      %c0_40 = arith.constant 0 : index
      %92 = vector.load %arg2[%c0_38, %c0_39, %c0_40] : memref<1x64x128xf32, #tpu.memory_space<vmem>>, vector<1x64x128xf32>
      %93 = vector.shape_cast %92 : vector<1x64x128xf32> to vector<64x128xf32>
      %c0_41 = arith.constant 0 : index
      %c0_42 = arith.constant 0 : index
      %94 = vector.load %arg10[%c0_41, %c0_42] : memref<64x128xf32, #tpu.memory_space<vmem>>, vector<64x128xf32>
      tpu.vector_store %arg10[%c0_41, %c0_42], %93 {strides = array<i32>} : memref<64x128xf32, #tpu.memory_space<vmem>>, vector<64x128xf32>,
    } else {
    }
    %c0 = arith.constant 0 : index
    %c0_1 = arith.constant 0 : index
    %3 = vector.load %arg10[%c0, %c0_1] : memref<64x128xf32, #tpu.memory_space<vmem>>, vector<64x128xf32>
    %4 = tpu.iota {dimensions = array<i32: 0>} : vector<64x4096xi32>
    %5 = tpu.iota {dimensions = array<i32: 1>} : vector<64x4096xi32>
    %c6_i32 = arith.constant 6 : i32
    %6 = vector.broadcast %c6_i32 : i32 to vector<64x4096xi32>
    %7 = arith.shrsi %5, %6 : vector<64x4096xi32>
    %c63_i32 = arith.constant 63 : i32
    %8 = vector.broadcast %c63_i32 : i32 to vector<64x4096xi32>
    %9 = arith.andi %5, %8 : vector<64x4096xi32>
    %10 = arith.addi %7, %9 : vector<64x4096xi32>
    %11 = arith.cmpi eq, %4, %10 : vector<64x4096xi32>
    %cst = arith.constant 1.000000e+00 : f32
    %cst_2 = arith.constant 0.000000e+00 : f32
    %12 = vector.broadcast %cst : f32 to vector<64x4096xf32>
    %13 = vector.broadcast %cst_2 : f32 to vector<64x4096xf32>
    %14 = arith.select %11, %12, %13 : vector<64x4096xi1>, vector<64x4096xf32>
    %15 = arith.truncf %14 : vector<64x4096xf32> to vector<64x4096xbf16>
    %16 = arith.truncf %3 : vector<64x128xf32> to vector<64x128xbf16>
    %c0_3 = arith.constant 0 : index
    %c0_4 = arith.constant 0 : index
    %c0_5 = arith.constant 0 : index
    %17 = vector.load %arg3[%c0_3, %c0_4, %c0_5] : memref<1x64x128xf32, #tpu.memory_space<vmem>>, vector<1x64x128xf32>
    %18 = vector.shape_cast %17 : vector<1x64x128xf32> to vector<64x128xf32>
    %19 = arith.truncf %18 : vector<64x128xf32> to vector<64x128xbf16>
    %20 = vector.shape_cast %16 : vector<64x128xbf16> to vector<64x1x128xbf16>
    %21 = vector.shape_cast %19 : vector<64x128xbf16> to vector<1x64x128xbf16>
    %22 = vector.broadcast %20 : vector<64x1x128xbf16> to vector<64x64x128xbf16>
    %23 = vector.broadcast %21 : vector<1x64x128xbf16> to vector<64x64x128xbf16>
    %24 = arith.mulf %22, %23 : vector<64x64x128xbf16>
    %25 = vector.shape_cast %24 : vector<64x64x128xbf16> to vector<4096x128xbf16>
    %cst_6 = arith.constant dense<0.000000e+00> : vector<64x128xf32>
    %26 = tpu.matmul %15, %25, %cst_6 {dimension_numbers = #tpu.dot_dimension_numbers<[1], [0], [0], [1], [0, 0, 1, 1], [], []>} : vector<64x4096xbf16>, vector<4096x128xbf16>, vector<64x128xf32> -> vector<64x128xf32>
    %c0_7 = arith.constant 0 : index
    %c0_8 = arith.constant 0 : index
    %c0_9 = arith.constant 0 : index
    %27 = vector.load %arg4[%c0_7, %c0_8, %c0_9] : memref<1x1x128xf32, #tpu.memory_space<vmem>>, vector<1x1x128xf32>
    %28 = vector.shape_cast %27 : vector<1x1x128xf32> to vector<1x128xf32>
    %29 = vector.broadcast %28 : vector<1x128xf32> to vector<64x128xf32>
    %30 = arith.mulf %3, %29 : vector<64x128xf32>
    %31 = arith.addf %26, %30 : vector<64x128xf32>
    %32 = arith.mulf %31, %31 : vector<64x128xf32>
    %33 = arith.mulf %31, %32 : vector<64x128xf32>
    %cst_10 = arith.constant 4.471500e-02 : f32
    %34 = vector.broadcast %cst_10 : f32 to vector<64x128xf32>
    %35 = arith.mulf %34, %33 : vector<64x128xf32>
    %36 = arith.addf %31, %35 : vector<64x128xf32>
    %cst_11 = arith.constant 0.797884583 : f32
    %37 = vector.broadcast %cst_11 : f32 to vector<64x128xf32>
    %38 = arith.mulf %37, %36 : vector<64x128xf32>
    %39 = math.tanh %38 : vector<64x128xf32>
    %cst_12 = arith.constant 1.000000e+00 : f32
    %40 = vector.broadcast %cst_12 : f32 to vector<64x128xf32>
    %41 = arith.addf %40, %39 : vector<64x128xf32>
    %cst_13 = arith.constant 5.000000e-01 : f32
    %42 = vector.broadcast %cst_13 : f32 to vector<64x128xf32>
    %43 = arith.mulf %42, %41 : vector<64x128xf32>
    %44 = arith.mulf %31, %43 : vector<64x128xf32>
    %45 = arith.truncf %44 : vector<64x128xf32> to vector<64x128xbf16>
    %c0_14 = arith.constant 0 : index
    %c0_15 = arith.constant 0 : index
    %c0_16 = arith.constant 0 : index
    %46 = vector.load %arg5[%c0_14, %c0_15, %c0_16] : memref<1x128x256xf32, #tpu.memory_space<vmem>>, vector<1x128x256xf32>
    %47 = vector.shape_cast %46 : vector<1x128x256xf32> to vector<128x256xf32>
    %48 = arith.truncf %47 : vector<128x256xf32> to vector<128x256xbf16>
    %cst_17 = arith.constant dense<0.000000e+00> : vector<64x256xf32>
    %49 = tpu.matmul %45, %48, %cst_17 {dimension_numbers = #tpu.dot_dimension_numbers<[1], [0], [0], [1], [0, 0, 1, 1], [], []>} : vector<64x128xbf16>, vector<128x256xbf16>, vector<64x256xf32> -> vector<64x256xf32>
    %c0_18 = arith.constant 0 : index
    %c0_19 = arith.constant 0 : index
    %c0_20 = arith.constant 0 : index
    %50 = vector.load %arg6[%c0_18, %c0_19, %c0_20] : memref<1x1x256xf32, #tpu.memory_space<vmem>>, vector<1x1x256xf32>
    %51 = vector.shape_cast %50 : vector<1x1x256xf32> to vector<1x256xf32>
    %52 = vector.broadcast %51 : vector<1x256xf32> to vector<64x256xf32>
    %53 = arith.addf %49, %52 : vector<64x256xf32>
    %54 = vector.extract_strided_slice %53 {offsets = [0, 0], sizes = [64, 128], strides = [1, 1]} : vector<64x256xf32> to vector<64x128xf32>
    %55 = vector.extract_strided_slice %53 {offsets = [0, 128], sizes = [64, 128], strides = [1, 1]} : vector<64x256xf32> to vector<64x128xf32>
    %56 = arith.negf %55 : vector<64x128xf32>
    %57 = math.exp %56 : vector<64x128xf32>
    %cst_21 = arith.constant 1.000000e+00 : f32
    %58 = vector.broadcast %cst_21 : f32 to vector<64x128xf32>
    %59 = arith.addf %58, %57 : vector<64x128xf32>
    %60 = arith.divf %58, %59 : vector<64x128xf32>
    %61 = arith.mulf %54, %60 : vector<64x128xf32>
    %62 = arith.addf %3, %61 : vector<64x128xf32>
    %c0_22 = arith.constant 0 : index
    %c0_23 = arith.constant 0 : index
    %c0_24 = arith.constant 0 : index
    %63 = vector.load %arg7[%c0_22, %c0_23, %c0_24] : memref<1x1x128xf32, #tpu.memory_space<vmem>>, vector<1x1x128xf32>
    %64 = vector.shape_cast %63 : vector<1x1x128xf32> to vector<1x128xf32>
    %c0_25 = arith.constant 0 : index
    %c0_26 = arith.constant 0 : index
    %c0_27 = arith.constant 0 : index
    %65 = vector.load %arg8[%c0_25, %c0_26, %c0_27] : memref<1x1x128xf32, #tpu.memory_space<vmem>>, vector<1x1x128xf32>
    %66 = vector.shape_cast %65 : vector<1x1x128xf32> to vector<1x128xf32>
    %cst_28 = arith.constant dense<0.000000e+00> : vector<64xf32>
    %67 = vector.multi_reduction <add>, %62, %cst_28 [1] : vector<64x128xf32> to vector<64xf32>
    %68 = vector.shape_cast %67 : vector<64xf32> to vector<64x1xf32>
    %cst_29 = arith.constant 1.280000e+02 : f32
    %69 = vector.broadcast %cst_29 : f32 to vector<64x1xf32>
    %70 = arith.divf %68, %69 : vector<64x1xf32>
    %71 = vector.broadcast %70 : vector<64x1xf32> to vector<64x128xf32>
    %72 = arith.subf %62, %71 : vector<64x128xf32>
    %73 = arith.mulf %72, %72 : vector<64x128xf32>
    %cst_30 = arith.constant dense<0.000000e+00> : vector<64xf32>
    %74 = vector.multi_reduction <add>, %73, %cst_30 [1] : vector<64x128xf32> to vector<64xf32>
    %75 = vector.shape_cast %74 : vector<64xf32> to vector<64x1xf32>
    %cst_31 = arith.constant 1.280000e+02 : f32
    %76 = vector.broadcast %cst_31 : f32 to vector<64x1xf32>
    %77 = arith.divf %75, %76 : vector<64x1xf32>
    %78 = vector.broadcast %70 : vector<64x1xf32> to vector<64x128xf32>
    %79 = arith.subf %62, %78 : vector<64x128xf32>
    %cst_32 = arith.constant 9.99999974E-6 : f32
    %80 = vector.broadcast %cst_32 : f32 to vector<64x1xf32>
    %81 = arith.addf %77, %80 : vector<64x1xf32>
    %82 = math.rsqrt %81 : vector<64x1xf32>
    %83 = vector.broadcast %82 : vector<64x1xf32> to vector<64x128xf32>
    %84 = arith.mulf %79, %83 : vector<64x128xf32>
    %85 = vector.broadcast %64 : vector<1x128xf32> to vector<64x128xf32>
    %86 = arith.mulf %84, %85 : vector<64x128xf32>
    %87 = vector.broadcast %66 : vector<1x128xf32> to vector<64x128xf32>
    %88 = arith.addf %86, %87 : vector<64x128xf32>
    %c0_33 = arith.constant 0 : index
    %c0_34 = arith.constant 0 : index
    %89 = vector.load %arg10[%c0_33, %c0_34] : memref<64x128xf32, #tpu.memory_space<vmem>>, vector<64x128xf32>
    tpu.vector_store %arg10[%c0_33, %c0_34], %88 {strides = array<i32>} : memref<64x128xf32, #tpu.memory_space<vmem>>, vector<64x128xf32>,
    %90 = vector.shape_cast %88 : vector<64x128xf32> to vector<1x64x128xf32>
    %c0_35 = arith.constant 0 : index
    %c0_36 = arith.constant 0 : index
    %c0_37 = arith.constant 0 : index
    %91 = vector.load %arg9[%c0_35, %c0_36, %c0_37] : memref<1x64x128xf32, #tpu.memory_space<vmem>>, vector<1x64x128xf32>
    tpu.vector_store %arg9[%c0_35, %c0_36, %c0_37], %90 {strides = array<i32>} : memref<1x64x128xf32, #tpu.memory_space<vmem>>, vector<1x64x128xf32>,
    return
  }
  func.func @transform_0(%arg0: i32, %arg1: i32) -> (i32, i32, i32) {
    %c0_i32 = arith.constant 0 : i32
    %c0_i32_0 = arith.constant 0 : i32
    %c0_i32_1 = arith.constant 0 : i32
    return %arg0, %c0_i32, %c0_i32_0 : i32, i32, i32
  }
  func.func @transform_1(%arg0: i32, %arg1: i32) -> (i32, i32, i32) {
    %c0_i32 = arith.constant 0 : i32
    %c0_i32_0 = arith.constant 0 : i32
    %c0_i32_1 = arith.constant 0 : i32
    return %arg1, %c0_i32, %c0_i32_0 : i32, i32, i32
  }
  func.func @transform_2(%arg0: i32, %arg1: i32) -> (i32, i32, i32) {
    %c0_i32 = arith.constant 0 : i32
    %c0_i32_0 = arith.constant 0 : i32
    %c0_i32_1 = arith.constant 0 : i32
    return %arg1, %c0_i32, %c0_i32_0 : i32, i32, i32
  }
  func.func @transform_3(%arg0: i32, %arg1: i32) -> (i32, i32, i32) {
    %c0_i32 = arith.constant 0 : i32
    %c0_i32_0 = arith.constant 0 : i32
    %c0_i32_1 = arith.constant 0 : i32
    return %arg1, %c0_i32, %c0_i32_0 : i32, i32, i32
  }
  func.func @transform_4(%arg0: i32, %arg1: i32) -> (i32, i32, i32) {
    %c0_i32 = arith.constant 0 : i32
    %c0_i32_0 = arith.constant 0 : i32
    %c0_i32_1 = arith.constant 0 : i32
    return %arg1, %c0_i32, %c0_i32_0 : i32, i32, i32
  }
  func.func @transform_5(%arg0: i32, %arg1: i32) -> (i32, i32, i32) {
    %c0_i32 = arith.constant 0 : i32
    %c0_i32_0 = arith.constant 0 : i32
    %c0_i32_1 = arith.constant 0 : i32
    return %arg1, %c0_i32, %c0_i32_0 : i32, i32, i32
  }
  func.func @transform_6(%arg0: i32, %arg1: i32) -> (i32, i32, i32) {
    %c0_i32 = arith.constant 0 : i32
    %c0_i32_0 = arith.constant 0 : i32
    %c0_i32_1 = arith.constant 0 : i32
    return %arg1, %c0_i32, %c0_i32_0 : i32, i32, i32
  }
  func.func @transform_7(%arg0: i32, %arg1: i32) -> (i32, i32, i32) {
    %c0_i32 = arith.constant 0 : i32
    %c0_i32_0 = arith.constant 0 : i32
    %c0_i32_1 = arith.constant 0 : i32
    return %arg0, %c0_i32, %c0_i32_0 : i32, i32, i32
  }
}

</mosaic_0001>

<llo_original>
// kernel: ssm_forward.1
$region0: #{ssm_forward.1}
  #allocation0 [shape = 'u32[]', space=smem, size = 0x4, offset = 0x4, fixed_abs, tag = 'smem constant byte address 0x4 - core index']
  #allocation1 [shape = 'u32[72,128]{1,0:T(1,128)}', space=vmem, size = 0x9000, scoped, tag = 'internal scratch']
  #allocation2 [shape = 'f32[64,128]{1,0:T(8,128)}', space=vmem, size = 0x8000, scoped, tag = 'scratch operand']
  %s0 = inlined_call_operand.vmem [shape: f32[2,64,128], index: 0, kind: input, shape index: {}]
  %s1 = inlined_call_operand.vmem [shape: f32[2,64,128], index: 1, kind: input, shape index: {}]
  %s2 = inlined_call_operand.vmem [shape: f32[2,1,128], index: 2, kind: input, shape index: {}]
  %s3 = inlined_call_operand.hbm [shape: f32[2,128,256], index: 3, kind: input, shape index: {}]
  %s4 = inlined_call_operand.vmem [shape: f32[2,1,256], index: 4, kind: input, shape index: {}]
  %s5 = inlined_call_operand.vmem [shape: f32[2,1,128], index: 5, kind: input, shape index: {}]
  %s6 = inlined_call_operand.vmem [shape: f32[2,1,128], index: 6, kind: input, shape index: {}]
  %s7 = inlined_call_operand.vmem [shape: f32[2,64,128], index: 7, kind: output, shape index: {}]
  %s8 = sld [smem:[#allocation0]]
  $region69: #{ssm_forward.1} parent=0
    _
  %s10 = ssub.s32 1, %s8
  %s11 = scalar_select 0, %s10, %s8
  $region1: #{ssm_forward.1} parent=0
    #allocation3 [shape = 'u8[262144]{0}', space=vmem, size = 0x40000, scoped, tag = 'input window, operand 3']
    #allocation4 [shape = 's32[2]{0}', space=sflag, size = 0x8, scoped, tag = 'scoped memory for ssm_forward.1']
    %12 = vsyncpa [#allocation4], 0
    %s13 = scalar_lea.sflag [#allocation4], 1
    %14 = vsyncpa %s13, 0
    loop: start=0, step=1, limit=6
    $region2: #{ssm_forward.1} parent=1 // loop_pre_header
      _
    $region3: #{ssm_forward.1} parent=1 // loop_header
      %s16 = sphi 0, %s20
      %p17 = scmp.ge.s32.totalorder %s16, 6
      %s23 = sphi 0, %s35
      %s24 = sphi 0, %s31
      %s25 = sphi 0, %s23
      %s26 = sphi 0, %s24
      %s27 = sphi 0, %s25
      %s28 = sphi 0, %s26
      %s38 = sphi 0, %s40
      %s41 = sphi 0, %s38
      %s42 = sphi 0, %s41
      %s58 = sphi 0, %s42
      %s64 = sphi 0, %s66
      %s67 = sphi 0, %s64
      %s68 = sphi 0, %s67
      %s84 = sphi 0, %s68
      %s90 = sphi 0, %s92
      %s93 = sphi 0, %s90
      %s94 = sphi 0, %s93
      %s110 = sphi 0, %s94
      %s116 = sphi 0, %s118
      %s119 = sphi 0, %s116
      %s120 = sphi 0, %s119
      %s136 = sphi 0, %s120
      %s142 = sphi 0, %s144
      %s145 = sphi 0, %s142
      %s146 = sphi 0, %s145
      %s162 = sphi 0, %s146
      %s168 = sphi 0, %s170
      %s171 = sphi 0, %s168
      %s172 = sphi 0, %s171
      %s188 = sphi 0, %s172
      %s194 = sphi 0, %s196
      %s197 = sphi 0, %s194
      %s198 = sphi 0, %s197
      %s214 = sphi 0, %s198
      %s220 = sphi 0, %s222
      %s223 = sphi 0, %s220
      %s224 = sphi 0, %s223
      %s240 = sphi 0, %s224
    $region4: #{ssm_forward.1} parent=1 // loop_header_branch
      %19 = sbr.rel (%p17) target = $region8
    $region5: #{ssm_forward.1} parent=1 // loop_body
      %s21 = ssub.s32 %s16, 1
      %s22 = ssub.s32 %s16, 2
      %s29 = sadd.s32 1, %s24
      %p30 = scmp.ge.s32.totalorder %s29, 2
      %s31 = scalar_select %p30, 0, %s29
      %s32 = sadd.s32 1, %s23
      %s33 = scalar_select %p30, %s32, %s23
      %p34 = scmp.ge.s32.totalorder %s33, 2
      %s35 = scalar_select %p34, 0, %s33
      %s36 = ssub.s32 %s23, %s35
      %p37 = scmp.eq.s32.totalorder %s36, 0
      %s39 = sadd.s32 %s38, 1
      %s40 = scalar_select %p37, %s38, %s39
      %p43 = pneg %p37
      %p44 = scmp.eq.s32.totalorder %s16, 3
      %p45 = por %p43, %p44
      %p46 = scmp.ne.s32.totalorder %s38, %s41
      %p47 = scmp.eq.s32.totalorder %s16, 0
      %p48 = por %p46, %p47
      %p49 = scmp.ne.s32.totalorder %s38, %s41
      %p50 = scmp.eq.s32.totalorder %s21, 3
      %p51 = por %p49, %p50
      %p52 = scmp.ne.s32.totalorder %s41, %s42
      %p53 = scmp.eq.s32.totalorder %s21, 0
      %p54 = por %p52, %p53
      %p55 = scmp.ne.s32.totalorder %s41, %s42
      %p56 = scmp.eq.s32.totalorder %s22, 3
      %p57 = por %p55, %p56
      %p59 = scmp.ne.s32.totalorder %s42, %s58
      %p60 = scmp.eq.s32.totalorder %s22, 0
      %p61 = por %p59, %p60
      %s62 = ssub.s32 %s24, %s31
      %p63 = scmp.eq.s32.totalorder %s62, 0
      %s65 = sadd.s32 %s64, 1
      %s66 = scalar_select %p63, %s64, %s65
      %p69 = pneg %p63
      %p70 = scmp.eq.s32.totalorder %s16, 3
      %p71 = por %p69, %p70
      %p72 = scmp.ne.s32.totalorder %s64, %s67
      %p73 = scmp.eq.s32.totalorder %s16, 0
      %p74 = por %p72, %p73
      %p75 = scmp.ne.s32.totalorder %s64, %s67
      %p76 = scmp.eq.s32.totalorder %s21, 3
      %p77 = por %p75, %p76
      %p78 = scmp.ne.s32.totalorder %s67, %s68
      %p79 = scmp.eq.s32.totalorder %s21, 0
      %p80 = por %p78, %p79
      %p81 = scmp.ne.s32.totalorder %s67, %s68
      %p82 = scmp.eq.s32.totalorder %s22, 3
      %p83 = por %p81, %p82
      %p85 = scmp.ne.s32.totalorder %s68, %s84
      %p86 = scmp.eq.s32.totalorder %s22, 0
      %p87 = por %p85, %p86
      %s88 = ssub.s32 %s24, %s31
      %p89 = scmp.eq.s32.totalorder %s88, 0
      %s91 = sadd.s32 %s90, 1
      %s92 = scalar_select %p89, %s90, %s91
      %p95 = pneg %p89
      %p96 = scmp.eq.s32.totalorder %s16, 3
      %p97 = por %p95, %p96
      %p98 = scmp.ne.s32.totalorder %s90, %s93
      %p99 = scmp.eq.s32.totalorder %s16, 0
      %p100 = por %p98, %p99
      %p101 = scmp.ne.s32.totalorder %s90, %s93
      %p102 = scmp.eq.s32.totalorder %s21, 3
      %p103 = por %p101, %p102
      %p104 = scmp.ne.s32.totalorder %s93, %s94
      %p105 = scmp.eq.s32.totalorder %s21, 0
      %p106 = por %p104, %p105
      %p107 = scmp.ne.s32.totalorder %s93, %s94
      %p108 = scmp.eq.s32.totalorder %s22, 3
      %p109 = por %p107, %p108
      %p111 = scmp.ne.s32.totalorder %s94, %s110
      %p112 = scmp.eq.s32.totalorder %s22, 0
      %p113 = por %p111, %p112
      %s114 = ssub.s32 %s24, %s31
      %p115 = scmp.eq.s32.totalorder %s114, 0
      %s117 = sadd.s32 %s116, 1
      %s118 = scalar_select %p115, %s116, %s117
      %p121 = pneg %p115
      %p122 = scmp.eq.s32.totalorder %s16, 3
      %p123 = por %p121, %p122
      %p124 = scmp.ne.s32.totalorder %s116, %s119
      %p125 = scmp.eq.s32.totalorder %s16, 0
      %p126 = por %p124, %p125
      %p127 = scmp.ne.s32.totalorder %s116, %s119
      %p128 = scmp.eq.s32.totalorder %s21, 3
      %p129 = por %p127, %p128
      %p130 = scmp.ne.s32.totalorder %s119, %s120
      %p131 = scmp.eq.s32.totalorder %s21, 0
      %p132 = por %p130, %p131
      %p133 = scmp.ne.s32.totalorder %s119, %s120
      %p134 = scmp.eq.s32.totalorder %s22, 3
      %p135 = por %p133, %p134
      %p137 = scmp.ne.s32.totalorder %s120, %s136
      %p138 = scmp.eq.s32.totalorder %s22, 0
      %p139 = por %p137, %p138
      %s140 = ssub.s32 %s24, %s31
      %p141 = scmp.eq.s32.totalorder %s140, 0
      %s143 = sadd.s32 %s142, 1
      %s144 = scalar_select %p141, %s142, %s143
      %p147 = pneg %p141
      %p148 = scmp.eq.s32.totalorder %s16, 3
      %p149 = por %p147, %p148
      %p150 = scmp.ne.s32.totalorder %s142, %s145
      %p151 = scmp.eq.s32.totalorder %s16, 0
      %p152 = por %p150, %p151
      %p153 = scmp.ne.s32.totalorder %s142, %s145
      %p154 = scmp.eq.s32.totalorder %s21, 3
      %p155 = por %p153, %p154
      %p156 = scmp.ne.s32.totalorder %s145, %s146
      %p157 = scmp.eq.s32.totalorder %s21, 0
      %p158 = por %p156, %p157
      %p159 = scmp.ne.s32.totalorder %s145, %s146
      %p160 = scmp.eq.s32.totalorder %s22, 3
      %p161 = por %p159, %p160
      %p163 = scmp.ne.s32.totalorder %s146, %s162
      %p164 = scmp.eq.s32.totalorder %s22, 0
      %p165 = por %p163, %p164
      %s166 = ssub.s32 %s24, %s31
      %p167 = scmp.eq.s32.totalorder %s166, 0
      %s169 = sadd.s32 %s168, 1
      %s170 = scalar_select %p167, %s168, %s169
      %p173 = pneg %p167
      %p174 = scmp.eq.s32.totalorder %s16, 3
      %p175 = por %p173, %p174
      %p176 = scmp.ne.s32.totalorder %s168, %s171
      %p177 = scmp.eq.s32.totalorder %s16, 0
      %p178 = por %p176, %p177
      %p179 = scmp.ne.s32.totalorder %s168, %s171
      %p180 = scmp.eq.s32.totalorder %s21, 3
      %p181 = por %p179, %p180
      %p182 = scmp.ne.s32.totalorder %s171, %s172
      %p183 = scmp.eq.s32.totalorder %s21, 0
      %p184 = por %p182, %p183
      %p185 = scmp.ne.s32.totalorder %s171, %s172
      %p186 = scmp.eq.s32.totalorder %s22, 3
      %p187 = por %p185, %p186
      %p189 = scmp.ne.s32.totalorder %s172, %s188
      %p190 = scmp.eq.s32.totalorder %s22, 0
      %p191 = por %p189, %p190
      %s192 = ssub.s32 %s24, %s31
      %p193 = scmp.eq.s32.totalorder %s192, 0
      %s195 = sadd.s32 %s194, 1
      %s196 = scalar_select %p193, %s194, %s195
      %p199 = pneg %p193
      %p200 = scmp.eq.s32.totalorder %s16, 3
      %p201 = por %p199, %p200
      %p202 = scmp.ne.s32.totalorder %s194, %s197
      %p203 = scmp.eq.s32.totalorder %s16, 0
      %p204 = por %p202, %p203
      %p205 = scmp.ne.s32.totalorder %s194, %s197
      %p206 = scmp.eq.s32.totalorder %s21, 3
      %p207 = por %p205, %p206
      %p208 = scmp.ne.s32.totalorder %s197, %s198
      %p209 = scmp.eq.s32.totalorder %s21, 0
      %p210 = por %p208, %p209
      %p211 = scmp.ne.s32.totalorder %s197, %s198
      %p212 = scmp.eq.s32.totalorder %s22, 3
      %p213 = por %p211, %p212
      %p215 = scmp.ne.s32.totalorder %s198, %s214
      %p216 = scmp.eq.s32.totalorder %s22, 0
      %p217 = por %p215, %p216
      %s218 = ssub.s32 %s23, %s35
      %p219 = scmp.eq.s32.totalorder %s218, 0
      %s221 = sadd.s32 %s220, 1
      %s222 = scalar_select %p219, %s220, %s221
      %p225 = pneg %p219
      %p226 = scmp.eq.s32.totalorder %s16, 3
      %p227 = por %p225, %p226
      %p228 = scmp.ne.s32.totalorder %s220, %s223
      %p229 = scmp.eq.s32.totalorder %s16, 0
      %p230 = por %p228, %p229
      %p231 = scmp.ne.s32.totalorder %s220, %s223
      %p232 = scmp.eq.s32.totalorder %s21, 3
      %p233 = por %p231, %p232
      %p234 = scmp.ne.s32.totalorder %s223, %s224
      %p235 = scmp.eq.s32.totalorder %s21, 0
      %p236 = por %p234, %p235
      %p237 = scmp.ne.s32.totalorder %s223, %s224
      %p238 = scmp.eq.s32.totalorder %s22, 3
      %p239 = por %p237, %p238
      %p241 = scmp.ne.s32.totalorder %s224, %s240
      %p242 = scmp.eq.s32.totalorder %s22, 0
      %p243 = por %p241, %p242
      %p244 = scmp.le.s32.totalorder 1, %s16
      %p245 = scmp.lt.s32.totalorder %s16, 5
      %p246 = pnand %p244, %p245
      %p247 = pneg %p246
      // Predicated region
      $region9: #{ssm_forward.1} parent=5 // pred_check
        _
      $region10: #{ssm_forward.1} parent=5 // pred_check_branch
        %249 = sbr.rel (%p246) target = $region12
      $region11: #{ssm_forward.1} parent=5 // pred_region
        %s250 = ssub.s32 %s16, 1
      $region12: #{ssm_forward.1} parent=5 // pred_fallthru
        _
      %p251 = scmp.lt.s32.totalorder %s16, 4
      // Predicated region
      $region13: #{ssm_forward.1} parent=5 // pred_check
        %p252 = pneg %p251
      $region14: #{ssm_forward.1} parent=5 // pred_check_branch
        %254 = sbr.rel (%p252) target = $region16
      $region15: #{ssm_forward.1} parent=5 // pred_region
        // Predicated region
        $region17: #{ssm_forward.1} parent=15 // pred_check
          %p255 = pneg %p48
        $region18: #{ssm_forward.1} parent=15 // pred_check_branch
          %257 = sbr.rel (%p255) target = $region20
        $region19: #{ssm_forward.1} parent=15 // pred_region
          %p258 = scmp.lt.s32.totalorder %s23, 1
          %s259 = scalar_select %p258, %s23, 1
          %s260 = smul.addr %s259, 8
          %s261 = smul.addr %s260, 8
          %s262 = scalar_lea.vmem %s0, %s261
        $region20: #{ssm_forward.1} parent=15 // pred_fallthru
          _
        // Predicated region
        $region21: #{ssm_forward.1} parent=15 // pred_check
          %p263 = pneg %p74
        $region22: #{ssm_forward.1} parent=15 // pred_check_branch
          %265 = sbr.rel (%p263) target = $region24
        $region23: #{ssm_forward.1} parent=15 // pred_region
          %p266 = scmp.lt.s32.totalorder %s24, 1
          %s267 = scalar_select %p266, %s24, 1
          %s268 = smul.addr %s267, 8
          %s269 = smul.addr %s268, 8
          %s270 = scalar_lea.vmem %s1, %s269
        $region24: #{ssm_forward.1} parent=15 // pred_fallthru
          _
        // Predicated region
        $region25: #{ssm_forward.1} parent=15 // pred_check
          %p271 = pneg %p100
        $region26: #{ssm_forward.1} parent=15 // pred_check_branch
          %273 = sbr.rel (%p271) target = $region28
        $region27: #{ssm_forward.1} parent=15 // pred_region
          %p274 = scmp.lt.s32.totalorder %s24, 1
          %s275 = scalar_select %p274, %s24, 1
          %s276 = scalar_lea.vmem %s2, %s275
        $region28: #{ssm_forward.1} parent=15 // pred_fallthru
          _
        // Predicated region
        $region29: #{ssm_forward.1} parent=15 // pred_check
          %p277 = pneg %p126
        $region30: #{ssm_forward.1} parent=15 // pred_check_branch
          %279 = sbr.rel (%p277) target = $region32
        $region31: #{ssm_forward.1} parent=15 // pred_region
          %s280 = sand.u32 %s116, 1
          %s281 = scalar_lea.sflag [#allocation4], %s280
          %s282 = sand.u32 %s116, 1
          %s283 = smul.addr %s282, 256
          %s284 = scalar_lea.vmem [#allocation3], %s283
          %286 = vsyncadd %s281, 0
          %s287 = smul.addr %s24, 32
          %s288 = smul.addr %s287, 8
          %s289 = scalar_lea.hbm %s3, %s288
          %s290 = sshll.u32 %s289, 4
          %s291 = int_to_ptr.hbm [resolvable:$true] %s290
          %s292 = sshll.u32 %s284, 4
          %s293 = int_to_ptr.vmem [resolvable:$true] %s292
          %298 = dma.hbm_to_vmem [thread:$0]  %s291, 4096, %s293, %s281, 256, 256, 16
        $region32: #{ssm_forward.1} parent=15 // pred_fallthru
          _
        // Predicated region
        $region33: #{ssm_forward.1} parent=15 // pred_check
          %p299 = pneg %p152
        $region34: #{ssm_forward.1} parent=15 // pred_check_branch
          %301 = sbr.rel (%p299) target = $region36
        $region35: #{ssm_forward.1} parent=15 // pred_region
          %p302 = scmp.lt.s32.totalorder %s24, 1
          %s303 = scalar_select %p302, %s24, 1
          %s304 = smul.addr %s303, 2
          %s305 = scalar_lea.vmem %s4, %s304
        $region36: #{ssm_forward.1} parent=15 // pred_fallthru
          _
        // Predicated region
        $region37: #{ssm_forward.1} parent=15 // pred_check
          %p306 = pneg %p178
        $region38: #{ssm_forward.1} parent=15 // pred_check_branch
          %308 = sbr.rel (%p306) target = $region40
        $region39: #{ssm_forward.1} parent=15 // pred_region
          %p309 = scmp.lt.s32.totalorder %s24, 1
          %s310 = scalar_select %p309, %s24, 1
          %s311 = scalar_lea.vmem %s5, %s310
        $region40: #{ssm_forward.1} parent=15 // pred_fallthru
          _
        // Predicated region
        $region41: #{ssm_forward.1} parent=15 // pred_check
          %p312 = pneg %p204
        $region42: #{ssm_forward.1} parent=15 // pred_check_branch
          %314 = sbr.rel (%p312) target = $region44
        $region43: #{ssm_forward.1} parent=15 // pred_region
          %p315 = scmp.lt.s32.totalorder %s24, 1
          %s316 = scalar_select %p315, %s24, 1
          %s317 = scalar_lea.vmem %s6, %s316
        $region44: #{ssm_forward.1} parent=15 // pred_fallthru
          _
      $region16: #{ssm_forward.1} parent=5 // pred_fallthru
        _
      %p318 = scmp.le.s32.totalorder 1, %s16
      %p319 = scmp.lt.s32.totalorder %s16, 5
      %p320 = pnand %p318, %p319
      %p321 = pneg %p320
      // Predicated region
      $region45: #{ssm_forward.1} parent=5 // pred_check
        _
      $region46: #{ssm_forward.1} parent=5 // pred_check_branch
        %323 = sbr.rel (%p320) target = $region48
      $region47: #{ssm_forward.1} parent=5 // pred_region
        %s324 = ssub.s32 %s16, 1
        %s325 = sand.u32 %s119, 1
        %s326 = scalar_lea.sflag [#allocation4], %s325
        %s327 = sand.u32 %s119, 1
        %s328 = smul.addr %s327, 256
        %s329 = scalar_lea.vmem [#allocation3], %s328
        // Predicated region
        $region49: #{ssm_forward.1} parent=47 // pred_check
          %p330 = pneg %p132
        $region50: #{ssm_forward.1} parent=47 // pred_check_branch
          %332 = sbr.rel (%p330) target = $region52
        $region51: #{ssm_forward.1} parent=47 // pred_region
          %334 = dma.done %s326, 4096
        $region52: #{ssm_forward.1} parent=47 // pred_fallthru
          _
        %p335 = scmp.lt.s32.totalorder %s25, 1
        %s336 = scalar_select %p335, %s25, 1
        %s337 = smul.addr %s336, 8
        %s338 = smul.addr %s337, 8
        %s339 = scalar_lea.vmem %s0, %s338
        %p340 = pneg %p54
        %p341 = pneg %p51
        %p342 = scmp.lt.s32.totalorder %s26, 1
        %s343 = scalar_select %p342, %s26, 1
        %s344 = smul.addr %s343, 8
        %s345 = smul.addr %s344, 8
        %s346 = scalar_lea.vmem %s1, %s345
        %p347 = pneg %p80
        %p348 = pneg %p77
        %p349 = scmp.lt.s32.totalorder %s26, 1
        %s350 = scalar_select %p349, %s26, 1
        %s351 = scalar_lea.vmem %s2, %s350
        %p352 = pneg %p106
        %p353 = pneg %p103
        %s354 = sand.u32 %s119, 1
        %s355 = scalar_lea.sflag [#allocation4], %s354
        %s356 = sand.u32 %s119, 1
        %s357 = smul.addr %s356, 256
        %s358 = scalar_lea.vmem [#allocation3], %s357
        %p359 = pneg %p132
        %p360 = pneg %p129
        %p361 = scmp.lt.s32.totalorder %s26, 1
        %s362 = scalar_select %p361, %s26, 1
        %s363 = smul.addr %s362, 2
        %s364 = scalar_lea.vmem %s4, %s363
        %p365 = pneg %p158
        %p366 = pneg %p155
        %p367 = scmp.lt.s32.totalorder %s26, 1
        %s368 = scalar_select %p367, %s26, 1
        %s369 = scalar_lea.vmem %s5, %s368
        %p370 = pneg %p184
        %p371 = pneg %p181
        %p372 = scmp.lt.s32.totalorder %s26, 1
        %s373 = scalar_select %p372, %s26, 1
        %s374 = scalar_lea.vmem %s6, %s373
        %p375 = pneg %p210
        %p376 = pneg %p207
        %p377 = pneg %p236
        %p378 = pneg %p233
        %p379 = scmp.lt.s32.totalorder %s25, 1
        %s380 = scalar_select %p379, %s25, 1
        %s381 = smul.addr %s380, 8
        %s382 = smul.addr %s381, 8
        %s383 = scalar_lea.vmem %s7, %s382
        %p384 = scmp.lt.s32.totalorder %s25, 1
        %s385 = scalar_select %p384, %s25, 1
        %s386 = smul.addr %s385, 8
        %s387 = smul.addr %s386, 8
        %s388 = scalar_lea.vmem %s0, %s387
        %p389 = scmp.lt.s32.totalorder %s26, 1
        %s390 = scalar_select %p389, %s26, 1
        %s391 = smul.addr %s390, 8
        %s392 = smul.addr %s391, 8
        %s393 = scalar_lea.vmem %s1, %s392
        %p394 = scmp.lt.s32.totalorder %s26, 1
        %s395 = scalar_select %p394, %s26, 1
        %s396 = scalar_lea.vmem %s2, %s395
        %p397 = scmp.lt.s32.totalorder %s26, 1
        %s398 = scalar_select %p397, %s26, 1
        %s399 = smul.addr %s398, 2
        %s400 = scalar_lea.vmem %s4, %s399
        %p401 = scmp.lt.s32.totalorder %s26, 1
        %s402 = scalar_select %p401, %s26, 1
        %s403 = scalar_lea.vmem %s5, %s402
        %p404 = scmp.lt.s32.totalorder %s26, 1
        %s405 = scalar_select %p404, %s26, 1
        %s406 = scalar_lea.vmem %s6, %s405
        %p407 = scmp.lt.s32.totalorder %s25, 1
        %s408 = scalar_select %p407, %s25, 1
        %s409 = smul.addr %s408, 8
        %s410 = smul.addr %s409, 8
        %s411 = scalar_lea.vmem %s7, %s410
        %p412 = scmp.eq.s32.totalorder %s26, 0
        // Predicated region
        $region53: #{ssm_forward.1} parent=47 // pred_check
          %p413 = pneg %p412
        $region54: #{ssm_forward.1} parent=47 // pred_check_branch
          %415 = sbr.rel (%p413) target = $region56
        $region55: #{ssm_forward.1} parent=47 // pred_region
          %v416 = vld [vmem:[%s388] sm:$0xff]
          %v417 = vld [vmem:[%s388 + $0x8] sm:$0xff]
          %v418 = vld [vmem:[%s388 + $0x10] sm:$0xff]
          %v419 = vld [vmem:[%s388 + $0x18] sm:$0xff]
          %v420 = vld [vmem:[%s388 + $0x20] sm:$0xff]
          %v421 = vld [vmem:[%s388 + $0x28] sm:$0xff]
          %v422 = vld [vmem:[%s388 + $0x30] sm:$0xff]
          %v423 = vld [vmem:[%s388 + $0x38] sm:$0xff]
          %424 = vst [vmem:[#allocation2] sm:$0xff] %v416
          %425 = vst [vmem:[#allocation2 + $0x8] sm:$0xff] %v417
          %426 = vst [vmem:[#allocation2 + $0x10] sm:$0xff] %v418
          %427 = vst [vmem:[#allocation2 + $0x18] sm:$0xff] %v419
          %428 = vst [vmem:[#allocation2 + $0x20] sm:$0xff] %v420
          %429 = vst [vmem:[#allocation2 + $0x28] sm:$0xff] %v421
          %430 = vst [vmem:[#allocation2 + $0x30] sm:$0xff] %v422
          %431 = vst [vmem:[#allocation2 + $0x38] sm:$0xff] %v423
        $region56: #{ssm_forward.1} parent=47 // pred_fallthru
          _
        %v432 = vld [vmem:[#allocation2] sm:$0xff]
        %v433 = vld [vmem:[#allocation2 + $0x8] sm:$0xff]
        %v434 = vld [vmem:[#allocation2 + $0x10] sm:$0xff]
        %v435 = vld [vmem:[#allocation2 + $0x18] sm:$0xff]
        %v436 = vld [vmem:[#allocation2 + $0x20] sm:$0xff]
        %v437 = vld [vmem:[#allocation2 + $0x28] sm:$0xff]
        %v438 = vld [vmem:[#allocation2 + $0x30] sm:$0xff]
        %v439 = vld [vmem:[#allocation2 + $0x38] sm:$0xff]
        %v440 = vlaneseq
        %v441 = vshrl.u32 %v440, 7
        %v442 = vadd.s32 %v441, 8
        %v443 = vadd.s32 %v441, 16
        %v444 = vadd.s32 %v441, 24
        %v445 = vadd.s32 %v441, 32
        %v446 = vadd.s32 %v441, 40
        %v447 = vadd.s32 %v441, 48
        %v448 = vadd.s32 %v441, 56
        %v449 = vlaneseq
        %v450 = vand.u32 %v449, 127
        %v451 = vadd.s32 %v450, 128
        %v452 = vadd.s32 %v450, 256
        %v453 = vadd.s32 %v450, 384
        %v454 = vadd.s32 %v450, 512
        %v455 = vadd.s32 %v450, 640
        %v456 = vadd.s32 %v450, 768
        %v457 = vadd.s32 %v450, 896
        %v458 = vadd.s32 %v450, 1024
        %v459 = vadd.s32 %v450, 1152
        %v460 = vadd.s32 %v450, 1280
        %v461 = vadd.s32 %v450, 1408
        %v462 = vadd.s32 %v450, 1536
        %v463 = vadd.s32 %v450, 1664
        %v464 = vadd.s32 %v450, 1792
        %v465 = vadd.s32 %v450, 1920
        %v466 = vadd.s32 %v450, 2048
        %v467 = vadd.s32 %v450, 2176
        %v468 = vadd.s32 %v450, 2304
        %v469 = vadd.s32 %v450, 2432
        %v470 = vadd.s32 %v450, 2560
        %v471 = vadd.s32 %v450, 2688
        %v472 = vadd.s32 %v450, 2816
        %v473 = vadd.s32 %v450, 2944
        %v474 = vadd.s32 %v450, 3072
        %v475 = vadd.s32 %v450, 3200
        %v476 = vadd.s32 %v450, 3328
        %v477 = vadd.s32 %v450, 3456
        %v478 = vadd.s32 %v450, 3584
        %v479 = vadd.s32 %v450, 3712
        %v480 = vadd.s32 %v450, 3840
        %v481 = vadd.s32 %v450, 3968
        %v482 = vshra.s32 %v450, 6
        %v483 = vshra.s32 %v451, 6
        %v484 = vshra.s32 %v452, 6
        %v485 = vshra.s32 %v453, 6
        %v486 = vshra.s32 %v454, 6
        %v487 = vshra.s32 %v455, 6
        %v488 = vshra.s32 %v456, 6
        %v489 = vshra.s32 %v457, 6
        %v490 = vshra.s32 %v458, 6
        %v491 = vshra.s32 %v459, 6
        %v492 = vshra.s32 %v460, 6
        %v493 = vshra.s32 %v461, 6
        %v494 = vshra.s32 %v462, 6
        %v495 = vshra.s32 %v463, 6
        %v496 = vshra.s32 %v464, 6
        %v497 = vshra.s32 %v465, 6
        %v498 = vshra.s32 %v466, 6
        %v499 = vshra.s32 %v467, 6
        %v500 = vshra.s32 %v468, 6
        %v501 = vshra.s32 %v469, 6
        %v502 = vshra.s32 %v470, 6
        %v503 = vshra.s32 %v471, 6
        %v504 = vshra.s32 %v472, 6
        %v505 = vshra.s32 %v473, 6
        %v506 = vshra.s32 %v474, 6
        %v507 = vshra.s32 %v475, 6
        %v508 = vshra.s32 %v476, 6
        %v509 = vshra.s32 %v477, 6
        %v510 = vshra.s32 %v478, 6
        %v511 = vshra.s32 %v479, 6
        %v512 = vshra.s32 %v480, 6
        %v513 = vshra.s32 %v481, 6
        %v514 = vand.u32 %v450, 63
        %v515 = vand.u32 %v451, 63
        %v516 = vand.u32 %v452, 63
        %v517 = vand.u32 %v453, 63
        %v518 = vand.u32 %v454, 63
        %v519 = vand.u32 %v455, 63
        %v520 = vand.u32 %v456, 63
        %v521 = vand.u32 %v457, 63
        %v522 = vand.u32 %v458, 63
        %v523 = vand.u32 %v459, 63
        %v524 = vand.u32 %v460, 63
        %v525 = vand.u32 %v461, 63
        %v526 = vand.u32 %v462, 63
        %v527 = vand.u32 %v463, 63
        %v528 = vand.u32 %v464, 63
        %v529 = vand.u32 %v465, 63
        %v530 = vand.u32 %v466, 63
        %v531 = vand.u32 %v467, 63
        %v532 = vand.u32 %v468, 63
        %v533 = vand.u32 %v469, 63
        %v534 = vand.u32 %v470, 63
        %v535 = vand.u32 %v471, 63
        %v536 = vand.u32 %v472, 63
        %v537 = vand.u32 %v473, 63
        %v538 = vand.u32 %v474, 63
        %v539 = vand.u32 %v475, 63
        %v540 = vand.u32 %v476, 63
        %v541 = vand.u32 %v477, 63
        %v542 = vand.u32 %v478, 63
        %v543 = vand.u32 %v479, 63
        %v544 = vand.u32 %v480, 63
        %v545 = vand.u32 %v481, 63
        %v546 = vadd.s32 %v482, %v514
        %v547 = vadd.s32 %v483, %v515
        %v548 = vadd.s32 %v484, %v516
        %v549 = vadd.s32 %v485, %v517
        %v550 = vadd.s32 %v486, %v518
        %v551 = vadd.s32 %v487, %v519
        %v552 = vadd.s32 %v488, %v520
        %v553 = vadd.s32 %v489, %v521
        %v554 = vadd.s32 %v490, %v522
        %v555 = vadd.s32 %v491, %v523
        %v556 = vadd.s32 %v492, %v524
        %v557 = vadd.s32 %v493, %v525
        %v558 = vadd.s32 %v494, %v526
        %v559 = vadd.s32 %v495, %v527
        %v560 = vadd.s32 %v496, %v528
        %v561 = vadd.s32 %v497, %v529
        %v562 = vadd.s32 %v498, %v530
        %v563 = vadd.s32 %v499, %v531
        %v564 = vadd.s32 %v500, %v532
        %v565 = vadd.s32 %v501, %v533
        %v566 = vadd.s32 %v502, %v534
        %v567 = vadd.s32 %v503, %v535
        %v568 = vadd.s32 %v504, %v536
        %v569 = vadd.s32 %v505, %v537
        %v570 = vadd.s32 %v506, %v538
        %v571 = vadd.s32 %v507, %v539
        %v572 = vadd.s32 %v508, %v540
        %v573 = vadd.s32 %v509, %v541
        %v574 = vadd.s32 %v510, %v542
        %v575 = vadd.s32 %v511, %v543
        %v576 = vadd.s32 %v512, %v544
        %v577 = vadd.s32 %v513, %v545
        %vm578 = vcmp.eq.s32.totalorder %v441, %v546
        %vm579 = vcmp.eq.s32.totalorder %v441, %v547
        %vm580 = vcmp.eq.s32.totalorder %v441, %v548
        %vm581 = vcmp.eq.s32.totalorder %v441, %v549
        %vm582 = vcmp.eq.s32.totalorder %v441, %v550
        %vm583 = vcmp.eq.s32.totalorder %v441, %v551
        %vm584 = vcmp.eq.s32.totalorder %v441, %v552
        %vm585 = vcmp.eq.s32.totalorder %v441, %v553
        %vm586 = vcmp.eq.s32.totalorder %v441, %v554
        %vm587 = vcmp.eq.s32.totalorder %v441, %v555
        %vm588 = vcmp.eq.s32.totalorder %v441, %v556
        %vm589 = vcmp.eq.s32.totalorder %v441, %v557
        %vm590 = vcmp.eq.s32.totalorder %v441, %v558
        %vm591 = vcmp.eq.s32.totalorder %v441, %v559
        %vm592 = vcmp.eq.s32.totalorder %v441, %v560
        %vm593 = vcmp.eq.s32.totalorder %v441, %v561
        %vm594 = vcmp.eq.s32.totalorder %v441, %v562
        %vm595 = vcmp.eq.s32.totalorder %v441, %v563
        %vm596 = vcmp.eq.s32.totalorder %v441, %v564
        %vm597 = vcmp.eq.s32.totalorder %v441, %v565
        %vm598 = vcmp.eq.s32.totalorder %v441, %v566
        %vm599 = vcmp.eq.s32.totalorder %v441, %v567
        %vm600 = vcmp.eq.s32.totalorder %v441, %v568
        %vm601 = vcmp.eq.s32.totalorder %v441, %v569
        %vm602 = vcmp.eq.s32.totalorder %v441, %v570
        %vm603 = vcmp.eq.s32.totalorder %v441, %v571
        %vm604 = vcmp.eq.s32.totalorder %v441, %v572
        %vm605 = vcmp.eq.s32.totalorder %v441, %v573
        %vm606 = vcmp.eq.s32.totalorder %v441, %v574
        %vm607 = vcmp.eq.s32.totalorder %v441, %v575
        %vm608 = vcmp.eq.s32.totalorder %v441, %v576
        %vm609 = vcmp.eq.s32.totalorder %v441, %v577
        %vm610 = vcmp.eq.s32.totalorder %v442, %v546
        %vm611 = vcmp.eq.s32.totalorder %v442, %v547
        %vm612 = vcmp.eq.s32.totalorder %v442, %v548
        %vm613 = vcmp.eq.s32.totalorder %v442, %v549
        %vm614 = vcmp.eq.s32.totalorder %v442, %v550
        %vm615 = vcmp.eq.s32.totalorder %v442, %v551
        %vm616 = vcmp.eq.s32.totalorder %v442, %v552
        %vm617 = vcmp.eq.s32.totalorder %v442, %v553
        %vm618 = vcmp.eq.s32.totalorder %v442, %v554
        %vm619 = vcmp.eq.s32.totalorder %v442, %v555
        %vm620 = vcmp.eq.s32.totalorder %v442, %v556
        %vm621 = vcmp.eq.s32.totalorder %v442, %v557
        %vm622 = vcmp.eq.s32.totalorder %v442, %v558
        %vm623 = vcmp.eq.s32.totalorder %v442, %v559
        %vm624 = vcmp.eq.s32.totalorder %v442, %v560
        %vm625 = vcmp.eq.s32.totalorder %v442, %v561
        %vm626 = vcmp.eq.s32.totalorder %v442, %v562
        %vm627 = vcmp.eq.s32.totalorder %v442, %v563
        %vm628 = vcmp.eq.s32.totalorder %v442, %v564
        %vm629 = vcmp.eq.s32.totalorder %v442, %v565
        %vm630 = vcmp.eq.s32.totalorder %v442, %v566
        %vm631 = vcmp.eq.s32.totalorder %v442, %v567
        %vm632 = vcmp.eq.s32.totalorder %v442, %v568
        %vm633 = vcmp.eq.s32.totalorder %v442, %v569
        %vm634 = vcmp.eq.s32.totalorder %v442, %v570
        %vm635 = vcmp.eq.s32.totalorder %v442, %v571
        %vm636 = vcmp.eq.s32.totalorder %v442, %v572
        %vm637 = vcmp.eq.s32.totalorder %v442, %v573
        %vm638 = vcmp.eq.s32.totalorder %v442, %v574
        %vm639 = vcmp.eq.s32.totalorder %v442, %v575
        %vm640 = vcmp.eq.s32.totalorder %v442, %v576
        %vm641 = vcmp.eq.s32.totalorder %v442, %v577
        %vm642 = vcmp.eq.s32.totalorder %v443, %v546
        %vm643 = vcmp.eq.s32.totalorder %v443, %v547
        %vm644 = vcmp.eq.s32.totalorder %v443, %v548
        %vm645 = vcmp.eq.s32.totalorder %v443, %v549
        %vm646 = vcmp.eq.s32.totalorder %v443, %v550
        %vm647 = vcmp.eq.s32.totalorder %v443, %v551
        %vm648 = vcmp.eq.s32.totalorder %v443, %v552
        %vm649 = vcmp.eq.s32.totalorder %v443, %v553
        %vm650 = vcmp.eq.s32.totalorder %v443, %v554
        %vm651 = vcmp.eq.s32.totalorder %v443, %v555
        %vm652 = vcmp.eq.s32.totalorder %v443, %v556
        %vm653 = vcmp.eq.s32.totalorder %v443, %v557
        %vm654 = vcmp.eq.s32.totalorder %v443, %v558
        %vm655 = vcmp.eq.s32.totalorder %v443, %v559
        %vm656 = vcmp.eq.s32.totalorder %v443, %v560
        %vm657 = vcmp.eq.s32.totalorder %v443, %v561
        %vm658 = vcmp.eq.s32.totalorder %v443, %v562
        %vm659 = vcmp.eq.s32.totalorder %v443, %v563
        %vm660 = vcmp.eq.s32.totalorder %v443, %v564
        %vm661 = vcmp.eq.s32.totalorder %v443, %v565
        %vm662 = vcmp.eq.s32.totalorder %v443, %v566
        %vm663 = vcmp.eq.s32.totalorder %v443, %v567
        %vm664 = vcmp.eq.s32.totalorder %v443, %v568
        %vm665 = vcmp.eq.s32.totalorder %v443, %v569
        %vm666 = vcmp.eq.s32.totalorder %v443, %v570
        %vm667 = vcmp.eq.s32.totalorder %v443, %v571
        %vm668 = vcmp.eq.s32.totalorder %v443, %v572
        %vm669 = vcmp.eq.s32.totalorder %v443, %v573
        %vm670 = vcmp.eq.s32.totalorder %v443, %v574
        %vm671 = vcmp.eq.s32.totalorder %v443, %v575
        %vm672 = vcmp.eq.s32.totalorder %v443, %v576
        %vm673 = vcmp.eq.s32.totalorder %v443, %v577
        %vm674 = vcmp.eq.s32.totalorder %v444, %v546
        %vm675 = vcmp.eq.s32.totalorder %v444, %v547
        %vm676 = vcmp.eq.s32.totalorder %v444, %v548
        %vm677 = vcmp.eq.s32.totalorder %v444, %v549
        %vm678 = vcmp.eq.s32.totalorder %v444, %v550
        %vm679 = vcmp.eq.s32.totalorder %v444, %v551
        %vm680 = vcmp.eq.s32.totalorder %v444, %v552
        %vm681 = vcmp.eq.s32.totalorder %v444, %v553
        %vm682 = vcmp.eq.s32.totalorder %v444, %v554
        %vm683 = vcmp.eq.s32.totalorder %v444, %v555
        %vm684 = vcmp.eq.s32.totalorder %v444, %v556
        %vm685 = vcmp.eq.s32.totalorder %v444, %v557
        %vm686 = vcmp.eq.s32.totalorder %v444, %v558
        %vm687 = vcmp.eq.s32.totalorder %v444, %v559
        %vm688 = vcmp.eq.s32.totalorder %v444, %v560
        %vm689 = vcmp.eq.s32.totalorder %v444, %v561
        %vm690 = vcmp.eq.s32.totalorder %v444, %v562
        %vm691 = vcmp.eq.s32.totalorder %v444, %v563
        %vm692 = vcmp.eq.s32.totalorder %v444, %v564
        %vm693 = vcmp.eq.s32.totalorder %v444, %v565
        %vm694 = vcmp.eq.s32.totalorder %v444, %v566
        %vm695 = vcmp.eq.s32.totalorder %v444, %v567
        %vm696 = vcmp.eq.s32.totalorder %v444, %v568
        %vm697 = vcmp.eq.s32.totalorder %v444, %v569
        %vm698 = vcmp.eq.s32.totalorder %v444, %v570
        %vm699 = vcmp.eq.s32.totalorder %v444, %v571
        %vm700 = vcmp.eq.s32.totalorder %v444, %v572
        %vm701 = vcmp.eq.s32.totalorder %v444, %v573
        %vm702 = vcmp.eq.s32.totalorder %v444, %v574
        %vm703 = vcmp.eq.s32.totalorder %v444, %v575
        %vm704 = vcmp.eq.s32.totalorder %v444, %v576
        %vm705 = vcmp.eq.s32.totalorder %v444, %v577
        %vm706 = vcmp.eq.s32.totalorder %v445, %v546
        %vm707 = vcmp.eq.s32.totalorder %v445, %v547
        %vm708 = vcmp.eq.s32.totalorder %v445, %v548
        %vm709 = vcmp.eq.s32.totalorder %v445, %v549
        %vm710 = vcmp.eq.s32.totalorder %v445, %v550
        %vm711 = vcmp.eq.s32.totalorder %v445, %v551
        %vm712 = vcmp.eq.s32.totalorder %v445, %v552
        %vm713 = vcmp.eq.s32.totalorder %v445, %v553
        %vm714 = vcmp.eq.s32.totalorder %v445, %v554
        %vm715 = vcmp.eq.s32.totalorder %v445, %v555
        %vm716 = vcmp.eq.s32.totalorder %v445, %v556
        %vm717 = vcmp.eq.s32.totalorder %v445, %v557
        %vm718 = vcmp.eq.s32.totalorder %v445, %v558
        %vm719 = vcmp.eq.s32.totalorder %v445, %v559
        %vm720 = vcmp.eq.s32.totalorder %v445, %v560
        %vm721 = vcmp.eq.s32.totalorder %v445, %v561
        %vm722 = vcmp.eq.s32.totalorder %v445, %v562
        %vm723 = vcmp.eq.s32.totalorder %v445, %v563
        %vm724 = vcmp.eq.s32.totalorder %v445, %v564
        %vm725 = vcmp.eq.s32.totalorder %v445, %v565
        %vm726 = vcmp.eq.s32.totalorder %v445, %v566
        %vm727 = vcmp.eq.s32.totalorder %v445, %v567
        %vm728 = vcmp.eq.s32.totalorder %v445, %v568
        %vm729 = vcmp.eq.s32.totalorder %v445, %v569
        %vm730 = vcmp.eq.s32.totalorder %v445, %v570
        %vm731 = vcmp.eq.s32.totalorder %v445, %v571
        %vm732 = vcmp.eq.s32.totalorder %v445, %v572
        %vm733 = vcmp.eq.s32.totalorder %v445, %v573
        %vm734 = vcmp.eq.s32.totalorder %v445, %v574
        %vm735 = vcmp.eq.s32.totalorder %v445, %v575
        %vm736 = vcmp.eq.s32.totalorder %v445, %v576
        %vm737 = vcmp.eq.s32.totalorder %v445, %v577
        %vm738 = vcmp.eq.s32.totalorder %v446, %v546
        %vm739 = vcmp.eq.s32.totalorder %v446, %v547
        %vm740 = vcmp.eq.s32.totalorder %v446, %v548
        %vm741 = vcmp.eq.s32.totalorder %v446, %v549
        %vm742 = vcmp.eq.s32.totalorder %v446, %v550
        %vm743 = vcmp.eq.s32.totalorder %v446, %v551
        %vm744 = vcmp.eq.s32.totalorder %v446, %v552
        %vm745 = vcmp.eq.s32.totalorder %v446, %v553
        %vm746 = vcmp.eq.s32.totalorder %v446, %v554
        %vm747 = vcmp.eq.s32.totalorder %v446, %v555
        %vm748 = vcmp.eq.s32.totalorder %v446, %v556
        %vm749 = vcmp.eq.s32.totalorder %v446, %v557
        %vm750 = vcmp.eq.s32.totalorder %v446, %v558
        %vm751 = vcmp.eq.s32.totalorder %v446, %v559
        %vm752 = vcmp.eq.s32.totalorder %v446, %v560
        %vm753 = vcmp.eq.s32.totalorder %v446, %v561
        %vm754 = vcmp.eq.s32.totalorder %v446, %v562
        %vm755 = vcmp.eq.s32.totalorder %v446, %v563
        %vm756 = vcmp.eq.s32.totalorder %v446, %v564
        %vm757 = vcmp.eq.s32.totalorder %v446, %v565
        %vm758 = vcmp.eq.s32.totalorder %v446, %v566
        %vm759 = vcmp.eq.s32.totalorder %v446, %v567
        %vm760 = vcmp.eq.s32.totalorder %v446, %v568
        %vm761 = vcmp.eq.s32.totalorder %v446, %v569
        %vm762 = vcmp.eq.s32.totalorder %v446, %v570
        %vm763 = vcmp.eq.s32.totalorder %v446, %v571
        %vm764 = vcmp.eq.s32.totalorder %v446, %v572
        %vm765 = vcmp.eq.s32.totalorder %v446, %v573
        %vm766 = vcmp.eq.s32.totalorder %v446, %v574
        %vm767 = vcmp.eq.s32.totalorder %v446, %v575
        %vm768 = vcmp.eq.s32.totalorder %v446, %v576
        %vm769 = vcmp.eq.s32.totalorder %v446, %v577
        %vm770 = vcmp.eq.s32.totalorder %v447, %v546
        %vm771 = vcmp.eq.s32.totalorder %v447, %v547
        %vm772 = vcmp.eq.s32.totalorder %v447, %v548
        %vm773 = vcmp.eq.s32.totalorder %v447, %v549
        %vm774 = vcmp.eq.s32.totalorder %v447, %v550
        %vm775 = vcmp.eq.s32.totalorder %v447, %v551
        %vm776 = vcmp.eq.s32.totalorder %v447, %v552
        %vm777 = vcmp.eq.s32.totalorder %v447, %v553
        %vm778 = vcmp.eq.s32.totalorder %v447, %v554
        %vm779 = vcmp.eq.s32.totalorder %v447, %v555
        %vm780 = vcmp.eq.s32.totalorder %v447, %v556
        %vm781 = vcmp.eq.s32.totalorder %v447, %v557
        %vm782 = vcmp.eq.s32.totalorder %v447, %v558
        %vm783 = vcmp.eq.s32.totalorder %v447, %v559
        %vm784 = vcmp.eq.s32.totalorder %v447, %v560
        %vm785 = vcmp.eq.s32.totalorder %v447, %v561
        %vm786 = vcmp.eq.s32.totalorder %v447, %v562
        %vm787 = vcmp.eq.s32.totalorder %v447, %v563
        %vm788 = vcmp.eq.s32.totalorder %v447, %v564
        %vm789 = vcmp.eq.s32.totalorder %v447, %v565
        %vm790 = vcmp.eq.s32.totalorder %v447, %v566
        %vm791 = vcmp.eq.s32.totalorder %v447, %v567
        %vm792 = vcmp.eq.s32.totalorder %v447, %v568
        %vm793 = vcmp.eq.s32.totalorder %v447, %v569
        %vm794 = vcmp.eq.s32.totalorder %v447, %v570
        %vm795 = vcmp.eq.s32.totalorder %v447, %v571
        %vm796 = vcmp.eq.s32.totalorder %v447, %v572
        %vm797 = vcmp.eq.s32.totalorder %v447, %v573
        %vm798 = vcmp.eq.s32.totalorder %v447, %v574
        %vm799 = vcmp.eq.s32.totalorder %v447, %v575
        %vm800 = vcmp.eq.s32.totalorder %v447, %v576
        %vm801 = vcmp.eq.s32.totalorder %v447, %v577
        %vm802 = vcmp.eq.s32.totalorder %v448, %v546
        %vm803 = vcmp.eq.s32.totalorder %v448, %v547
        %vm804 = vcmp.eq.s32.totalorder %v448, %v548
        %vm805 = vcmp.eq.s32.totalorder %v448, %v549
        %vm806 = vcmp.eq.s32.totalorder %v448, %v550
        %vm807 = vcmp.eq.s32.totalorder %v448, %v551
        %vm808 = vcmp.eq.s32.totalorder %v448, %v552
        %vm809 = vcmp.eq.s32.totalorder %v448, %v553
        %vm810 = vcmp.eq.s32.totalorder %v448, %v554
        %vm811 = vcmp.eq.s32.totalorder %v448, %v555
        %vm812 = vcmp.eq.s32.totalorder %v448, %v556
        %vm813 = vcmp.eq.s32.totalorder %v448, %v557
        %vm814 = vcmp.eq.s32.totalorder %v448, %v558
        %vm815 = vcmp.eq.s32.totalorder %v448, %v559
        %vm816 = vcmp.eq.s32.totalorder %v448, %v560
        %vm817 = vcmp.eq.s32.totalorder %v448, %v561
        %vm818 = vcmp.eq.s32.totalorder %v448, %v562
        %vm819 = vcmp.eq.s32.totalorder %v448, %v563
        %vm820 = vcmp.eq.s32.totalorder %v448, %v564
        %vm821 = vcmp.eq.s32.totalorder %v448, %v565
        %vm822 = vcmp.eq.s32.totalorder %v448, %v566
        %vm823 = vcmp.eq.s32.totalorder %v448, %v567
        %vm824 = vcmp.eq.s32.totalorder %v448, %v568
        %vm825 = vcmp.eq.s32.totalorder %v448, %v569
        %vm826 = vcmp.eq.s32.totalorder %v448, %v570
        %vm827 = vcmp.eq.s32.totalorder %v448, %v571
        %vm828 = vcmp.eq.s32.totalorder %v448, %v572
        %vm829 = vcmp.eq.s32.totalorder %v448, %v573
        %vm830 = vcmp.eq.s32.totalorder %v448, %v574
        %vm831 = vcmp.eq.s32.totalorder %v448, %v575
        %vm832 = vcmp.eq.s32.totalorder %v448, %v576
        %vm833 = vcmp.eq.s32.totalorder %v448, %v577
        %v834 = vsel %vm578, 1.0, 0.0
        %v835 = vsel %vm579, 1.0, 0.0
        %v836 = vsel %vm580, 1.0, 0.0
        %v837 = vsel %vm581, 1.0, 0.0
        %v838 = vsel %vm582, 1.0, 0.0
        %v839 = vsel %vm583, 1.0, 0.0
        %v840 = vsel %vm584, 1.0, 0.0
        %v841 = vsel %vm585, 1.0, 0.0
        %v842 = vsel %vm586, 1.0, 0.0
        %v843 = vsel %vm587, 1.0, 0.0
        %v844 = vsel %vm588, 1.0, 0.0
        %v845 = vsel %vm589, 1.0, 0.0
        %v846 = vsel %vm590, 1.0, 0.0
        %v847 = vsel %vm591, 1.0, 0.0
        %v848 = vsel %vm592, 1.0, 0.0
        %v849 = vsel %vm593, 1.0, 0.0
        %v850 = vsel %vm594, 1.0, 0.0
        %v851 = vsel %vm595, 1.0, 0.0
        %v852 = vsel %vm596, 1.0, 0.0
        %v853 = vsel %vm597, 1.0, 0.0
        %v854 = vsel %vm598, 1.0, 0.0
        %v855 = vsel %vm599, 1.0, 0.0
        %v856 = vsel %vm600, 1.0, 0.0
        %v857 = vsel %vm601, 1.0, 0.0
        %v858 = vsel %vm602, 1.0, 0.0
        %v859 = vsel %vm603, 1.0, 0.0
        %v860 = vsel %vm604, 1.0, 0.0
        %v861 = vsel %vm605, 1.0, 0.0
        %v862 = vsel %vm606, 1.0, 0.0
        %v863 = vsel %vm607, 1.0, 0.0
        %v864 = vsel %vm608, 1.0, 0.0
        %v865 = vsel %vm609, 1.0, 0.0
        %v866 = vsel %vm610, 1.0, 0.0
        %v867 = vsel %vm611, 1.0, 0.0
        %v868 = vsel %vm612, 1.0, 0.0
        %v869 = vsel %vm613, 1.0, 0.0
        %v870 = vsel %vm614, 1.0, 0.0
        %v871 = vsel %vm615, 1.0, 0.0
        %v872 = vsel %vm616, 1.0, 0.0
        %v873 = vsel %vm617, 1.0, 0.0
        %v874 = vsel %vm618, 1.0, 0.0
        %v875 = vsel %vm619, 1.0, 0.0
        %v876 = vsel %vm620, 1.0, 0.0
        %v877 = vsel %vm621, 1.0, 0.0
        %v878 = vsel %vm622, 1.0, 0.0
        %v879 = vsel %vm623, 1.0, 0.0
        %v880 = vsel %vm624, 1.0, 0.0
        %v881 = vsel %vm625, 1.0, 0.0
        %v882 = vsel %vm626, 1.0, 0.0
        %v883 = vsel %vm627, 1.0, 0.0
        %v884 = vsel %vm628, 1.0, 0.0
        %v885 = vsel %vm629, 1.0, 0.0
        %v886 = vsel %vm630, 1.0, 0.0
        %v887 = vsel %vm631, 1.0, 0.0
        %v888 = vsel %vm632, 1.0, 0.0
        %v889 = vsel %vm633, 1.0, 0.0
        %v890 = vsel %vm634, 1.0, 0.0
        %v891 = vsel %vm635, 1.0, 0.0
        %v892 = vsel %vm636, 1.0, 0.0
        %v893 = vsel %vm637, 1.0, 0.0
        %v894 = vsel %vm638, 1.0, 0.0
        %v895 = vsel %vm639, 1.0, 0.0
        %v896 = vsel %vm640, 1.0, 0.0
        %v897 = vsel %vm641, 1.0, 0.0
        %v898 = vsel %vm642, 1.0, 0.0
        %v899 = vsel %vm643, 1.0, 0.0
        %v900 = vsel %vm644, 1.0, 0.0
        %v901 = vsel %vm645, 1.0, 0.0
        %v902 = vsel %vm646, 1.0, 0.0
        %v903 = vsel %vm647, 1.0, 0.0
        %v904 = vsel %vm648, 1.0, 0.0
        %v905 = vsel %vm649, 1.0, 0.0
        %v906 = vsel %vm650, 1.0, 0.0
        %v907 = vsel %vm651, 1.0, 0.0
        %v908 = vsel %vm652, 1.0, 0.0
        %v909 = vsel %vm653, 1.0, 0.0
        %v910 = vsel %vm654, 1.0, 0.0
        %v911 = vsel %vm655, 1.0, 0.0
        %v912 = vsel %vm656, 1.0, 0.0
        %v913 = vsel %vm657, 1.0, 0.0
        %v914 = vsel %vm658, 1.0, 0.0
        %v915 = vsel %vm659, 1.0, 0.0
        %v916 = vsel %vm660, 1.0, 0.0
        %v917 = vsel %vm661, 1.0, 0.0
        %v918 = vsel %vm662, 1.0, 0.0
        %v919 = vsel %vm663, 1.0, 0.0
        %v920 = vsel %vm664, 1.0, 0.0
        %v921 = vsel %vm665, 1.0, 0.0
        %v922 = vsel %vm666, 1.0, 0.0
        %v923 = vsel %vm667, 1.0, 0.0
        %v924 = vsel %vm668, 1.0, 0.0
        %v925 = vsel %vm669, 1.0, 0.0
        %v926 = vsel %vm670, 1.0, 0.0
        %v927 = vsel %vm671, 1.0, 0.0
        %v928 = vsel %vm672, 1.0, 0.0
        %v929 = vsel %vm673, 1.0, 0.0
        %v930 = vsel %vm674, 1.0, 0.0
        %v931 = vsel %vm675, 1.0, 0.0
        %v932 = vsel %vm676, 1.0, 0.0
        %v933 = vsel %vm677, 1.0, 0.0
        %v934 = vsel %vm678, 1.0, 0.0
        %v935 = vsel %vm679, 1.0, 0.0
        %v936 = vsel %vm680, 1.0, 0.0
        %v937 = vsel %vm681, 1.0, 0.0
        %v938 = vsel %vm682, 1.0, 0.0
        %v939 = vsel %vm683, 1.0, 0.0
        %v940 = vsel %vm684, 1.0, 0.0
        %v941 = vsel %vm685, 1.0, 0.0
        %v942 = vsel %vm686, 1.0, 0.0
        %v943 = vsel %vm687, 1.0, 0.0
        %v944 = vsel %vm688, 1.0, 0.0
        %v945 = vsel %vm689, 1.0, 0.0
        %v946 = vsel %vm690, 1.0, 0.0
        %v947 = vsel %vm691, 1.0, 0.0
        %v948 = vsel %vm692, 1.0, 0.0
        %v949 = vsel %vm693, 1.0, 0.0
        %v950 = vsel %vm694, 1.0, 0.0
        %v951 = vsel %vm695, 1.0, 0.0
        %v952 = vsel %vm696, 1.0, 0.0
        %v953 = vsel %vm697, 1.0, 0.0
        %v954 = vsel %vm698, 1.0, 0.0
        %v955 = vsel %vm699, 1.0, 0.0
        %v956 = vsel %vm700, 1.0, 0.0
        %v957 = vsel %vm701, 1.0, 0.0
        %v958 = vsel %vm702, 1.0, 0.0
        %v959 = vsel %vm703, 1.0, 0.0
        %v960 = vsel %vm704, 1.0, 0.0
        %v961 = vsel %vm705, 1.0, 0.0
        %v962 = vsel %vm706, 1.0, 0.0
        %v963 = vsel %vm707, 1.0, 0.0
        %v964 = vsel %vm708, 1.0, 0.0
        %v965 = vsel %vm709, 1.0, 0.0
        %v966 = vsel %vm710, 1.0, 0.0
        %v967 = vsel %vm711, 1.0, 0.0
        %v968 = vsel %vm712, 1.0, 0.0
        %v969 = vsel %vm713, 1.0, 0.0
        %v970 = vsel %vm714, 1.0, 0.0
        %v971 = vsel %vm715, 1.0, 0.0
        %v972 = vsel %vm716, 1.0, 0.0
        %v973 = vsel %vm717, 1.0, 0.0
        %v974 = vsel %vm718, 1.0, 0.0
        %v975 = vsel %vm719, 1.0, 0.0
        %v976 = vsel %vm720, 1.0, 0.0
        %v977 = vsel %vm721, 1.0, 0.0
        %v978 = vsel %vm722, 1.0, 0.0
        %v979 = vsel %vm723, 1.0, 0.0
        %v980 = vsel %vm724, 1.0, 0.0
        %v981 = vsel %vm725, 1.0, 0.0
        %v982 = vsel %vm726, 1.0, 0.0
        %v983 = vsel %vm727, 1.0, 0.0
        %v984 = vsel %vm728, 1.0, 0.0
        %v985 = vsel %vm729, 1.0, 0.0
        %v986 = vsel %vm730, 1.0, 0.0
        %v987 = vsel %vm731, 1.0, 0.0
        %v988 = vsel %vm732, 1.0, 0.0
        %v989 = vsel %vm733, 1.0, 0.0
        %v990 = vsel %vm734, 1.0, 0.0
        %v991 = vsel %vm735, 1.0, 0.0
        %v992 = vsel %vm736, 1.0, 0.0
        %v993 = vsel %vm737, 1.0, 0.0
        %v994 = vsel %vm738, 1.0, 0.0
        %v995 = vsel %vm739, 1.0, 0.0
        %v996 = vsel %vm740, 1.0, 0.0
        %v997 = vsel %vm741, 1.0, 0.0
        %v998 = vsel %vm742, 1.0, 0.0
        %v999 = vsel %vm743, 1.0, 0.0
        %v1000 = vsel %vm744, 1.0, 0.0
        %v1001 = vsel %vm745, 1.0, 0.0
        %v1002 = vsel %vm746, 1.0, 0.0
        %v1003 = vsel %vm747, 1.0, 0.0
        %v1004 = vsel %vm748, 1.0, 0.0
        %v1005 = vsel %vm749, 1.0, 0.0
        %v1006 = vsel %vm750, 1.0, 0.0
        %v1007 = vsel %vm751, 1.0, 0.0
        %v1008 = vsel %vm752, 1.0, 0.0
        %v1009 = vsel %vm753, 1.0, 0.0
        %v1010 = vsel %vm754, 1.0, 0.0
        %v1011 = vsel %vm755, 1.0, 0.0
        %v1012 = vsel %vm756, 1.0, 0.0
        %v1013 = vsel %vm757, 1.0, 0.0
        %v1014 = vsel %vm758, 1.0, 0.0
        %v1015 = vsel %vm759, 1.0, 0.0
        %v1016 = vsel %vm760, 1.0, 0.0
        %v1017 = vsel %vm761, 1.0, 0.0
        %v1018 = vsel %vm762, 1.0, 0.0
        %v1019 = vsel %vm763, 1.0, 0.0
        %v1020 = vsel %vm764, 1.0, 0.0
        %v1021 = vsel %vm765, 1.0, 0.0
        %v1022 = vsel %vm766, 1.0, 0.0
        %v1023 = vsel %vm767, 1.0, 0.0
        %v1024 = vsel %vm768, 1.0, 0.0
        %v1025 = vsel %vm769, 1.0, 0.0
        %v1026 = vsel %vm770, 1.0, 0.0
        %v1027 = vsel %vm771, 1.0, 0.0
        %v1028 = vsel %vm772, 1.0, 0.0
        %v1029 = vsel %vm773, 1.0, 0.0
        %v1030 = vsel %vm774, 1.0, 0.0
        %v1031 = vsel %vm775, 1.0, 0.0
        %v1032 = vsel %vm776, 1.0, 0.0
        %v1033 = vsel %vm777, 1.0, 0.0
        %v1034 = vsel %vm778, 1.0, 0.0
        %v1035 = vsel %vm779, 1.0, 0.0
        %v1036 = vsel %vm780, 1.0, 0.0
        %v1037 = vsel %vm781, 1.0, 0.0
        %v1038 = vsel %vm782, 1.0, 0.0
        %v1039 = vsel %vm783, 1.0, 0.0
        %v1040 = vsel %vm784, 1.0, 0.0
        %v1041 = vsel %vm785, 1.0, 0.0
        %v1042 = vsel %vm786, 1.0, 0.0
        %v1043 = vsel %vm787, 1.0, 0.0
        %v1044 = vsel %vm788, 1.0, 0.0
        %v1045 = vsel %vm789, 1.0, 0.0
        %v1046 = vsel %vm790, 1.0, 0.0
        %v1047 = vsel %vm791, 1.0, 0.0
        %v1048 = vsel %vm792, 1.0, 0.0
        %v1049 = vsel %vm793, 1.0, 0.0
        %v1050 = vsel %vm794, 1.0, 0.0
        %v1051 = vsel %vm795, 1.0, 0.0
        %v1052 = vsel %vm796, 1.0, 0.0
        %v1053 = vsel %vm797, 1.0, 0.0
        %v1054 = vsel %vm798, 1.0, 0.0
        %v1055 = vsel %vm799, 1.0, 0.0
        %v1056 = vsel %vm800, 1.0, 0.0
        %v1057 = vsel %vm801, 1.0, 0.0
        %v1058 = vsel %vm802, 1.0, 0.0
        %v1059 = vsel %vm803, 1.0, 0.0
        %v1060 = vsel %vm804, 1.0, 0.0
        %v1061 = vsel %vm805, 1.0, 0.0
        %v1062 = vsel %vm806, 1.0, 0.0
        %v1063 = vsel %vm807, 1.0, 0.0
        %v1064 = vsel %vm808, 1.0, 0.0
        %v1065 = vsel %vm809, 1.0, 0.0
        %v1066 = vsel %vm810, 1.0, 0.0
        %v1067 = vsel %vm811, 1.0, 0.0
        %v1068 = vsel %vm812, 1.0, 0.0
        %v1069 = vsel %vm813, 1.0, 0.0
        %v1070 = vsel %vm814, 1.0, 0.0
        %v1071 = vsel %vm815, 1.0, 0.0
        %v1072 = vsel %vm816, 1.0, 0.0
        %v1073 = vsel %vm817, 1.0, 0.0
        %v1074 = vsel %vm818, 1.0, 0.0
        %v1075 = vsel %vm819, 1.0, 0.0
        %v1076 = vsel %vm820, 1.0, 0.0
        %v1077 = vsel %vm821, 1.0, 0.0
        %v1078 = vsel %vm822, 1.0, 0.0
        %v1079 = vsel %vm823, 1.0, 0.0
        %v1080 = vsel %vm824, 1.0, 0.0
        %v1081 = vsel %vm825, 1.0, 0.0
        %v1082 = vsel %vm826, 1.0, 0.0
        %v1083 = vsel %vm827, 1.0, 0.0
        %v1084 = vsel %vm828, 1.0, 0.0
        %v1085 = vsel %vm829, 1.0, 0.0
        %v1086 = vsel %vm830, 1.0, 0.0
        %v1087 = vsel %vm831, 1.0, 0.0
        %v1088 = vsel %vm832, 1.0, 0.0
        %v1089 = vsel %vm833, 1.0, 0.0
        %v1090 = vpack.c.bf16 %v866, %v834
        %v1091 = vpack.c.bf16 %v867, %v835
        %v1092 = vpack.c.bf16 %v868, %v836
        %v1093 = vpack.c.bf16 %v869, %v837
        %v1094 = vpack.c.bf16 %v870, %v838
        %v1095 = vpack.c.bf16 %v871, %v839
        %v1096 = vpack.c.bf16 %v872, %v840
        %v1097 = vpack.c.bf16 %v873, %v841
        %v1098 = vpack.c.bf16 %v874, %v842
        %v1099 = vpack.c.bf16 %v875, %v843
        %v1100 = vpack.c.bf16 %v876, %v844
        %v1101 = vpack.c.bf16 %v877, %v845
        %v1102 = vpack.c.bf16 %v878, %v846
        %v1103 = vpack.c.bf16 %v879, %v847
        %v1104 = vpack.c.bf16 %v880, %v848
        %v1105 = vpack.c.bf16 %v881, %v849
        %v1106 = vpack.c.bf16 %v882, %v850
        %v1107 = vpack.c.bf16 %v883, %v851
        %v1108 = vpack.c.bf16 %v884, %v852
        %v1109 = vpack.c.bf16 %v885, %v853
        %v1110 = vpack.c.bf16 %v886, %v854
        %v1111 = vpack.c.bf16 %v887, %v855
        %v1112 = vpack.c.bf16 %v888, %v856
        %v1113 = vpack.c.bf16 %v889, %v857
        %v1114 = vpack.c.bf16 %v890, %v858
        %v1115 = vpack.c.bf16 %v891, %v859
        %v1116 = vpack.c.bf16 %v892, %v860
        %v1117 = vpack.c.bf16 %v893, %v861
        %v1118 = vpack.c.bf16 %v894, %v862
        %v1119 = vpack.c.bf16 %v895, %v863
        %v1120 = vpack.c.bf16 %v896, %v864
        %v1121 = vpack.c.bf16 %v897, %v865
        %v1122 = vpack.c.bf16 %v930, %v898
        %v1123 = vpack.c.bf16 %v931, %v899
        %v1124 = vpack.c.bf16 %v932, %v900
        %v1125 = vpack.c.bf16 %v933, %v901
        %v1126 = vpack.c.bf16 %v934, %v902
        %v1127 = vpack.c.bf16 %v935, %v903
        %v1128 = vpack.c.bf16 %v936, %v904
        %v1129 = vpack.c.bf16 %v937, %v905
        %v1130 = vpack.c.bf16 %v938, %v906
        %v1131 = vpack.c.bf16 %v939, %v907
        %v1132 = vpack.c.bf16 %v940, %v908
        %v1133 = vpack.c.bf16 %v941, %v909
        %v1134 = vpack.c.bf16 %v942, %v910
        %v1135 = vpack.c.bf16 %v943, %v911
        %v1136 = vpack.c.bf16 %v944, %v912
        %v1137 = vpack.c.bf16 %v945, %v913
        %v1138 = vpack.c.bf16 %v946, %v914
        %v1139 = vpack.c.bf16 %v947, %v915
        %v1140 = vpack.c.bf16 %v948, %v916
        %v1141 = vpack.c.bf16 %v949, %v917
        %v1142 = vpack.c.bf16 %v950, %v918
        %v1143 = vpack.c.bf16 %v951, %v919
        %v1144 = vpack.c.bf16 %v952, %v920
        %v1145 = vpack.c.bf16 %v953, %v921
        %v1146 = vpack.c.bf16 %v954, %v922
        %v1147 = vpack.c.bf16 %v955, %v923
        %v1148 = vpack.c.bf16 %v956, %v924
        %v1149 = vpack.c.bf16 %v957, %v925
        %v1150 = vpack.c.bf16 %v958, %v926
        %v1151 = vpack.c.bf16 %v959, %v927
        %v1152 = vpack.c.bf16 %v960, %v928
        %v1153 = vpack.c.bf16 %v961, %v929
        %v1154 = vpack.c.bf16 %v994, %v962
        %v1155 = vpack.c.bf16 %v995, %v963
        %v1156 = vpack.c.bf16 %v996, %v964
        %v1157 = vpack.c.bf16 %v997, %v965
        %v1158 = vpack.c.bf16 %v998, %v966
        %v1159 = vpack.c.bf16 %v999, %v967
        %v1160 = vpack.c.bf16 %v1000, %v968
        %v1161 = vpack.c.bf16 %v1001, %v969
        %v1162 = vpack.c.bf16 %v1002, %v970
        %v1163 = vpack.c.bf16 %v1003, %v971
        %v1164 = vpack.c.bf16 %v1004, %v972
        %v1165 = vpack.c.bf16 %v1005, %v973
        %v1166 = vpack.c.bf16 %v1006, %v974
        %v1167 = vpack.c.bf16 %v1007, %v975
        %v1168 = vpack.c.bf16 %v1008, %v976
        %v1169 = vpack.c.bf16 %v1009, %v977
        %v1170 = vpack.c.bf16 %v1010, %v978
        %v1171 = vpack.c.bf16 %v1011, %v979
        %v1172 = vpack.c.bf16 %v1012, %v980
        %v1173 = vpack.c.bf16 %v1013, %v981
        %v1174 = vpack.c.bf16 %v1014, %v982
        %v1175 = vpack.c.bf16 %v1015, %v983
        %v1176 = vpack.c.bf16 %v1016, %v984
        %v1177 = vpack.c.bf16 %v1017, %v985
        %v1178 = vpack.c.bf16 %v1018, %v986
        %v1179 = vpack.c.bf16 %v1019, %v987
        %v1180 = vpack.c.bf16 %v1020, %v988
        %v1181 = vpack.c.bf16 %v1021, %v989
        %v1182 = vpack.c.bf16 %v1022, %v990
        %v1183 = vpack.c.bf16 %v1023, %v991
        %v1184 = vpack.c.bf16 %v1024, %v992
        %v1185 = vpack.c.bf16 %v1025, %v993
        %v1186 = vpack.c.bf16 %v1058, %v1026
        %v1187 = vpack.c.bf16 %v1059, %v1027
        %v1188 = vpack.c.bf16 %v1060, %v1028
        %v1189 = vpack.c.bf16 %v1061, %v1029
        %v1190 = vpack.c.bf16 %v1062, %v1030
        %v1191 = vpack.c.bf16 %v1063, %v1031
        %v1192 = vpack.c.bf16 %v1064, %v1032
        %v1193 = vpack.c.bf16 %v1065, %v1033
        %v1194 = vpack.c.bf16 %v1066, %v1034
        %v1195 = vpack.c.bf16 %v1067, %v1035
        %v1196 = vpack.c.bf16 %v1068, %v1036
        %v1197 = vpack.c.bf16 %v1069, %v1037
        %v1198 = vpack.c.bf16 %v1070, %v1038
        %v1199 = vpack.c.bf16 %v1071, %v1039
        %v1200 = vpack.c.bf16 %v1072, %v1040
        %v1201 = vpack.c.bf16 %v1073, %v1041
        %v1202 = vpack.c.bf16 %v1074, %v1042
        %v1203 = vpack.c.bf16 %v1075, %v1043
        %v1204 = vpack.c.bf16 %v1076, %v1044
        %v1205 = vpack.c.bf16 %v1077, %v1045
        %v1206 = vpack.c.bf16 %v1078, %v1046
        %v1207 = vpack.c.bf16 %v1079, %v1047
        %v1208 = vpack.c.bf16 %v1080, %v1048
        %v1209 = vpack.c.bf16 %v1081, %v1049
        %v1210 = vpack.c.bf16 %v1082, %v1050
        %v1211 = vpack.c.bf16 %v1083, %v1051
        %v1212 = vpack.c.bf16 %v1084, %v1052
        %v1213 = vpack.c.bf16 %v1085, %v1053
        %v1214 = vpack.c.bf16 %v1086, %v1054
        %v1215 = vpack.c.bf16 %v1087, %v1055
        %v1216 = vpack.c.bf16 %v1088, %v1056
        %v1217 = vpack.c.bf16 %v1089, %v1057
        %v1218 = vpack.c.bf16 %v432, %v432
        %v1219 = vpack.c.bf16 %v433, %v433
        %v1220 = vpack.c.bf16 %v434, %v434
        %v1221 = vpack.c.bf16 %v435, %v435
        %v1222 = vpack.c.bf16 %v436, %v436
        %v1223 = vpack.c.bf16 %v437, %v437
        %v1224 = vpack.c.bf16 %v438, %v438
        %v1225 = vpack.c.bf16 %v439, %v439
        %v1226 = vld [vmem:[%s393] sm:$0xff]
        %v1227 = vld [vmem:[%s393 + $0x8] sm:$0xff]
        %v1228 = vld [vmem:[%s393 + $0x10] sm:$0xff]
        %v1229 = vld [vmem:[%s393 + $0x18] sm:$0xff]
        %v1230 = vld [vmem:[%s393 + $0x20] sm:$0xff]
        %v1231 = vld [vmem:[%s393 + $0x28] sm:$0xff]
        %v1232 = vld [vmem:[%s393 + $0x30] sm:$0xff]
        %v1233 = vld [vmem:[%s393 + $0x38] sm:$0xff]
        %v1234 = vpack.c.bf16 %v1226, %v1226
        %v1235 = vpack.c.bf16 %v1227, %v1227
        %v1236 = vpack.c.bf16 %v1228, %v1228
        %v1237 = vpack.c.bf16 %v1229, %v1229
        %v1238 = vpack.c.bf16 %v1230, %v1230
        %v1239 = vpack.c.bf16 %v1231, %v1231
        %v1240 = vpack.c.bf16 %v1232, %v1232
        %v1241 = vpack.c.bf16 %v1233, %v1233
        %v1250 = vrot.slane %v1218, 3
        %v1251 = vrot.slane %v1219, 3
        %v1252 = vrot.slane %v1220, 3
        %v1253 = vrot.slane %v1221, 3
        %v1254 = vrot.slane %v1222, 3
        %v1255 = vrot.slane %v1223, 3
        %v1256 = vrot.slane %v1224, 3
        %v1257 = vrot.slane %v1225, 3
        %vm1258 = vcmask 1040384
        %v1261 = vsel %vm1258, %v1218, %v1250
        %vm1263 = vcmask 1041409
        %v1264 = vsel %vm1263, %v1218, %v1250
        %v1266 = vrot.slane %v1264, 1
        %vm1267 = vcmask 1042434
        %v1268 = vsel %vm1267, %v1218, %v1250
        %v1270 = vrot.slane %v1268, 2
        %vm1271 = vcmask 1043459
        %v1272 = vsel %vm1271, %v1218, %v1250
        %v1274 = vrot.slane %v1272, 3
        %v1277 = vsel %vm1258, %v1219, %v1251
        %v1279 = vsel %vm1263, %v1219, %v1251
        %v1281 = vrot.slane %v1279, 1
        %v1282 = vsel %vm1267, %v1219, %v1251
        %v1284 = vrot.slane %v1282, 2
        %v1285 = vsel %vm1271, %v1219, %v1251
        %v1287 = vrot.slane %v1285, 3
        %v1290 = vsel %vm1258, %v1220, %v1252
        %v1292 = vsel %vm1263, %v1220, %v1252
        %v1294 = vrot.slane %v1292, 1
        %v1295 = vsel %vm1267, %v1220, %v1252
        %v1297 = vrot.slane %v1295, 2
        %v1298 = vsel %vm1271, %v1220, %v1252
        %v1300 = vrot.slane %v1298, 3
        %v1303 = vsel %vm1258, %v1221, %v1253
        %v1305 = vsel %vm1263, %v1221, %v1253
        %v1307 = vrot.slane %v1305, 1
        %v1308 = vsel %vm1267, %v1221, %v1253
        %v1310 = vrot.slane %v1308, 2
        %v1311 = vsel %vm1271, %v1221, %v1253
        %v1313 = vrot.slane %v1311, 3
        %v1316 = vsel %vm1258, %v1222, %v1254
        %v1318 = vsel %vm1263, %v1222, %v1254
        %v1320 = vrot.slane %v1318, 1
        %v1321 = vsel %vm1267, %v1222, %v1254
        %v1323 = vrot.slane %v1321, 2
        %v1324 = vsel %vm1271, %v1222, %v1254
        %v1326 = vrot.slane %v1324, 3
        %v1329 = vsel %vm1258, %v1223, %v1255
        %v1331 = vsel %vm1263, %v1223, %v1255
        %v1333 = vrot.slane %v1331, 1
        %v1334 = vsel %vm1267, %v1223, %v1255
        %v1336 = vrot.slane %v1334, 2
        %v1337 = vsel %vm1271, %v1223, %v1255
        %v1339 = vrot.slane %v1337, 3
        %v1342 = vsel %vm1258, %v1224, %v1256
        %v1344 = vsel %vm1263, %v1224, %v1256
        %v1346 = vrot.slane %v1344, 1
        %v1347 = vsel %vm1267, %v1224, %v1256
        %v1349 = vrot.slane %v1347, 2
        %v1350 = vsel %vm1271, %v1224, %v1256
        %v1352 = vrot.slane %v1350, 3
        %v1355 = vsel %vm1258, %v1225, %v1257
        %v1357 = vsel %vm1263, %v1225, %v1257
        %v1359 = vrot.slane %v1357, 1
        %v1360 = vsel %vm1267, %v1225, %v1257
        %v1362 = vrot.slane %v1360, 2
        %v1363 = vsel %vm1271, %v1225, %v1257
        %v1365 = vrot.slane %v1363, 3
        %v1366 = vunpack.i.l.s16 %v1261
        %v1367 = vunpack.i.h.s16 %v1261
        %v1368 = vunpack.i.l.s16 %v1266
        %v1369 = vunpack.i.h.s16 %v1266
        %v1370 = vunpack.i.l.s16 %v1270
        %v1371 = vunpack.i.h.s16 %v1270
        %v1372 = vunpack.i.l.s16 %v1274
        %v1373 = vunpack.i.h.s16 %v1274
        %v1374 = vunpack.i.l.s16 %v1277
        %v1375 = vunpack.i.h.s16 %v1277
        %v1376 = vunpack.i.l.s16 %v1281
        %v1377 = vunpack.i.h.s16 %v1281
        %v1378 = vunpack.i.l.s16 %v1284
        %v1379 = vunpack.i.h.s16 %v1284
        %v1380 = vunpack.i.l.s16 %v1287
        %v1381 = vunpack.i.h.s16 %v1287
        %v1382 = vunpack.i.l.s16 %v1290
        %v1383 = vunpack.i.h.s16 %v1290
        %v1384 = vunpack.i.l.s16 %v1294
        %v1385 = vunpack.i.h.s16 %v1294
        %v1386 = vunpack.i.l.s16 %v1297
        %v1387 = vunpack.i.h.s16 %v1297
        %v1388 = vunpack.i.l.s16 %v1300
        %v1389 = vunpack.i.h.s16 %v1300
        %v1390 = vunpack.i.l.s16 %v1303
        %v1391 = vunpack.i.h.s16 %v1303
        %v1392 = vunpack.i.l.s16 %v1307
        %v1393 = vunpack.i.h.s16 %v1307
        %v1394 = vunpack.i.l.s16 %v1310
        %v1395 = vunpack.i.h.s16 %v1310
        %v1396 = vunpack.i.l.s16 %v1313
        %v1397 = vunpack.i.h.s16 %v1313
        %v1398 = vunpack.i.l.s16 %v1316
        %v1399 = vunpack.i.h.s16 %v1316
        %v1400 = vunpack.i.l.s16 %v1320
        %v1401 = vunpack.i.h.s16 %v1320
        %v1402 = vunpack.i.l.s16 %v1323
        %v1403 = vunpack.i.h.s16 %v1323
        %v1404 = vunpack.i.l.s16 %v1326
        %v1405 = vunpack.i.h.s16 %v1326
        %v1406 = vunpack.i.l.s16 %v1329
        %v1407 = vunpack.i.h.s16 %v1329
        %v1408 = vunpack.i.l.s16 %v1333
        %v1409 = vunpack.i.h.s16 %v1333
        %v1410 = vunpack.i.l.s16 %v1336
        %v1411 = vunpack.i.h.s16 %v1336
        %v1412 = vunpack.i.l.s16 %v1339
        %v1413 = vunpack.i.h.s16 %v1339
        %v1414 = vunpack.i.l.s16 %v1342
        %v1415 = vunpack.i.h.s16 %v1342
        %v1416 = vunpack.i.l.s16 %v1346
        %v1417 = vunpack.i.h.s16 %v1346
        %v1418 = vunpack.i.l.s16 %v1349
        %v1419 = vunpack.i.h.s16 %v1349
        %v1420 = vunpack.i.l.s16 %v1352
        %v1421 = vunpack.i.h.s16 %v1352
        %v1422 = vunpack.i.l.s16 %v1355
        %v1423 = vunpack.i.h.s16 %v1355
        %v1424 = vunpack.i.l.s16 %v1359
        %v1425 = vunpack.i.h.s16 %v1359
        %v1426 = vunpack.i.l.s16 %v1362
        %v1427 = vunpack.i.h.s16 %v1362
        %v1428 = vunpack.i.l.s16 %v1365
        %v1429 = vunpack.i.h.s16 %v1365
        %v1430 = vpack.i.b16 %v1366, %v1366
        %v1431 = vpack.i.b16 %v1367, %v1367
        %v1432 = vpack.i.b16 %v1368, %v1368
        %v1433 = vpack.i.b16 %v1369, %v1369
        %v1434 = vpack.i.b16 %v1370, %v1370
        %v1435 = vpack.i.b16 %v1371, %v1371
        %v1436 = vpack.i.b16 %v1372, %v1372
        %v1437 = vpack.i.b16 %v1373, %v1373
        %v1438 = vpack.i.b16 %v1374, %v1374
        %v1439 = vpack.i.b16 %v1375, %v1375
        %v1440 = vpack.i.b16 %v1376, %v1376
        %v1441 = vpack.i.b16 %v1377, %v1377
        %v1442 = vpack.i.b16 %v1378, %v1378
        %v1443 = vpack.i.b16 %v1379, %v1379
        %v1444 = vpack.i.b16 %v1380, %v1380
        %v1445 = vpack.i.b16 %v1381, %v1381
        %v1446 = vpack.i.b16 %v1382, %v1382
        %v1447 = vpack.i.b16 %v1383, %v1383
        %v1448 = vpack.i.b16 %v1384, %v1384
        %v1449 = vpack.i.b16 %v1385, %v1385
        %v1450 = vpack.i.b16 %v1386, %v1386
        %v1451 = vpack.i.b16 %v1387, %v1387
        %v1452 = vpack.i.b16 %v1388, %v1388
        %v1453 = vpack.i.b16 %v1389, %v1389
        %v1454 = vpack.i.b16 %v1390, %v1390
        %v1455 = vpack.i.b16 %v1391, %v1391
        %v1456 = vpack.i.b16 %v1392, %v1392
        %v1457 = vpack.i.b16 %v1393, %v1393
        %v1458 = vpack.i.b16 %v1394, %v1394
        %v1459 = vpack.i.b16 %v1395, %v1395
        %v1460 = vpack.i.b16 %v1396, %v1396
        %v1461 = vpack.i.b16 %v1397, %v1397
        %v1462 = vpack.i.b16 %v1398, %v1398
        %v1463 = vpack.i.b16 %v1399, %v1399
        %v1464 = vpack.i.b16 %v1400, %v1400
        %v1465 = vpack.i.b16 %v1401, %v1401
        %v1466 = vpack.i.b16 %v1402, %v1402
        %v1467 = vpack.i.b16 %v1403, %v1403
        %v1468 = vpack.i.b16 %v1404, %v1404
        %v1469 = vpack.i.b16 %v1405, %v1405
        %v1470 = vpack.i.b16 %v1406, %v1406
        %v1471 = vpack.i.b16 %v1407, %v1407
        %v1472 = vpack.i.b16 %v1408, %v1408
        %v1473 = vpack.i.b16 %v1409, %v1409
        %v1474 = vpack.i.b16 %v1410, %v1410
        %v1475 = vpack.i.b16 %v1411, %v1411
        %v1476 = vpack.i.b16 %v1412, %v1412
        %v1477 = vpack.i.b16 %v1413, %v1413
        %v1478 = vpack.i.b16 %v1414, %v1414
        %v1479 = vpack.i.b16 %v1415, %v1415
        %v1480 = vpack.i.b16 %v1416, %v1416
        %v1481 = vpack.i.b16 %v1417, %v1417
        %v1482 = vpack.i.b16 %v1418, %v1418
        %v1483 = vpack.i.b16 %v1419, %v1419
        %v1484 = vpack.i.b16 %v1420, %v1420
        %v1485 = vpack.i.b16 %v1421, %v1421
        %v1486 = vpack.i.b16 %v1422, %v1422
        %v1487 = vpack.i.b16 %v1423, %v1423
        %v1488 = vpack.i.b16 %v1424, %v1424
        %v1489 = vpack.i.b16 %v1425, %v1425
        %v1490 = vpack.i.b16 %v1426, %v1426
        %v1491 = vpack.i.b16 %v1427, %v1427
        %v1492 = vpack.i.b16 %v1428, %v1428
        %v1493 = vpack.i.b16 %v1429, %v1429
        %v1494 = vperm.slane %v1430, 0
        %v1495 = vperm.slane %v1431, 0
        %v1496 = vperm.slane %v1432, 0
        %v1497 = vperm.slane %v1433, 0
        %v1498 = vperm.slane %v1434, 0
        %v1499 = vperm.slane %v1435, 0
        %v1500 = vperm.slane %v1436, 0
        %v1501 = vperm.slane %v1437, 0
        %v1502 = vperm.slane %v1438, 0
        %v1503 = vperm.slane %v1439, 0
        %v1504 = vperm.slane %v1440, 0
        %v1505 = vperm.slane %v1441, 0
        %v1506 = vperm.slane %v1442, 0
        %v1507 = vperm.slane %v1443, 0
        %v1508 = vperm.slane %v1444, 0
        %v1509 = vperm.slane %v1445, 0
        %v1510 = vperm.slane %v1446, 0
        %v1511 = vperm.slane %v1447, 0
        %v1512 = vperm.slane %v1448, 0
        %v1513 = vperm.slane %v1449, 0
        %v1514 = vperm.slane %v1450, 0
        %v1515 = vperm.slane %v1451, 0
        %v1516 = vperm.slane %v1452, 0
        %v1517 = vperm.slane %v1453, 0
        %v1518 = vperm.slane %v1454, 0
        %v1519 = vperm.slane %v1455, 0
        %v1520 = vperm.slane %v1456, 0
        %v1521 = vperm.slane %v1457, 0
        %v1522 = vperm.slane %v1458, 0
        %v1523 = vperm.slane %v1459, 0
        %v1524 = vperm.slane %v1460, 0
        %v1525 = vperm.slane %v1461, 0
        %v1526 = vperm.slane %v1462, 0
        %v1527 = vperm.slane %v1463, 0
        %v1528 = vperm.slane %v1464, 0
        %v1529 = vperm.slane %v1465, 0
        %v1530 = vperm.slane %v1466, 0
        %v1531 = vperm.slane %v1467, 0
        %v1532 = vperm.slane %v1468, 0
        %v1533 = vperm.slane %v1469, 0
        %v1534 = vperm.slane %v1470, 0
        %v1535 = vperm.slane %v1471, 0
        %v1536 = vperm.slane %v1472, 0
        %v1537 = vperm.slane %v1473, 0
        %v1538 = vperm.slane %v1474, 0
        %v1539 = vperm.slane %v1475, 0
        %v1540 = vperm.slane %v1476, 0
        %v1541 = vperm.slane %v1477, 0
        %v1542 = vperm.slane %v1478, 0
        %v1543 = vperm.slane %v1479, 0
        %v1544 = vperm.slane %v1480, 0
        %v1545 = vperm.slane %v1481, 0
        %v1546 = vperm.slane %v1482, 0
        %v1547 = vperm.slane %v1483, 0
        %v1548 = vperm.slane %v1484, 0
        %v1549 = vperm.slane %v1485, 0
        %v1550 = vperm.slane %v1486, 0
        %v1551 = vperm.slane %v1487, 0
        %v1552 = vperm.slane %v1488, 0
        %v1553 = vperm.slane %v1489, 0
        %v1554 = vperm.slane %v1490, 0
        %v1555 = vperm.slane %v1491, 0
        %v1556 = vperm.slane %v1492, 0
        %v1557 = vperm.slane %v1493, 0
        %v1559 = vpack.i.b16 %v1494, %v1494
        %v1561 = vperm.slane %v1559, 0
        %v1563 = vpack.i.b16 %v1495, %v1495
        %v1565 = vperm.slane %v1563, 0
        %v1567 = vpack.i.b16 %v1496, %v1496
        %v1569 = vperm.slane %v1567, 0
        %v1571 = vpack.i.b16 %v1497, %v1497
        %v1573 = vperm.slane %v1571, 0
        %v1575 = vpack.i.b16 %v1498, %v1498
        %v1577 = vperm.slane %v1575, 0
        %v1579 = vpack.i.b16 %v1499, %v1499
        %v1581 = vperm.slane %v1579, 0
        %v1583 = vpack.i.b16 %v1500, %v1500
        %v1585 = vperm.slane %v1583, 0
        %v1587 = vpack.i.b16 %v1501, %v1501
        %v1589 = vperm.slane %v1587, 0
        %v1591 = vpack.i.b16 %v1502, %v1502
        %v1593 = vperm.slane %v1591, 0
        %v1595 = vpack.i.b16 %v1503, %v1503
        %v1597 = vperm.slane %v1595, 0
        %v1599 = vpack.i.b16 %v1504, %v1504
        %v1601 = vperm.slane %v1599, 0
        %v1603 = vpack.i.b16 %v1505, %v1505
        %v1605 = vperm.slane %v1603, 0
        %v1607 = vpack.i.b16 %v1506, %v1506
        %v1609 = vperm.slane %v1607, 0
        %v1611 = vpack.i.b16 %v1507, %v1507
        %v1613 = vperm.slane %v1611, 0
        %v1615 = vpack.i.b16 %v1508, %v1508
        %v1617 = vperm.slane %v1615, 0
        %v1619 = vpack.i.b16 %v1509, %v1509
        %v1621 = vperm.slane %v1619, 0
        %v1623 = vpack.i.b16 %v1510, %v1510
        %v1625 = vperm.slane %v1623, 0
        %v1627 = vpack.i.b16 %v1511, %v1511
        %v1629 = vperm.slane %v1627, 0
        %v1631 = vpack.i.b16 %v1512, %v1512
        %v1633 = vperm.slane %v1631, 0
        %v1635 = vpack.i.b16 %v1513, %v1513
        %v1637 = vperm.slane %v1635, 0
        %v1639 = vpack.i.b16 %v1514, %v1514
        %v1641 = vperm.slane %v1639, 0
        %v1643 = vpack.i.b16 %v1515, %v1515
        %v1645 = vperm.slane %v1643, 0
        %v1647 = vpack.i.b16 %v1516, %v1516
        %v1649 = vperm.slane %v1647, 0
        %v1651 = vpack.i.b16 %v1517, %v1517
        %v1653 = vperm.slane %v1651, 0
        %v1655 = vpack.i.b16 %v1518, %v1518
        %v1657 = vperm.slane %v1655, 0
        %v1659 = vpack.i.b16 %v1519, %v1519
        %v1661 = vperm.slane %v1659, 0
        %v1663 = vpack.i.b16 %v1520, %v1520
        %v1665 = vperm.slane %v1663, 0
        %v1667 = vpack.i.b16 %v1521, %v1521
        %v1669 = vperm.slane %v1667, 0
        %v1671 = vpack.i.b16 %v1522, %v1522
        %v1673 = vperm.slane %v1671, 0
        %v1675 = vpack.i.b16 %v1523, %v1523
        %v1677 = vperm.slane %v1675, 0
        %v1679 = vpack.i.b16 %v1524, %v1524
        %v1681 = vperm.slane %v1679, 0
        %v1683 = vpack.i.b16 %v1525, %v1525
        %v1685 = vperm.slane %v1683, 0
        %v1687 = vpack.i.b16 %v1526, %v1526
        %v1689 = vperm.slane %v1687, 0
        %v1691 = vpack.i.b16 %v1527, %v1527
        %v1693 = vperm.slane %v1691, 0
        %v1695 = vpack.i.b16 %v1528, %v1528
        %v1697 = vperm.slane %v1695, 0
        %v1699 = vpack.i.b16 %v1529, %v1529
        %v1701 = vperm.slane %v1699, 0
        %v1703 = vpack.i.b16 %v1530, %v1530
        %v1705 = vperm.slane %v1703, 0
        %v1707 = vpack.i.b16 %v1531, %v1531
        %v1709 = vperm.slane %v1707, 0
        %v1711 = vpack.i.b16 %v1532, %v1532
        %v1713 = vperm.slane %v1711, 0
        %v1715 = vpack.i.b16 %v1533, %v1533
        %v1717 = vperm.slane %v1715, 0
        %v1719 = vpack.i.b16 %v1534, %v1534
        %v1721 = vperm.slane %v1719, 0
        %v1723 = vpack.i.b16 %v1535, %v1535
        %v1725 = vperm.slane %v1723, 0
        %v1727 = vpack.i.b16 %v1536, %v1536
        %v1729 = vperm.slane %v1727, 0
        %v1731 = vpack.i.b16 %v1537, %v1537
        %v1733 = vperm.slane %v1731, 0
        %v1735 = vpack.i.b16 %v1538, %v1538
        %v1737 = vperm.slane %v1735, 0
        %v1739 = vpack.i.b16 %v1539, %v1539
        %v1741 = vperm.slane %v1739, 0
        %v1743 = vpack.i.b16 %v1540, %v1540
        %v1745 = vperm.slane %v1743, 0
        %v1747 = vpack.i.b16 %v1541, %v1541
        %v1749 = vperm.slane %v1747, 0
        %v1751 = vpack.i.b16 %v1542, %v1542
        %v1753 = vperm.slane %v1751, 0
        %v1755 = vpack.i.b16 %v1543, %v1543
        %v1757 = vperm.slane %v1755, 0
        %v1759 = vpack.i.b16 %v1544, %v1544
        %v1761 = vperm.slane %v1759, 0
        %v1763 = vpack.i.b16 %v1545, %v1545
        %v1765 = vperm.slane %v1763, 0
        %v1767 = vpack.i.b16 %v1546, %v1546
        %v1769 = vperm.slane %v1767, 0
        %v1771 = vpack.i.b16 %v1547, %v1547
        %v1773 = vperm.slane %v1771, 0
        %v1775 = vpack.i.b16 %v1548, %v1548
        %v1777 = vperm.slane %v1775, 0
        %v1779 = vpack.i.b16 %v1549, %v1549
        %v1781 = vperm.slane %v1779, 0
        %v1783 = vpack.i.b16 %v1550, %v1550
        %v1785 = vperm.slane %v1783, 0
        %v1787 = vpack.i.b16 %v1551, %v1551
        %v1789 = vperm.slane %v1787, 0
        %v1791 = vpack.i.b16 %v1552, %v1552
        %v1793 = vperm.slane %v1791, 0
        %v1795 = vpack.i.b16 %v1553, %v1553
        %v1797 = vperm.slane %v1795, 0
        %v1799 = vpack.i.b16 %v1554, %v1554
        %v1801 = vperm.slane %v1799, 0
        %v1803 = vpack.i.b16 %v1555, %v1555
        %v1805 = vperm.slane %v1803, 0
        %v1807 = vpack.i.b16 %v1556, %v1556
        %v1809 = vperm.slane %v1807, 0
        %v1811 = vpack.i.b16 %v1557, %v1557
        %v1813 = vperm.slane %v1811, 0
        %v1814 = vunpack.c.l.bf16 %v1561
        %v1815 = vunpack.c.l.bf16 %v1565
        %v1816 = vunpack.c.l.bf16 %v1569
        %v1817 = vunpack.c.l.bf16 %v1573
        %v1818 = vunpack.c.l.bf16 %v1577
        %v1819 = vunpack.c.l.bf16 %v1581
        %v1820 = vunpack.c.l.bf16 %v1585
        %v1821 = vunpack.c.l.bf16 %v1589
        %v1822 = vunpack.c.l.bf16 %v1593
        %v1823 = vunpack.c.l.bf16 %v1597
        %v1824 = vunpack.c.l.bf16 %v1601
        %v1825 = vunpack.c.l.bf16 %v1605
        %v1826 = vunpack.c.l.bf16 %v1609
        %v1827 = vunpack.c.l.bf16 %v1613
        %v1828 = vunpack.c.l.bf16 %v1617
        %v1829 = vunpack.c.l.bf16 %v1621
        %v1830 = vunpack.c.l.bf16 %v1625
        %v1831 = vunpack.c.l.bf16 %v1629
        %v1832 = vunpack.c.l.bf16 %v1633
        %v1833 = vunpack.c.l.bf16 %v1637
        %v1834 = vunpack.c.l.bf16 %v1641
        %v1835 = vunpack.c.l.bf16 %v1645
        %v1836 = vunpack.c.l.bf16 %v1649
        %v1837 = vunpack.c.l.bf16 %v1653
        %v1838 = vunpack.c.l.bf16 %v1657
        %v1839 = vunpack.c.l.bf16 %v1661
        %v1840 = vunpack.c.l.bf16 %v1665
        %v1841 = vunpack.c.l.bf16 %v1669
        %v1842 = vunpack.c.l.bf16 %v1673
        %v1843 = vunpack.c.l.bf16 %v1677
        %v1844 = vunpack.c.l.bf16 %v1681
        %v1845 = vunpack.c.l.bf16 %v1685
        %v1846 = vunpack.c.l.bf16 %v1689
        %v1847 = vunpack.c.l.bf16 %v1693
        %v1848 = vunpack.c.l.bf16 %v1697
        %v1849 = vunpack.c.l.bf16 %v1701
        %v1850 = vunpack.c.l.bf16 %v1705
        %v1851 = vunpack.c.l.bf16 %v1709
        %v1852 = vunpack.c.l.bf16 %v1713
        %v1853 = vunpack.c.l.bf16 %v1717
        %v1854 = vunpack.c.l.bf16 %v1721
        %v1855 = vunpack.c.l.bf16 %v1725
        %v1856 = vunpack.c.l.bf16 %v1729
        %v1857 = vunpack.c.l.bf16 %v1733
        %v1858 = vunpack.c.l.bf16 %v1737
        %v1859 = vunpack.c.l.bf16 %v1741
        %v1860 = vunpack.c.l.bf16 %v1745
        %v1861 = vunpack.c.l.bf16 %v1749
        %v1862 = vunpack.c.l.bf16 %v1753
        %v1863 = vunpack.c.l.bf16 %v1757
        %v1864 = vunpack.c.l.bf16 %v1761
        %v1865 = vunpack.c.l.bf16 %v1765
        %v1866 = vunpack.c.l.bf16 %v1769
        %v1867 = vunpack.c.l.bf16 %v1773
        %v1868 = vunpack.c.l.bf16 %v1777
        %v1869 = vunpack.c.l.bf16 %v1781
        %v1870 = vunpack.c.l.bf16 %v1785
        %v1871 = vunpack.c.l.bf16 %v1789
        %v1872 = vunpack.c.l.bf16 %v1793
        %v1873 = vunpack.c.l.bf16 %v1797
        %v1874 = vunpack.c.l.bf16 %v1801
        %v1875 = vunpack.c.l.bf16 %v1805
        %v1876 = vunpack.c.l.bf16 %v1809
        %v1877 = vunpack.c.l.bf16 %v1813
        %v1878 = vunpack.c.l.bf16 %v1234
        %v1879 = vunpack.c.l.bf16 %v1235
        %v1880 = vunpack.c.l.bf16 %v1236
        %v1881 = vunpack.c.l.bf16 %v1237
        %v1882 = vunpack.c.l.bf16 %v1238
        %v1883 = vunpack.c.l.bf16 %v1239
        %v1884 = vunpack.c.l.bf16 %v1240
        %v1885 = vunpack.c.l.bf16 %v1241
        %v1886 = vmul.f32 %v1814, %v1878
        %v1887 = vmul.f32 %v1814, %v1879
        %v1888 = vmul.f32 %v1814, %v1880
        %v1889 = vmul.f32 %v1814, %v1881
        %v1890 = vmul.f32 %v1814, %v1882
        %v1891 = vmul.f32 %v1814, %v1883
        %v1892 = vmul.f32 %v1814, %v1884
        %v1893 = vmul.f32 %v1814, %v1885
        %v1894 = vmul.f32 %v1815, %v1878
        %v1895 = vmul.f32 %v1815, %v1879
        %v1896 = vmul.f32 %v1815, %v1880
        %v1897 = vmul.f32 %v1815, %v1881
        %v1898 = vmul.f32 %v1815, %v1882
        %v1899 = vmul.f32 %v1815, %v1883
        %v1900 = vmul.f32 %v1815, %v1884
        %v1901 = vmul.f32 %v1815, %v1885
        %v1902 = vmul.f32 %v1816, %v1878
        %v1903 = vmul.f32 %v1816, %v1879
        %v1904 = vmul.f32 %v1816, %v1880
        %v1905 = vmul.f32 %v1816, %v1881
        %v1906 = vmul.f32 %v1816, %v1882
        %v1907 = vmul.f32 %v1816, %v1883
        %v1908 = vmul.f32 %v1816, %v1884
        %v1909 = vmul.f32 %v1816, %v1885
        %v1910 = vmul.f32 %v1817, %v1878
        %v1911 = vmul.f32 %v1817, %v1879
        %v1912 = vmul.f32 %v1817, %v1880
        %v1913 = vmul.f32 %v1817, %v1881
        %v1914 = vmul.f32 %v1817, %v1882
        %v1915 = vmul.f32 %v1817, %v1883
        %v1916 = vmul.f32 %v1817, %v1884
        %v1917 = vmul.f32 %v1817, %v1885
        %v1918 = vmul.f32 %v1818, %v1878
        %v1919 = vmul.f32 %v1818, %v1879
        %v1920 = vmul.f32 %v1818, %v1880
        %v1921 = vmul.f32 %v1818, %v1881
        %v1922 = vmul.f32 %v1818, %v1882
        %v1923 = vmul.f32 %v1818, %v1883
        %v1924 = vmul.f32 %v1818, %v1884
        %v1925 = vmul.f32 %v1818, %v1885
        %v1926 = vmul.f32 %v1819, %v1878
        %v1927 = vmul.f32 %v1819, %v1879
        %v1928 = vmul.f32 %v1819, %v1880
        %v1929 = vmul.f32 %v1819, %v1881
        %v1930 = vmul.f32 %v1819, %v1882
        %v1931 = vmul.f32 %v1819, %v1883
        %v1932 = vmul.f32 %v1819, %v1884
        %v1933 = vmul.f32 %v1819, %v1885
        %v1934 = vmul.f32 %v1820, %v1878
        %v1935 = vmul.f32 %v1820, %v1879
        %v1936 = vmul.f32 %v1820, %v1880
        %v1937 = vmul.f32 %v1820, %v1881
        %v1938 = vmul.f32 %v1820, %v1882
        %v1939 = vmul.f32 %v1820, %v1883
        %v1940 = vmul.f32 %v1820, %v1884
        %v1941 = vmul.f32 %v1820, %v1885
        %v1942 = vmul.f32 %v1821, %v1878
        %v1943 = vmul.f32 %v1821, %v1879
        %v1944 = vmul.f32 %v1821, %v1880
        %v1945 = vmul.f32 %v1821, %v1881
        %v1946 = vmul.f32 %v1821, %v1882
        %v1947 = vmul.f32 %v1821, %v1883
        %v1948 = vmul.f32 %v1821, %v1884
        %v1949 = vmul.f32 %v1821, %v1885
        %v1950 = vmul.f32 %v1822, %v1878
        %v1951 = vmul.f32 %v1822, %v1879
        %v1952 = vmul.f32 %v1822, %v1880
        %v1953 = vmul.f32 %v1822, %v1881
        %v1954 = vmul.f32 %v1822, %v1882
        %v1955 = vmul.f32 %v1822, %v1883
        %v1956 = vmul.f32 %v1822, %v1884
        %v1957 = vmul.f32 %v1822, %v1885
        %v1958 = vmul.f32 %v1823, %v1878
        %v1959 = vmul.f32 %v1823, %v1879
        %v1960 = vmul.f32 %v1823, %v1880
        %v1961 = vmul.f32 %v1823, %v1881
        %v1962 = vmul.f32 %v1823, %v1882
        %v1963 = vmul.f32 %v1823, %v1883
        %v1964 = vmul.f32 %v1823, %v1884
        %v1965 = vmul.f32 %v1823, %v1885
        %v1966 = vmul.f32 %v1824, %v1878
        %v1967 = vmul.f32 %v1824, %v1879
        %v1968 = vmul.f32 %v1824, %v1880
        %v1969 = vmul.f32 %v1824, %v1881
        %v1970 = vmul.f32 %v1824, %v1882
        %v1971 = vmul.f32 %v1824, %v1883
        %v1972 = vmul.f32 %v1824, %v1884
        %v1973 = vmul.f32 %v1824, %v1885
        %v1974 = vmul.f32 %v1825, %v1878
        %v1975 = vmul.f32 %v1825, %v1879
        %v1976 = vmul.f32 %v1825, %v1880
        %v1977 = vmul.f32 %v1825, %v1881
        %v1978 = vmul.f32 %v1825, %v1882
        %v1979 = vmul.f32 %v1825, %v1883
        %v1980 = vmul.f32 %v1825, %v1884
        %v1981 = vmul.f32 %v1825, %v1885
        %v1982 = vmul.f32 %v1826, %v1878
        %v1983 = vmul.f32 %v1826, %v1879
        %v1984 = vmul.f32 %v1826, %v1880
        %v1985 = vmul.f32 %v1826, %v1881
        %v1986 = vmul.f32 %v1826, %v1882
        %v1987 = vmul.f32 %v1826, %v1883
        %v1988 = vmul.f32 %v1826, %v1884
        %v1989 = vmul.f32 %v1826, %v1885
        %v1990 = vmul.f32 %v1827, %v1878
        %v1991 = vmul.f32 %v1827, %v1879
        %v1992 = vmul.f32 %v1827, %v1880
        %v1993 = vmul.f32 %v1827, %v1881
        %v1994 = vmul.f32 %v1827, %v1882
        %v1995 = vmul.f32 %v1827, %v1883
        %v1996 = vmul.f32 %v1827, %v1884
        %v1997 = vmul.f32 %v1827, %v1885
        %v1998 = vmul.f32 %v1828, %v1878
        %v1999 = vmul.f32 %v1828, %v1879
        %v2000 = vmul.f32 %v1828, %v1880
        %v2001 = vmul.f32 %v1828, %v1881
        %v2002 = vmul.f32 %v1828, %v1882
        %v2003 = vmul.f32 %v1828, %v1883
        %v2004 = vmul.f32 %v1828, %v1884
        %v2005 = vmul.f32 %v1828, %v1885
        %v2006 = vmul.f32 %v1829, %v1878
        %v2007 = vmul.f32 %v1829, %v1879
        %v2008 = vmul.f32 %v1829, %v1880
        %v2009 = vmul.f32 %v1829, %v1881
        %v2010 = vmul.f32 %v1829, %v1882
        %v2011 = vmul.f32 %v1829, %v1883
        %v2012 = vmul.f32 %v1829, %v1884
        %v2013 = vmul.f32 %v1829, %v1885
        %v2014 = vmul.f32 %v1830, %v1878
        %v2015 = vmul.f32 %v1830, %v1879
        %v2016 = vmul.f32 %v1830, %v1880
        %v2017 = vmul.f32 %v1830, %v1881
        %v2018 = vmul.f32 %v1830, %v1882
        %v2019 = vmul.f32 %v1830, %v1883
        %v2020 = vmul.f32 %v1830, %v1884
        %v2021 = vmul.f32 %v1830, %v1885
        %v2022 = vmul.f32 %v1831, %v1878
        %v2023 = vmul.f32 %v1831, %v1879
        %v2024 = vmul.f32 %v1831, %v1880
        %v2025 = vmul.f32 %v1831, %v1881
        %v2026 = vmul.f32 %v1831, %v1882
        %v2027 = vmul.f32 %v1831, %v1883
        %v2028 = vmul.f32 %v1831, %v1884
        %v2029 = vmul.f32 %v1831, %v1885
        %v2030 = vmul.f32 %v1832, %v1878
        %v2031 = vmul.f32 %v1832, %v1879
        %v2032 = vmul.f32 %v1832, %v1880
        %v2033 = vmul.f32 %v1832, %v1881
        %v2034 = vmul.f32 %v1832, %v1882
        %v2035 = vmul.f32 %v1832, %v1883
        %v2036 = vmul.f32 %v1832, %v1884
        %v2037 = vmul.f32 %v1832, %v1885
        %v2038 = vmul.f32 %v1833, %v1878
        %v2039 = vmul.f32 %v1833, %v1879
        %v2040 = vmul.f32 %v1833, %v1880
        %v2041 = vmul.f32 %v1833, %v1881
        %v2042 = vmul.f32 %v1833, %v1882
        %v2043 = vmul.f32 %v1833, %v1883
        %v2044 = vmul.f32 %v1833, %v1884
        %v2045 = vmul.f32 %v1833, %v1885
        %v2046 = vmul.f32 %v1834, %v1878
        %v2047 = vmul.f32 %v1834, %v1879
        %v2048 = vmul.f32 %v1834, %v1880
        %v2049 = vmul.f32 %v1834, %v1881
        %v2050 = vmul.f32 %v1834, %v1882
        %v2051 = vmul.f32 %v1834, %v1883
        %v2052 = vmul.f32 %v1834, %v1884
        %v2053 = vmul.f32 %v1834, %v1885
        %v2054 = vmul.f32 %v1835, %v1878
        %v2055 = vmul.f32 %v1835, %v1879
        %v2056 = vmul.f32 %v1835, %v1880
        %v2057 = vmul.f32 %v1835, %v1881
        %v2058 = vmul.f32 %v1835, %v1882
        %v2059 = vmul.f32 %v1835, %v1883
        %v2060 = vmul.f32 %v1835, %v1884
        %v2061 = vmul.f32 %v1835, %v1885
        %v2062 = vmul.f32 %v1836, %v1878
        %v2063 = vmul.f32 %v1836, %v1879
        %v2064 = vmul.f32 %v1836, %v1880
        %v2065 = vmul.f32 %v1836, %v1881
        %v2066 = vmul.f32 %v1836, %v1882
        %v2067 = vmul.f32 %v1836, %v1883
        %v2068 = vmul.f32 %v1836, %v1884
        %v2069 = vmul.f32 %v1836, %v1885
        %v2070 = vmul.f32 %v1837, %v1878
        %v2071 = vmul.f32 %v1837, %v1879
        %v2072 = vmul.f32 %v1837, %v1880
        %v2073 = vmul.f32 %v1837, %v1881
        %v2074 = vmul.f32 %v1837, %v1882
        %v2075 = vmul.f32 %v1837, %v1883
        %v2076 = vmul.f32 %v1837, %v1884
        %v2077 = vmul.f32 %v1837, %v1885
        %v2078 = vmul.f32 %v1838, %v1878
        %v2079 = vmul.f32 %v1838, %v1879
        %v2080 = vmul.f32 %v1838, %v1880
        %v2081 = vmul.f32 %v1838, %v1881
        %v2082 = vmul.f32 %v1838, %v1882
        %v2083 = vmul.f32 %v1838, %v1883
        %v2084 = vmul.f32 %v1838, %v1884
        %v2085 = vmul.f32 %v1838, %v1885
        %v2086 = vmul.f32 %v1839, %v1878
        %v2087 = vmul.f32 %v1839, %v1879
        %v2088 = vmul.f32 %v1839, %v1880
        %v2089 = vmul.f32 %v1839, %v1881
        %v2090 = vmul.f32 %v1839, %v1882
        %v2091 = vmul.f32 %v1839, %v1883
        %v2092 = vmul.f32 %v1839, %v1884
        %v2093 = vmul.f32 %v1839, %v1885
        %v2094 = vmul.f32 %v1840, %v1878
        %v2095 = vmul.f32 %v1840, %v1879
        %v2096 = vmul.f32 %v1840, %v1880
        %v2097 = vmul.f32 %v1840, %v1881
        %v2098 = vmul.f32 %v1840, %v1882
        %v2099 = vmul.f32 %v1840, %v1883
        %v2100 = vmul.f32 %v1840, %v1884
        %v2101 = vmul.f32 %v1840, %v1885
        %v2102 = vmul.f32 %v1841, %v1878
        %v2103 = vmul.f32 %v1841, %v1879
        %v2104 = vmul.f32 %v1841, %v1880
        %v2105 = vmul.f32 %v1841, %v1881
        %v2106 = vmul.f32 %v1841, %v1882
        %v2107 = vmul.f32 %v1841, %v1883
        %v2108 = vmul.f32 %v1841, %v1884
        %v2109 = vmul.f32 %v1841, %v1885
        %v2110 = vmul.f32 %v1842, %v1878
        %v2111 = vmul.f32 %v1842, %v1879
        %v2112 = vmul.f32 %v1842, %v1880
        %v2113 = vmul.f32 %v1842, %v1881
        %v2114 = vmul.f32 %v1842, %v1882
        %v2115 = vmul.f32 %v1842, %v1883
        %v2116 = vmul.f32 %v1842, %v1884
        %v2117 = vmul.f32 %v1842, %v1885
        %v2118 = vmul.f32 %v1843, %v1878
        %v2119 = vmul.f32 %v1843, %v1879
        %v2120 = vmul.f32 %v1843, %v1880
        %v2121 = vmul.f32 %v1843, %v1881
        %v2122 = vmul.f32 %v1843, %v1882
        %v2123 = vmul.f32 %v1843, %v1883
        %v2124 = vmul.f32 %v1843, %v1884
        %v2125 = vmul.f32 %v1843, %v1885
        %v2126 = vmul.f32 %v1844, %v1878
        %v2127 = vmul.f32 %v1844, %v1879
        %v2128 = vmul.f32 %v1844, %v1880
        %v2129 = vmul.f32 %v1844, %v1881
        %v2130 = vmul.f32 %v1844, %v1882
        %v2131 = vmul.f32 %v1844, %v1883
        %v2132 = vmul.f32 %v1844, %v1884
        %v2133 = vmul.f32 %v1844, %v1885
        %v2134 = vmul.f32 %v1845, %v1878
        %v2135 = vmul.f32 %v1845, %v1879
        %v2136 = vmul.f32 %v1845, %v1880
        %v2137 = vmul.f32 %v1845, %v1881
        %v2138 = vmul.f32 %v1845, %v1882
        %v2139 = vmul.f32 %v1845, %v1883
        %v2140 = vmul.f32 %v1845, %v1884
        %v2141 = vmul.f32 %v1845, %v1885
        %v2142 = vmul.f32 %v1846, %v1878
        %v2143 = vmul.f32 %v1846, %v1879
        %v2144 = vmul.f32 %v1846, %v1880
        %v2145 = vmul.f32 %v1846, %v1881
        %v2146 = vmul.f32 %v1846, %v1882
        %v2147 = vmul.f32 %v1846, %v1883
        %v2148 = vmul.f32 %v1846, %v1884
        %v2149 = vmul.f32 %v1846, %v1885
        %v2150 = vmul.f32 %v1847, %v1878
        %v2151 = vmul.f32 %v1847, %v1879
        %v2152 = vmul.f32 %v1847, %v1880
        %v2153 = vmul.f32 %v1847, %v1881
        %v2154 = vmul.f32 %v1847, %v1882
        %v2155 = vmul.f32 %v1847, %v1883
        %v2156 = vmul.f32 %v1847, %v1884
        %v2157 = vmul.f32 %v1847, %v1885
        %v2158 = vmul.f32 %v1848, %v1878
        %v2159 = vmul.f32 %v1848, %v1879
        %v2160 = vmul.f32 %v1848, %v1880
        %v2161 = vmul.f32 %v1848, %v1881
        %v2162 = vmul.f32 %v1848, %v1882
        %v2163 = vmul.f32 %v1848, %v1883
        %v2164 = vmul.f32 %v1848, %v1884
        %v2165 = vmul.f32 %v1848, %v1885
        %v2166 = vmul.f32 %v1849, %v1878
        %v2167 = vmul.f32 %v1849, %v1879
        %v2168 = vmul.f32 %v1849, %v1880
        %v2169 = vmul.f32 %v1849, %v1881
        %v2170 = vmul.f32 %v1849, %v1882
        %v2171 = vmul.f32 %v1849, %v1883
        %v2172 = vmul.f32 %v1849, %v1884
        %v2173 = vmul.f32 %v1849, %v1885
        %v2174 = vmul.f32 %v1850, %v1878
        %v2175 = vmul.f32 %v1850, %v1879
        %v2176 = vmul.f32 %v1850, %v1880
        %v2177 = vmul.f32 %v1850, %v1881
        %v2178 = vmul.f32 %v1850, %v1882
        %v2179 = vmul.f32 %v1850, %v1883
        %v2180 = vmul.f32 %v1850, %v1884
        %v2181 = vmul.f32 %v1850, %v1885
        %v2182 = vmul.f32 %v1851, %v1878
        %v2183 = vmul.f32 %v1851, %v1879
        %v2184 = vmul.f32 %v1851, %v1880
        %v2185 = vmul.f32 %v1851, %v1881
        %v2186 = vmul.f32 %v1851, %v1882
        %v2187 = vmul.f32 %v1851, %v1883
        %v2188 = vmul.f32 %v1851, %v1884
        %v2189 = vmul.f32 %v1851, %v1885
        %v2190 = vmul.f32 %v1852, %v1878
        %v2191 = vmul.f32 %v1852, %v1879
        %v2192 = vmul.f32 %v1852, %v1880
        %v2193 = vmul.f32 %v1852, %v1881
        %v2194 = vmul.f32 %v1852, %v1882
        %v2195 = vmul.f32 %v1852, %v1883
        %v2196 = vmul.f32 %v1852, %v1884
        %v2197 = vmul.f32 %v1852, %v1885
        %v2198 = vmul.f32 %v1853, %v1878
        %v2199 = vmul.f32 %v1853, %v1879
        %v2200 = vmul.f32 %v1853, %v1880
        %v2201 = vmul.f32 %v1853, %v1881
        %v2202 = vmul.f32 %v1853, %v1882
        %v2203 = vmul.f32 %v1853, %v1883
        %v2204 = vmul.f32 %v1853, %v1884
        %v2205 = vmul.f32 %v1853, %v1885
        %v2206 = vmul.f32 %v1854, %v1878
        %v2207 = vmul.f32 %v1854, %v1879
        %v2208 = vmul.f32 %v1854, %v1880
        %v2209 = vmul.f32 %v1854, %v1881
        %v2210 = vmul.f32 %v1854, %v1882
        %v2211 = vmul.f32 %v1854, %v1883
        %v2212 = vmul.f32 %v1854, %v1884
        %v2213 = vmul.f32 %v1854, %v1885
        %v2214 = vmul.f32 %v1855, %v1878
        %v2215 = vmul.f32 %v1855, %v1879
        %v2216 = vmul.f32 %v1855, %v1880
        %v2217 = vmul.f32 %v1855, %v1881
        %v2218 = vmul.f32 %v1855, %v1882
        %v2219 = vmul.f32 %v1855, %v1883
        %v2220 = vmul.f32 %v1855, %v1884
        %v2221 = vmul.f32 %v1855, %v1885
        %v2222 = vmul.f32 %v1856, %v1878
        %v2223 = vmul.f32 %v1856, %v1879
        %v2224 = vmul.f32 %v1856, %v1880
        %v2225 = vmul.f32 %v1856, %v1881
        %v2226 = vmul.f32 %v1856, %v1882
        %v2227 = vmul.f32 %v1856, %v1883
        %v2228 = vmul.f32 %v1856, %v1884
        %v2229 = vmul.f32 %v1856, %v1885
        %v2230 = vmul.f32 %v1857, %v1878
        %v2231 = vmul.f32 %v1857, %v1879
        %v2232 = vmul.f32 %v1857, %v1880
        %v2233 = vmul.f32 %v1857, %v1881
        %v2234 = vmul.f32 %v1857, %v1882
        %v2235 = vmul.f32 %v1857, %v1883
        %v2236 = vmul.f32 %v1857, %v1884
        %v2237 = vmul.f32 %v1857, %v1885
        %v2238 = vmul.f32 %v1858, %v1878
        %v2239 = vmul.f32 %v1858, %v1879
        %v2240 = vmul.f32 %v1858, %v1880
        %v2241 = vmul.f32 %v1858, %v1881
        %v2242 = vmul.f32 %v1858, %v1882
        %v2243 = vmul.f32 %v1858, %v1883
        %v2244 = vmul.f32 %v1858, %v1884
        %v2245 = vmul.f32 %v1858, %v1885
        %v2246 = vmul.f32 %v1859, %v1878
        %v2247 = vmul.f32 %v1859, %v1879
        %v2248 = vmul.f32 %v1859, %v1880
        %v2249 = vmul.f32 %v1859, %v1881
        %v2250 = vmul.f32 %v1859, %v1882
        %v2251 = vmul.f32 %v1859, %v1883
        %v2252 = vmul.f32 %v1859, %v1884
        %v2253 = vmul.f32 %v1859, %v1885
        %v2254 = vmul.f32 %v1860, %v1878
        %v2255 = vmul.f32 %v1860, %v1879
        %v2256 = vmul.f32 %v1860, %v1880
        %v2257 = vmul.f32 %v1860, %v1881
        %v2258 = vmul.f32 %v1860, %v1882
        %v2259 = vmul.f32 %v1860, %v1883
        %v2260 = vmul.f32 %v1860, %v1884
        %v2261 = vmul.f32 %v1860, %v1885
        %v2262 = vmul.f32 %v1861, %v1878
        %v2263 = vmul.f32 %v1861, %v1879
        %v2264 = vmul.f32 %v1861, %v1880
        %v2265 = vmul.f32 %v1861, %v1881
        %v2266 = vmul.f32 %v1861, %v1882
        %v2267 = vmul.f32 %v1861, %v1883
        %v2268 = vmul.f32 %v1861, %v1884
        %v2269 = vmul.f32 %v1861, %v1885
        %v2270 = vmul.f32 %v1862, %v1878
        %v2271 = vmul.f32 %v1862, %v1879
        %v2272 = vmul.f32 %v1862, %v1880
        %v2273 = vmul.f32 %v1862, %v1881
        %v2274 = vmul.f32 %v1862, %v1882
        %v2275 = vmul.f32 %v1862, %v1883
        %v2276 = vmul.f32 %v1862, %v1884
        %v2277 = vmul.f32 %v1862, %v1885
        %v2278 = vmul.f32 %v1863, %v1878
        %v2279 = vmul.f32 %v1863, %v1879
        %v2280 = vmul.f32 %v1863, %v1880
        %v2281 = vmul.f32 %v1863, %v1881
        %v2282 = vmul.f32 %v1863, %v1882
        %v2283 = vmul.f32 %v1863, %v1883
        %v2284 = vmul.f32 %v1863, %v1884
        %v2285 = vmul.f32 %v1863, %v1885
        %v2286 = vmul.f32 %v1864, %v1878
        %v2287 = vmul.f32 %v1864, %v1879
        %v2288 = vmul.f32 %v1864, %v1880
        %v2289 = vmul.f32 %v1864, %v1881
        %v2290 = vmul.f32 %v1864, %v1882
        %v2291 = vmul.f32 %v1864, %v1883
        %v2292 = vmul.f32 %v1864, %v1884
        %v2293 = vmul.f32 %v1864, %v1885
        %v2294 = vmul.f32 %v1865, %v1878
        %v2295 = vmul.f32 %v1865, %v1879
        %v2296 = vmul.f32 %v1865, %v1880
        %v2297 = vmul.f32 %v1865, %v1881
        %v2298 = vmul.f32 %v1865, %v1882
        %v2299 = vmul.f32 %v1865, %v1883
        %v2300 = vmul.f32 %v1865, %v1884
        %v2301 = vmul.f32 %v1865, %v1885
        %v2302 = vmul.f32 %v1866, %v1878
        %v2303 = vmul.f32 %v1866, %v1879
        %v2304 = vmul.f32 %v1866, %v1880
        %v2305 = vmul.f32 %v1866, %v1881
        %v2306 = vmul.f32 %v1866, %v1882
        %v2307 = vmul.f32 %v1866, %v1883
        %v2308 = vmul.f32 %v1866, %v1884
        %v2309 = vmul.f32 %v1866, %v1885
        %v2310 = vmul.f32 %v1867, %v1878
        %v2311 = vmul.f32 %v1867, %v1879
        %v2312 = vmul.f32 %v1867, %v1880
        %v2313 = vmul.f32 %v1867, %v1881
        %v2314 = vmul.f32 %v1867, %v1882
        %v2315 = vmul.f32 %v1867, %v1883
        %v2316 = vmul.f32 %v1867, %v1884
        %v2317 = vmul.f32 %v1867, %v1885
        %v2318 = vmul.f32 %v1868, %v1878
        %v2319 = vmul.f32 %v1868, %v1879
        %v2320 = vmul.f32 %v1868, %v1880
        %v2321 = vmul.f32 %v1868, %v1881
        %v2322 = vmul.f32 %v1868, %v1882
        %v2323 = vmul.f32 %v1868, %v1883
        %v2324 = vmul.f32 %v1868, %v1884
        %v2325 = vmul.f32 %v1868, %v1885
        %v2326 = vmul.f32 %v1869, %v1878
        %v2327 = vmul.f32 %v1869, %v1879
        %v2328 = vmul.f32 %v1869, %v1880
        %v2329 = vmul.f32 %v1869, %v1881
        %v2330 = vmul.f32 %v1869, %v1882
        %v2331 = vmul.f32 %v1869, %v1883
        %v2332 = vmul.f32 %v1869, %v1884
        %v2333 = vmul.f32 %v1869, %v1885
        %v2334 = vmul.f32 %v1870, %v1878
        %v2335 = vmul.f32 %v1870, %v1879
        %v2336 = vmul.f32 %v1870, %v1880
        %v2337 = vmul.f32 %v1870, %v1881
        %v2338 = vmul.f32 %v1870, %v1882
        %v2339 = vmul.f32 %v1870, %v1883
        %v2340 = vmul.f32 %v1870, %v1884
        %v2341 = vmul.f32 %v1870, %v1885
        %v2342 = vmul.f32 %v1871, %v1878
        %v2343 = vmul.f32 %v1871, %v1879
        %v2344 = vmul.f32 %v1871, %v1880
        %v2345 = vmul.f32 %v1871, %v1881
        %v2346 = vmul.f32 %v1871, %v1882
        %v2347 = vmul.f32 %v1871, %v1883
        %v2348 = vmul.f32 %v1871, %v1884
        %v2349 = vmul.f32 %v1871, %v1885
        %v2350 = vmul.f32 %v1872, %v1878
        %v2351 = vmul.f32 %v1872, %v1879
        %v2352 = vmul.f32 %v1872, %v1880
        %v2353 = vmul.f32 %v1872, %v1881
        %v2354 = vmul.f32 %v1872, %v1882
        %v2355 = vmul.f32 %v1872, %v1883
        %v2356 = vmul.f32 %v1872, %v1884
        %v2357 = vmul.f32 %v1872, %v1885
        %v2358 = vmul.f32 %v1873, %v1878
        %v2359 = vmul.f32 %v1873, %v1879
        %v2360 = vmul.f32 %v1873, %v1880
        %v2361 = vmul.f32 %v1873, %v1881
        %v2362 = vmul.f32 %v1873, %v1882
        %v2363 = vmul.f32 %v1873, %v1883
        %v2364 = vmul.f32 %v1873, %v1884
        %v2365 = vmul.f32 %v1873, %v1885
        %v2366 = vmul.f32 %v1874, %v1878
        %v2367 = vmul.f32 %v1874, %v1879
        %v2368 = vmul.f32 %v1874, %v1880
        %v2369 = vmul.f32 %v1874, %v1881
        %v2370 = vmul.f32 %v1874, %v1882
        %v2371 = vmul.f32 %v1874, %v1883
        %v2372 = vmul.f32 %v1874, %v1884
        %v2373 = vmul.f32 %v1874, %v1885
        %v2374 = vmul.f32 %v1875, %v1878
        %v2375 = vmul.f32 %v1875, %v1879
        %v2376 = vmul.f32 %v1875, %v1880
        %v2377 = vmul.f32 %v1875, %v1881
        %v2378 = vmul.f32 %v1875, %v1882
        %v2379 = vmul.f32 %v1875, %v1883
        %v2380 = vmul.f32 %v1875, %v1884
        %v2381 = vmul.f32 %v1875, %v1885
        %v2382 = vmul.f32 %v1876, %v1878
        %v2383 = vmul.f32 %v1876, %v1879
        %v2384 = vmul.f32 %v1876, %v1880
        %v2385 = vmul.f32 %v1876, %v1881
        %v2386 = vmul.f32 %v1876, %v1882
        %v2387 = vmul.f32 %v1876, %v1883
        %v2388 = vmul.f32 %v1876, %v1884
        %v2389 = vmul.f32 %v1876, %v1885
        %v2390 = vmul.f32 %v1877, %v1878
        %v2391 = vmul.f32 %v1877, %v1879
        %v2392 = vmul.f32 %v1877, %v1880
        %v2393 = vmul.f32 %v1877, %v1881
        %v2394 = vmul.f32 %v1877, %v1882
        %v2395 = vmul.f32 %v1877, %v1883
        %v2396 = vmul.f32 %v1877, %v1884
        %v2397 = vmul.f32 %v1877, %v1885
        %v2398 = vpack.c.bf16 %v1886, %v1886
        %v2399 = vpack.c.bf16 %v1887, %v1887
        %v2400 = vpack.c.bf16 %v1888, %v1888
        %v2401 = vpack.c.bf16 %v1889, %v1889
        %v2402 = vpack.c.bf16 %v1890, %v1890
        %v2403 = vpack.c.bf16 %v1891, %v1891
        %v2404 = vpack.c.bf16 %v1892, %v1892
        %v2405 = vpack.c.bf16 %v1893, %v1893
        %v2406 = vpack.c.bf16 %v1894, %v1894
        %v2407 = vpack.c.bf16 %v1895, %v1895
        %v2408 = vpack.c.bf16 %v1896, %v1896
        %v2409 = vpack.c.bf16 %v1897, %v1897
        %v2410 = vpack.c.bf16 %v1898, %v1898
        %v2411 = vpack.c.bf16 %v1899, %v1899
        %v2412 = vpack.c.bf16 %v1900, %v1900
        %v2413 = vpack.c.bf16 %v1901, %v1901
        %v2414 = vpack.c.bf16 %v1902, %v1902
        %v2415 = vpack.c.bf16 %v1903, %v1903
        %v2416 = vpack.c.bf16 %v1904, %v1904
        %v2417 = vpack.c.bf16 %v1905, %v1905
        %v2418 = vpack.c.bf16 %v1906, %v1906
        %v2419 = vpack.c.bf16 %v1907, %v1907
        %v2420 = vpack.c.bf16 %v1908, %v1908
        %v2421 = vpack.c.bf16 %v1909, %v1909
        %v2422 = vpack.c.bf16 %v1910, %v1910
        %v2423 = vpack.c.bf16 %v1911, %v1911
        %v2424 = vpack.c.bf16 %v1912, %v1912
        %v2425 = vpack.c.bf16 %v1913, %v1913
        %v2426 = vpack.c.bf16 %v1914, %v1914
        %v2427 = vpack.c.bf16 %v1915, %v1915
        %v2428 = vpack.c.bf16 %v1916, %v1916
        %v2429 = vpack.c.bf16 %v1917, %v1917
        %v2430 = vpack.c.bf16 %v1918, %v1918
        %v2431 = vpack.c.bf16 %v1919, %v1919
        %v2432 = vpack.c.bf16 %v1920, %v1920
        %v2433 = vpack.c.bf16 %v1921, %v1921
        %v2434 = vpack.c.bf16 %v1922, %v1922
        %v2435 = vpack.c.bf16 %v1923, %v1923
        %v2436 = vpack.c.bf16 %v1924, %v1924
        %v2437 = vpack.c.bf16 %v1925, %v1925
        %v2438 = vpack.c.bf16 %v1926, %v1926
        %v2439 = vpack.c.bf16 %v1927, %v1927
        %v2440 = vpack.c.bf16 %v1928, %v1928
        %v2441 = vpack.c.bf16 %v1929, %v1929
        %v2442 = vpack.c.bf16 %v1930, %v1930
        %v2443 = vpack.c.bf16 %v1931, %v1931
        %v2444 = vpack.c.bf16 %v1932, %v1932
        %v2445 = vpack.c.bf16 %v1933, %v1933
        %v2446 = vpack.c.bf16 %v1934, %v1934
        %v2447 = vpack.c.bf16 %v1935, %v1935
        %v2448 = vpack.c.bf16 %v1936, %v1936
        %v2449 = vpack.c.bf16 %v1937, %v1937
        %v2450 = vpack.c.bf16 %v1938, %v1938
        %v2451 = vpack.c.bf16 %v1939, %v1939
        %v2452 = vpack.c.bf16 %v1940, %v1940
        %v2453 = vpack.c.bf16 %v1941, %v1941
        %v2454 = vpack.c.bf16 %v1942, %v1942
        %v2455 = vpack.c.bf16 %v1943, %v1943
        %v2456 = vpack.c.bf16 %v1944, %v1944
        %v2457 = vpack.c.bf16 %v1945, %v1945
        %v2458 = vpack.c.bf16 %v1946, %v1946
        %v2459 = vpack.c.bf16 %v1947, %v1947
        %v2460 = vpack.c.bf16 %v1948, %v1948
        %v2461 = vpack.c.bf16 %v1949, %v1949
        %v2462 = vpack.c.bf16 %v1950, %v1950
        %v2463 = vpack.c.bf16 %v1951, %v1951
        %v2464 = vpack.c.bf16 %v1952, %v1952
        %v2465 = vpack.c.bf16 %v1953, %v1953
        %v2466 = vpack.c.bf16 %v1954, %v1954
        %v2467 = vpack.c.bf16 %v1955, %v1955
        %v2468 = vpack.c.bf16 %v1956, %v1956
        %v2469 = vpack.c.bf16 %v1957, %v1957
        %v2470 = vpack.c.bf16 %v1958, %v1958
        %v2471 = vpack.c.bf16 %v1959, %v1959
        %v2472 = vpack.c.bf16 %v1960, %v1960
        %v2473 = vpack.c.bf16 %v1961, %v1961
        %v2474 = vpack.c.bf16 %v1962, %v1962
        %v2475 = vpack.c.bf16 %v1963, %v1963
        %v2476 = vpack.c.bf16 %v1964, %v1964
        %v2477 = vpack.c.bf16 %v1965, %v1965
        %v2478 = vpack.c.bf16 %v1966, %v1966
        %v2479 = vpack.c.bf16 %v1967, %v1967
        %v2480 = vpack.c.bf16 %v1968, %v1968
        %v2481 = vpack.c.bf16 %v1969, %v1969
        %v2482 = vpack.c.bf16 %v1970, %v1970
        %v2483 = vpack.c.bf16 %v1971, %v1971
        %v2484 = vpack.c.bf16 %v1972, %v1972
        %v2485 = vpack.c.bf16 %v1973, %v1973
        %v2486 = vpack.c.bf16 %v1974, %v1974
        %v2487 = vpack.c.bf16 %v1975, %v1975
        %v2488 = vpack.c.bf16 %v1976, %v1976
        %v2489 = vpack.c.bf16 %v1977, %v1977
        %v2490 = vpack.c.bf16 %v1978, %v1978
        %v2491 = vpack.c.bf16 %v1979, %v1979
        %v2492 = vpack.c.bf16 %v1980, %v1980
        %v2493 = vpack.c.bf16 %v1981, %v1981
        %v2494 = vpack.c.bf16 %v1982, %v1982
        %v2495 = vpack.c.bf16 %v1983, %v1983
        %v2496 = vpack.c.bf16 %v1984, %v1984
        %v2497 = vpack.c.bf16 %v1985, %v1985
        %v2498 = vpack.c.bf16 %v1986, %v1986
        %v2499 = vpack.c.bf16 %v1987, %v1987
        %v2500 = vpack.c.bf16 %v1988, %v1988
        %v2501 = vpack.c.bf16 %v1989, %v1989
        %v2502 = vpack.c.bf16 %v1990, %v1990
        %v2503 = vpack.c.bf16 %v1991, %v1991
        %v2504 = vpack.c.bf16 %v1992, %v1992
        %v2505 = vpack.c.bf16 %v1993, %v1993
        %v2506 = vpack.c.bf16 %v1994, %v1994
        %v2507 = vpack.c.bf16 %v1995, %v1995
        %v2508 = vpack.c.bf16 %v1996, %v1996
        %v2509 = vpack.c.bf16 %v1997, %v1997
        %v2510 = vpack.c.bf16 %v1998, %v1998
        %v2511 = vpack.c.bf16 %v1999, %v1999
        %v2512 = vpack.c.bf16 %v2000, %v2000
        %v2513 = vpack.c.bf16 %v2001, %v2001
        %v2514 = vpack.c.bf16 %v2002, %v2002
        %v2515 = vpack.c.bf16 %v2003, %v2003
        %v2516 = vpack.c.bf16 %v2004, %v2004
        %v2517 = vpack.c.bf16 %v2005, %v2005
        %v2518 = vpack.c.bf16 %v2006, %v2006
        %v2519 = vpack.c.bf16 %v2007, %v2007
        %v2520 = vpack.c.bf16 %v2008, %v2008
        %v2521 = vpack.c.bf16 %v2009, %v2009
        %v2522 = vpack.c.bf16 %v2010, %v2010
        %v2523 = vpack.c.bf16 %v2011, %v2011
        %v2524 = vpack.c.bf16 %v2012, %v2012
        %v2525 = vpack.c.bf16 %v2013, %v2013
        %v2526 = vpack.c.bf16 %v2014, %v2014
        %v2527 = vpack.c.bf16 %v2015, %v2015
        %v2528 = vpack.c.bf16 %v2016, %v2016
        %v2529 = vpack.c.bf16 %v2017, %v2017
        %v2530 = vpack.c.bf16 %v2018, %v2018
        %v2531 = vpack.c.bf16 %v2019, %v2019
        %v2532 = vpack.c.bf16 %v2020, %v2020
        %v2533 = vpack.c.bf16 %v2021, %v2021
        %v2534 = vpack.c.bf16 %v2022, %v2022
        %v2535 = vpack.c.bf16 %v2023, %v2023
        %v2536 = vpack.c.bf16 %v2024, %v2024
        %v2537 = vpack.c.bf16 %v2025, %v2025
        %v2538 = vpack.c.bf16 %v2026, %v2026
        %v2539 = vpack.c.bf16 %v2027, %v2027
        %v2540 = vpack.c.bf16 %v2028, %v2028
        %v2541 = vpack.c.bf16 %v2029, %v2029
        %v2542 = vpack.c.bf16 %v2030, %v2030
        %v2543 = vpack.c.bf16 %v2031, %v2031
        %v2544 = vpack.c.bf16 %v2032, %v2032
        %v2545 = vpack.c.bf16 %v2033, %v2033
        %v2546 = vpack.c.bf16 %v2034, %v2034
        %v2547 = vpack.c.bf16 %v2035, %v2035
        %v2548 = vpack.c.bf16 %v2036, %v2036
        %v2549 = vpack.c.bf16 %v2037, %v2037
        %v2550 = vpack.c.bf16 %v2038, %v2038
        %v2551 = vpack.c.bf16 %v2039, %v2039
        %v2552 = vpack.c.bf16 %v2040, %v2040
        %v2553 = vpack.c.bf16 %v2041, %v2041
        %v2554 = vpack.c.bf16 %v2042, %v2042
        %v2555 = vpack.c.bf16 %v2043, %v2043
        %v2556 = vpack.c.bf16 %v2044, %v2044
        %v2557 = vpack.c.bf16 %v2045, %v2045
        %v2558 = vpack.c.bf16 %v2046, %v2046
        %v2559 = vpack.c.bf16 %v2047, %v2047
        %v2560 = vpack.c.bf16 %v2048, %v2048
        %v2561 = vpack.c.bf16 %v2049, %v2049
        %v2562 = vpack.c.bf16 %v2050, %v2050
        %v2563 = vpack.c.bf16 %v2051, %v2051
        %v2564 = vpack.c.bf16 %v2052, %v2052
        %v2565 = vpack.c.bf16 %v2053, %v2053
        %v2566 = vpack.c.bf16 %v2054, %v2054
        %v2567 = vpack.c.bf16 %v2055, %v2055
        %v2568 = vpack.c.bf16 %v2056, %v2056
        %v2569 = vpack.c.bf16 %v2057, %v2057
        %v2570 = vpack.c.bf16 %v2058, %v2058
        %v2571 = vpack.c.bf16 %v2059, %v2059
        %v2572 = vpack.c.bf16 %v2060, %v2060
        %v2573 = vpack.c.bf16 %v2061, %v2061
        %v2574 = vpack.c.bf16 %v2062, %v2062
        %v2575 = vpack.c.bf16 %v2063, %v2063
        %v2576 = vpack.c.bf16 %v2064, %v2064
        %v2577 = vpack.c.bf16 %v2065, %v2065
        %v2578 = vpack.c.bf16 %v2066, %v2066
        %v2579 = vpack.c.bf16 %v2067, %v2067
        %v2580 = vpack.c.bf16 %v2068, %v2068
        %v2581 = vpack.c.bf16 %v2069, %v2069
        %v2582 = vpack.c.bf16 %v2070, %v2070
        %v2583 = vpack.c.bf16 %v2071, %v2071
        %v2584 = vpack.c.bf16 %v2072, %v2072
        %v2585 = vpack.c.bf16 %v2073, %v2073
        %v2586 = vpack.c.bf16 %v2074, %v2074
        %v2587 = vpack.c.bf16 %v2075, %v2075
        %v2588 = vpack.c.bf16 %v2076, %v2076
        %v2589 = vpack.c.bf16 %v2077, %v2077
        %v2590 = vpack.c.bf16 %v2078, %v2078
        %v2591 = vpack.c.bf16 %v2079, %v2079
        %v2592 = vpack.c.bf16 %v2080, %v2080
        %v2593 = vpack.c.bf16 %v2081, %v2081
        %v2594 = vpack.c.bf16 %v2082, %v2082
        %v2595 = vpack.c.bf16 %v2083, %v2083
        %v2596 = vpack.c.bf16 %v2084, %v2084
        %v2597 = vpack.c.bf16 %v2085, %v2085
        %v2598 = vpack.c.bf16 %v2086, %v2086
        %v2599 = vpack.c.bf16 %v2087, %v2087
        %v2600 = vpack.c.bf16 %v2088, %v2088
        %v2601 = vpack.c.bf16 %v2089, %v2089
        %v2602 = vpack.c.bf16 %v2090, %v2090
        %v2603 = vpack.c.bf16 %v2091, %v2091
        %v2604 = vpack.c.bf16 %v2092, %v2092
        %v2605 = vpack.c.bf16 %v2093, %v2093
        %v2606 = vpack.c.bf16 %v2094, %v2094
        %v2607 = vpack.c.bf16 %v2095, %v2095
        %v2608 = vpack.c.bf16 %v2096, %v2096
        %v2609 = vpack.c.bf16 %v2097, %v2097
        %v2610 = vpack.c.bf16 %v2098, %v2098
        %v2611 = vpack.c.bf16 %v2099, %v2099
        %v2612 = vpack.c.bf16 %v2100, %v2100
        %v2613 = vpack.c.bf16 %v2101, %v2101
        %v2614 = vpack.c.bf16 %v2102, %v2102
        %v2615 = vpack.c.bf16 %v2103, %v2103
        %v2616 = vpack.c.bf16 %v2104, %v2104
        %v2617 = vpack.c.bf16 %v2105, %v2105
        %v2618 = vpack.c.bf16 %v2106, %v2106
        %v2619 = vpack.c.bf16 %v2107, %v2107
        %v2620 = vpack.c.bf16 %v2108, %v2108
        %v2621 = vpack.c.bf16 %v2109, %v2109
        %v2622 = vpack.c.bf16 %v2110, %v2110
        %v2623 = vpack.c.bf16 %v2111, %v2111
        %v2624 = vpack.c.bf16 %v2112, %v2112
        %v2625 = vpack.c.bf16 %v2113, %v2113
        %v2626 = vpack.c.bf16 %v2114, %v2114
        %v2627 = vpack.c.bf16 %v2115, %v2115
        %v2628 = vpack.c.bf16 %v2116, %v2116
        %v2629 = vpack.c.bf16 %v2117, %v2117
        %v2630 = vpack.c.bf16 %v2118, %v2118
        %v2631 = vpack.c.bf16 %v2119, %v2119
        %v2632 = vpack.c.bf16 %v2120, %v2120
        %v2633 = vpack.c.bf16 %v2121, %v2121
        %v2634 = vpack.c.bf16 %v2122, %v2122
        %v2635 = vpack.c.bf16 %v2123, %v2123
        %v2636 = vpack.c.bf16 %v2124, %v2124
        %v2637 = vpack.c.bf16 %v2125, %v2125
        %v2638 = vpack.c.bf16 %v2126, %v2126
        %v2639 = vpack.c.bf16 %v2127, %v2127
        %v2640 = vpack.c.bf16 %v2128, %v2128
        %v2641 = vpack.c.bf16 %v2129, %v2129
        %v2642 = vpack.c.bf16 %v2130, %v2130
        %v2643 = vpack.c.bf16 %v2131, %v2131
        %v2644 = vpack.c.bf16 %v2132, %v2132
        %v2645 = vpack.c.bf16 %v2133, %v2133
        %v2646 = vpack.c.bf16 %v2134, %v2134
        %v2647 = vpack.c.bf16 %v2135, %v2135
        %v2648 = vpack.c.bf16 %v2136, %v2136
        %v2649 = vpack.c.bf16 %v2137, %v2137
        %v2650 = vpack.c.bf16 %v2138, %v2138
        %v2651 = vpack.c.bf16 %v2139, %v2139
        %v2652 = vpack.c.bf16 %v2140, %v2140
        %v2653 = vpack.c.bf16 %v2141, %v2141
        %v2654 = vpack.c.bf16 %v2142, %v2142
        %v2655 = vpack.c.bf16 %v2143, %v2143
        %v2656 = vpack.c.bf16 %v2144, %v2144
        %v2657 = vpack.c.bf16 %v2145, %v2145
        %v2658 = vpack.c.bf16 %v2146, %v2146
        %v2659 = vpack.c.bf16 %v2147, %v2147
        %v2660 = vpack.c.bf16 %v2148, %v2148
        %v2661 = vpack.c.bf16 %v2149, %v2149
        %v2662 = vpack.c.bf16 %v2150, %v2150
        %v2663 = vpack.c.bf16 %v2151, %v2151
        %v2664 = vpack.c.bf16 %v2152, %v2152
        %v2665 = vpack.c.bf16 %v2153, %v2153
        %v2666 = vpack.c.bf16 %v2154, %v2154
        %v2667 = vpack.c.bf16 %v2155, %v2155
        %v2668 = vpack.c.bf16 %v2156, %v2156
        %v2669 = vpack.c.bf16 %v2157, %v2157
        %v2670 = vpack.c.bf16 %v2158, %v2158
        %v2671 = vpack.c.bf16 %v2159, %v2159
        %v2672 = vpack.c.bf16 %v2160, %v2160
        %v2673 = vpack.c.bf16 %v2161, %v2161
        %v2674 = vpack.c.bf16 %v2162, %v2162
        %v2675 = vpack.c.bf16 %v2163, %v2163
        %v2676 = vpack.c.bf16 %v2164, %v2164
        %v2677 = vpack.c.bf16 %v2165, %v2165
        %v2678 = vpack.c.bf16 %v2166, %v2166
        %v2679 = vpack.c.bf16 %v2167, %v2167
        %v2680 = vpack.c.bf16 %v2168, %v2168
        %v2681 = vpack.c.bf16 %v2169, %v2169
        %v2682 = vpack.c.bf16 %v2170, %v2170
        %v2683 = vpack.c.bf16 %v2171, %v2171
        %v2684 = vpack.c.bf16 %v2172, %v2172
        %v2685 = vpack.c.bf16 %v2173, %v2173
        %v2686 = vpack.c.bf16 %v2174, %v2174
        %v2687 = vpack.c.bf16 %v2175, %v2175
        %v2688 = vpack.c.bf16 %v2176, %v2176
        %v2689 = vpack.c.bf16 %v2177, %v2177
        %v2690 = vpack.c.bf16 %v2178, %v2178
        %v2691 = vpack.c.bf16 %v2179, %v2179
        %v2692 = vpack.c.bf16 %v2180, %v2180
        %v2693 = vpack.c.bf16 %v2181, %v2181
        %v2694 = vpack.c.bf16 %v2182, %v2182
        %v2695 = vpack.c.bf16 %v2183, %v2183
        %v2696 = vpack.c.bf16 %v2184, %v2184
        %v2697 = vpack.c.bf16 %v2185, %v2185
        %v2698 = vpack.c.bf16 %v2186, %v2186
        %v2699 = vpack.c.bf16 %v2187, %v2187
        %v2700 = vpack.c.bf16 %v2188, %v2188
        %v2701 = vpack.c.bf16 %v2189, %v2189
        %v2702 = vpack.c.bf16 %v2190, %v2190
        %v2703 = vpack.c.bf16 %v2191, %v2191
        %v2704 = vpack.c.bf16 %v2192, %v2192
        %v2705 = vpack.c.bf16 %v2193, %v2193
        %v2706 = vpack.c.bf16 %v2194, %v2194
        %v2707 = vpack.c.bf16 %v2195, %v2195
        %v2708 = vpack.c.bf16 %v2196, %v2196
        %v2709 = vpack.c.bf16 %v2197, %v2197
        %v2710 = vpack.c.bf16 %v2198, %v2198
        %v2711 = vpack.c.bf16 %v2199, %v2199
        %v2712 = vpack.c.bf16 %v2200, %v2200
        %v2713 = vpack.c.bf16 %v2201, %v2201
        %v2714 = vpack.c.bf16 %v2202, %v2202
        %v2715 = vpack.c.bf16 %v2203, %v2203
        %v2716 = vpack.c.bf16 %v2204, %v2204
        %v2717 = vpack.c.bf16 %v2205, %v2205
        %v2718 = vpack.c.bf16 %v2206, %v2206
        %v2719 = vpack.c.bf16 %v2207, %v2207
        %v2720 = vpack.c.bf16 %v2208, %v2208
        %v2721 = vpack.c.bf16 %v2209, %v2209
        %v2722 = vpack.c.bf16 %v2210, %v2210
        %v2723 = vpack.c.bf16 %v2211, %v2211
        %v2724 = vpack.c.bf16 %v2212, %v2212
        %v2725 = vpack.c.bf16 %v2213, %v2213
        %v2726 = vpack.c.bf16 %v2214, %v2214
        %v2727 = vpack.c.bf16 %v2215, %v2215
        %v2728 = vpack.c.bf16 %v2216, %v2216
        %v2729 = vpack.c.bf16 %v2217, %v2217
        %v2730 = vpack.c.bf16 %v2218, %v2218
        %v2731 = vpack.c.bf16 %v2219, %v2219
        %v2732 = vpack.c.bf16 %v2220, %v2220
        %v2733 = vpack.c.bf16 %v2221, %v2221
        %v2734 = vpack.c.bf16 %v2222, %v2222
        %v2735 = vpack.c.bf16 %v2223, %v2223
        %v2736 = vpack.c.bf16 %v2224, %v2224
        %v2737 = vpack.c.bf16 %v2225, %v2225
        %v2738 = vpack.c.bf16 %v2226, %v2226
        %v2739 = vpack.c.bf16 %v2227, %v2227
        %v2740 = vpack.c.bf16 %v2228, %v2228
        %v2741 = vpack.c.bf16 %v2229, %v2229
        %v2742 = vpack.c.bf16 %v2230, %v2230
        %v2743 = vpack.c.bf16 %v2231, %v2231
        %v2744 = vpack.c.bf16 %v2232, %v2232
        %v2745 = vpack.c.bf16 %v2233, %v2233
        %v2746 = vpack.c.bf16 %v2234, %v2234
        %v2747 = vpack.c.bf16 %v2235, %v2235
        %v2748 = vpack.c.bf16 %v2236, %v2236
        %v2749 = vpack.c.bf16 %v2237, %v2237
        %v2750 = vpack.c.bf16 %v2238, %v2238
        %v2751 = vpack.c.bf16 %v2239, %v2239
        %v2752 = vpack.c.bf16 %v2240, %v2240
        %v2753 = vpack.c.bf16 %v2241, %v2241
        %v2754 = vpack.c.bf16 %v2242, %v2242
        %v2755 = vpack.c.bf16 %v2243, %v2243
        %v2756 = vpack.c.bf16 %v2244, %v2244
        %v2757 = vpack.c.bf16 %v2245, %v2245
        %v2758 = vpack.c.bf16 %v2246, %v2246
        %v2759 = vpack.c.bf16 %v2247, %v2247
        %v2760 = vpack.c.bf16 %v2248, %v2248
        %v2761 = vpack.c.bf16 %v2249, %v2249
        %v2762 = vpack.c.bf16 %v2250, %v2250
        %v2763 = vpack.c.bf16 %v2251, %v2251
        %v2764 = vpack.c.bf16 %v2252, %v2252
        %v2765 = vpack.c.bf16 %v2253, %v2253
        %v2766 = vpack.c.bf16 %v2254, %v2254
        %v2767 = vpack.c.bf16 %v2255, %v2255
        %v2768 = vpack.c.bf16 %v2256, %v2256
        %v2769 = vpack.c.bf16 %v2257, %v2257
        %v2770 = vpack.c.bf16 %v2258, %v2258
        %v2771 = vpack.c.bf16 %v2259, %v2259
        %v2772 = vpack.c.bf16 %v2260, %v2260
        %v2773 = vpack.c.bf16 %v2261, %v2261
        %v2774 = vpack.c.bf16 %v2262, %v2262
        %v2775 = vpack.c.bf16 %v2263, %v2263
        %v2776 = vpack.c.bf16 %v2264, %v2264
        %v2777 = vpack.c.bf16 %v2265, %v2265
        %v2778 = vpack.c.bf16 %v2266, %v2266
        %v2779 = vpack.c.bf16 %v2267, %v2267
        %v2780 = vpack.c.bf16 %v2268, %v2268
        %v2781 = vpack.c.bf16 %v2269, %v2269
        %v2782 = vpack.c.bf16 %v2270, %v2270
        %v2783 = vpack.c.bf16 %v2271, %v2271
        %v2784 = vpack.c.bf16 %v2272, %v2272
        %v2785 = vpack.c.bf16 %v2273, %v2273
        %v2786 = vpack.c.bf16 %v2274, %v2274
        %v2787 = vpack.c.bf16 %v2275, %v2275
        %v2788 = vpack.c.bf16 %v2276, %v2276
        %v2789 = vpack.c.bf16 %v2277, %v2277
        %v2790 = vpack.c.bf16 %v2278, %v2278
        %v2791 = vpack.c.bf16 %v2279, %v2279
        %v2792 = vpack.c.bf16 %v2280, %v2280
        %v2793 = vpack.c.bf16 %v2281, %v2281
        %v2794 = vpack.c.bf16 %v2282, %v2282
        %v2795 = vpack.c.bf16 %v2283, %v2283
        %v2796 = vpack.c.bf16 %v2284, %v2284
        %v2797 = vpack.c.bf16 %v2285, %v2285
        %v2798 = vpack.c.bf16 %v2286, %v2286
        %v2799 = vpack.c.bf16 %v2287, %v2287
        %v2800 = vpack.c.bf16 %v2288, %v2288
        %v2801 = vpack.c.bf16 %v2289, %v2289
        %v2802 = vpack.c.bf16 %v2290, %v2290
        %v2803 = vpack.c.bf16 %v2291, %v2291
        %v2804 = vpack.c.bf16 %v2292, %v2292
        %v2805 = vpack.c.bf16 %v2293, %v2293
        %v2806 = vpack.c.bf16 %v2294, %v2294
        %v2807 = vpack.c.bf16 %v2295, %v2295
        %v2808 = vpack.c.bf16 %v2296, %v2296
        %v2809 = vpack.c.bf16 %v2297, %v2297
        %v2810 = vpack.c.bf16 %v2298, %v2298
        %v2811 = vpack.c.bf16 %v2299, %v2299
        %v2812 = vpack.c.bf16 %v2300, %v2300
        %v2813 = vpack.c.bf16 %v2301, %v2301
        %v2814 = vpack.c.bf16 %v2302, %v2302
        %v2815 = vpack.c.bf16 %v2303, %v2303
        %v2816 = vpack.c.bf16 %v2304, %v2304
        %v2817 = vpack.c.bf16 %v2305, %v2305
        %v2818 = vpack.c.bf16 %v2306, %v2306
        %v2819 = vpack.c.bf16 %v2307, %v2307
        %v2820 = vpack.c.bf16 %v2308, %v2308
        %v2821 = vpack.c.bf16 %v2309, %v2309
        %v2822 = vpack.c.bf16 %v2310, %v2310
        %v2823 = vpack.c.bf16 %v2311, %v2311
        %v2824 = vpack.c.bf16 %v2312, %v2312
        %v2825 = vpack.c.bf16 %v2313, %v2313
        %v2826 = vpack.c.bf16 %v2314, %v2314
        %v2827 = vpack.c.bf16 %v2315, %v2315
        %v2828 = vpack.c.bf16 %v2316, %v2316
        %v2829 = vpack.c.bf16 %v2317, %v2317
        %v2830 = vpack.c.bf16 %v2318, %v2318
        %v2831 = vpack.c.bf16 %v2319, %v2319
        %v2832 = vpack.c.bf16 %v2320, %v2320
        %v2833 = vpack.c.bf16 %v2321, %v2321
        %v2834 = vpack.c.bf16 %v2322, %v2322
        %v2835 = vpack.c.bf16 %v2323, %v2323
        %v2836 = vpack.c.bf16 %v2324, %v2324
        %v2837 = vpack.c.bf16 %v2325, %v2325
        %v2838 = vpack.c.bf16 %v2326, %v2326
        %v2839 = vpack.c.bf16 %v2327, %v2327
        %v2840 = vpack.c.bf16 %v2328, %v2328
        %v2841 = vpack.c.bf16 %v2329, %v2329
        %v2842 = vpack.c.bf16 %v2330, %v2330
        %v2843 = vpack.c.bf16 %v2331, %v2331
        %v2844 = vpack.c.bf16 %v2332, %v2332
        %v2845 = vpack.c.bf16 %v2333, %v2333
        %v2846 = vpack.c.bf16 %v2334, %v2334
        %v2847 = vpack.c.bf16 %v2335, %v2335
        %v2848 = vpack.c.bf16 %v2336, %v2336
        %v2849 = vpack.c.bf16 %v2337, %v2337
        %v2850 = vpack.c.bf16 %v2338, %v2338
        %v2851 = vpack.c.bf16 %v2339, %v2339
        %v2852 = vpack.c.bf16 %v2340, %v2340
        %v2853 = vpack.c.bf16 %v2341, %v2341
        %v2854 = vpack.c.bf16 %v2342, %v2342
        %v2855 = vpack.c.bf16 %v2343, %v2343
        %v2856 = vpack.c.bf16 %v2344, %v2344
        %v2857 = vpack.c.bf16 %v2345, %v2345
        %v2858 = vpack.c.bf16 %v2346, %v2346
        %v2859 = vpack.c.bf16 %v2347, %v2347
        %v2860 = vpack.c.bf16 %v2348, %v2348
        %v2861 = vpack.c.bf16 %v2349, %v2349
        %v2862 = vpack.c.bf16 %v2350, %v2350
        %v2863 = vpack.c.bf16 %v2351, %v2351
        %v2864 = vpack.c.bf16 %v2352, %v2352
        %v2865 = vpack.c.bf16 %v2353, %v2353
        %v2866 = vpack.c.bf16 %v2354, %v2354
        %v2867 = vpack.c.bf16 %v2355, %v2355
        %v2868 = vpack.c.bf16 %v2356, %v2356
        %v2869 = vpack.c.bf16 %v2357, %v2357
        %v2870 = vpack.c.bf16 %v2358, %v2358
        %v2871 = vpack.c.bf16 %v2359, %v2359
        %v2872 = vpack.c.bf16 %v2360, %v2360
        %v2873 = vpack.c.bf16 %v2361, %v2361
        %v2874 = vpack.c.bf16 %v2362, %v2362
        %v2875 = vpack.c.bf16 %v2363, %v2363
        %v2876 = vpack.c.bf16 %v2364, %v2364
        %v2877 = vpack.c.bf16 %v2365, %v2365
        %v2878 = vpack.c.bf16 %v2366, %v2366
        %v2879 = vpack.c.bf16 %v2367, %v2367
        %v2880 = vpack.c.bf16 %v2368, %v2368
        %v2881 = vpack.c.bf16 %v2369, %v2369
        %v2882 = vpack.c.bf16 %v2370, %v2370
        %v2883 = vpack.c.bf16 %v2371, %v2371
        %v2884 = vpack.c.bf16 %v2372, %v2372
        %v2885 = vpack.c.bf16 %v2373, %v2373
        %v2886 = vpack.c.bf16 %v2374, %v2374
        %v2887 = vpack.c.bf16 %v2375, %v2375
        %v2888 = vpack.c.bf16 %v2376, %v2376
        %v2889 = vpack.c.bf16 %v2377, %v2377
        %v2890 = vpack.c.bf16 %v2378, %v2378
        %v2891 = vpack.c.bf16 %v2379, %v2379
        %v2892 = vpack.c.bf16 %v2380, %v2380
        %v2893 = vpack.c.bf16 %v2381, %v2381
        %v2894 = vpack.c.bf16 %v2382, %v2382
        %v2895 = vpack.c.bf16 %v2383, %v2383
        %v2896 = vpack.c.bf16 %v2384, %v2384
        %v2897 = vpack.c.bf16 %v2385, %v2385
        %v2898 = vpack.c.bf16 %v2386, %v2386
        %v2899 = vpack.c.bf16 %v2387, %v2387
        %v2900 = vpack.c.bf16 %v2388, %v2388
        %v2901 = vpack.c.bf16 %v2389, %v2389
        %v2902 = vpack.c.bf16 %v2390, %v2390
        %v2903 = vpack.c.bf16 %v2391, %v2391
        %v2904 = vpack.c.bf16 %v2392, %v2392
        %v2905 = vpack.c.bf16 %v2393, %v2393
        %v2906 = vpack.c.bf16 %v2394, %v2394
        %v2907 = vpack.c.bf16 %v2395, %v2395
        %v2908 = vpack.c.bf16 %v2396, %v2396
        %v2909 = vpack.c.bf16 %v2397, %v2397
        %v2910 = vld [vmem:[%s396] sm:$0x1]
        %v2912 = vperm.slane %v2910, 0
        %v2914 = vmul.f32 %v432, %v2912
        %v2915 = vmul.f32 %v433, %v2912
        %v2916 = vmul.f32 %v434, %v2912
        %v2917 = vmul.f32 %v435, %v2912
        %v2918 = vmul.f32 %v436, %v2912
        %v2919 = vmul.f32 %v437, %v2912
        %v2920 = vmul.f32 %v438, %v2912
        %v2921 = vmul.f32 %v439, %v2912
        %v3434 = vunpack.c.l.b16 %v2398
        %v3435 = vunpack.c.l.b16 %v2399
        %v3436 = vunpack.c.l.b16 %v2400
        %v3437 = vunpack.c.l.b16 %v2401
        %v3438 = vunpack.c.l.b16 %v2402
        %v3439 = vunpack.c.l.b16 %v2403
        %v3440 = vunpack.c.l.b16 %v2404
        %v3441 = vunpack.c.l.b16 %v2405
        %v3442 = vunpack.c.l.b16 %v2406
        %v3443 = vunpack.c.l.b16 %v2407
        %v3444 = vunpack.c.l.b16 %v2408
        %v3445 = vunpack.c.l.b16 %v2409
        %v3446 = vunpack.c.l.b16 %v2410
        %v3447 = vunpack.c.l.b16 %v2411
        %v3448 = vunpack.c.l.b16 %v2412
        %v3449 = vunpack.c.l.b16 %v2413
        %v3450 = vunpack.c.l.b16 %v2414
        %v3451 = vunpack.c.l.b16 %v2415
        %v3452 = vunpack.c.l.b16 %v2416
        %v3453 = vunpack.c.l.b16 %v2417
        %v3454 = vunpack.c.l.b16 %v2418
        %v3455 = vunpack.c.l.b16 %v2419
        %v3456 = vunpack.c.l.b16 %v2420
        %v3457 = vunpack.c.l.b16 %v2421
        %v3458 = vunpack.c.l.b16 %v2422
        %v3459 = vunpack.c.l.b16 %v2423
        %v3460 = vunpack.c.l.b16 %v2424
        %v3461 = vunpack.c.l.b16 %v2425
        %v3462 = vunpack.c.l.b16 %v2426
        %v3463 = vunpack.c.l.b16 %v2427
        %v3464 = vunpack.c.l.b16 %v2428
        %v3465 = vunpack.c.l.b16 %v2429
        %v3466 = vunpack.c.l.b16 %v2430
        %v3467 = vunpack.c.l.b16 %v2431
        %v3468 = vunpack.c.l.b16 %v2432
        %v3469 = vunpack.c.l.b16 %v2433
        %v3470 = vunpack.c.l.b16 %v2434
        %v3471 = vunpack.c.l.b16 %v2435
        %v3472 = vunpack.c.l.b16 %v2436
        %v3473 = vunpack.c.l.b16 %v2437
        %v3474 = vunpack.c.l.b16 %v2438
        %v3475 = vunpack.c.l.b16 %v2439
        %v3476 = vunpack.c.l.b16 %v2440
        %v3477 = vunpack.c.l.b16 %v2441
        %v3478 = vunpack.c.l.b16 %v2442
        %v3479 = vunpack.c.l.b16 %v2443
        %v3480 = vunpack.c.l.b16 %v2444
        %v3481 = vunpack.c.l.b16 %v2445
        %v3482 = vunpack.c.l.b16 %v2446
        %v3483 = vunpack.c.l.b16 %v2447
        %v3484 = vunpack.c.l.b16 %v2448
        %v3485 = vunpack.c.l.b16 %v2449
        %v3486 = vunpack.c.l.b16 %v2450
        %v3487 = vunpack.c.l.b16 %v2451
        %v3488 = vunpack.c.l.b16 %v2452
        %v3489 = vunpack.c.l.b16 %v2453
        %v3490 = vunpack.c.l.b16 %v2454
        %v3491 = vunpack.c.l.b16 %v2455
        %v3492 = vunpack.c.l.b16 %v2456
        %v3493 = vunpack.c.l.b16 %v2457
        %v3494 = vunpack.c.l.b16 %v2458
        %v3495 = vunpack.c.l.b16 %v2459
        %v3496 = vunpack.c.l.b16 %v2460
        %v3497 = vunpack.c.l.b16 %v2461
        %v3498 = vunpack.c.l.b16 %v2462
        %v3499 = vunpack.c.l.b16 %v2463
        %v3500 = vunpack.c.l.b16 %v2464
        %v3501 = vunpack.c.l.b16 %v2465
        %v3502 = vunpack.c.l.b16 %v2466
        %v3503 = vunpack.c.l.b16 %v2467
        %v3504 = vunpack.c.l.b16 %v2468
        %v3505 = vunpack.c.l.b16 %v2469
        %v3506 = vunpack.c.l.b16 %v2470
        %v3507 = vunpack.c.l.b16 %v2471
        %v3508 = vunpack.c.l.b16 %v2472
        %v3509 = vunpack.c.l.b16 %v2473
        %v3510 = vunpack.c.l.b16 %v2474
        %v3511 = vunpack.c.l.b16 %v2475
        %v3512 = vunpack.c.l.b16 %v2476
        %v3513 = vunpack.c.l.b16 %v2477
        %v3514 = vunpack.c.l.b16 %v2478
        %v3515 = vunpack.c.l.b16 %v2479
        %v3516 = vunpack.c.l.b16 %v2480
        %v3517 = vunpack.c.l.b16 %v2481
        %v3518 = vunpack.c.l.b16 %v2482
        %v3519 = vunpack.c.l.b16 %v2483
        %v3520 = vunpack.c.l.b16 %v2484
        %v3521 = vunpack.c.l.b16 %v2485
        %v3522 = vunpack.c.l.b16 %v2486
        %v3523 = vunpack.c.l.b16 %v2487
        %v3524 = vunpack.c.l.b16 %v2488
        %v3525 = vunpack.c.l.b16 %v2489
        %v3526 = vunpack.c.l.b16 %v2490
        %v3527 = vunpack.c.l.b16 %v2491
        %v3528 = vunpack.c.l.b16 %v2492
        %v3529 = vunpack.c.l.b16 %v2493
        %v3530 = vunpack.c.l.b16 %v2494
        %v3531 = vunpack.c.l.b16 %v2495
        %v3532 = vunpack.c.l.b16 %v2496
        %v3533 = vunpack.c.l.b16 %v2497
        %v3534 = vunpack.c.l.b16 %v2498
        %v3535 = vunpack.c.l.b16 %v2499
        %v3536 = vunpack.c.l.b16 %v2500
        %v3537 = vunpack.c.l.b16 %v2501
        %v3538 = vunpack.c.l.b16 %v2502
        %v3539 = vunpack.c.l.b16 %v2503
        %v3540 = vunpack.c.l.b16 %v2504
        %v3541 = vunpack.c.l.b16 %v2505
        %v3542 = vunpack.c.l.b16 %v2506
        %v3543 = vunpack.c.l.b16 %v2507
        %v3544 = vunpack.c.l.b16 %v2508
        %v3545 = vunpack.c.l.b16 %v2509
        %v3546 = vunpack.c.l.b16 %v2510
        %v3547 = vunpack.c.l.b16 %v2511
        %v3548 = vunpack.c.l.b16 %v2512
        %v3549 = vunpack.c.l.b16 %v2513
        %v3550 = vunpack.c.l.b16 %v2514
        %v3551 = vunpack.c.l.b16 %v2515
        %v3552 = vunpack.c.l.b16 %v2516
        %v3553 = vunpack.c.l.b16 %v2517
        %v3554 = vunpack.c.l.b16 %v2518
        %v3555 = vunpack.c.l.b16 %v2519
        %v3556 = vunpack.c.l.b16 %v2520
        %v3557 = vunpack.c.l.b16 %v2521
        %v3558 = vunpack.c.l.b16 %v2522
        %v3559 = vunpack.c.l.b16 %v2523
        %v3560 = vunpack.c.l.b16 %v2524
        %v3561 = vunpack.c.l.b16 %v2525
        %v3562 = vunpack.c.l.b16 %v2526
        %v3563 = vunpack.c.l.b16 %v2527
        %v3564 = vunpack.c.l.b16 %v2528
        %v3565 = vunpack.c.l.b16 %v2529
        %v3566 = vunpack.c.l.b16 %v2530
        %v3567 = vunpack.c.l.b16 %v2531
        %v3568 = vunpack.c.l.b16 %v2532
        %v3569 = vunpack.c.l.b16 %v2533
        %v3570 = vunpack.c.l.b16 %v2534
        %v3571 = vunpack.c.l.b16 %v2535
        %v3572 = vunpack.c.l.b16 %v2536
        %v3573 = vunpack.c.l.b16 %v2537
        %v3574 = vunpack.c.l.b16 %v2538
        %v3575 = vunpack.c.l.b16 %v2539
        %v3576 = vunpack.c.l.b16 %v2540
        %v3577 = vunpack.c.l.b16 %v2541
        %v3578 = vunpack.c.l.b16 %v2542
        %v3579 = vunpack.c.l.b16 %v2543
        %v3580 = vunpack.c.l.b16 %v2544
        %v3581 = vunpack.c.l.b16 %v2545
        %v3582 = vunpack.c.l.b16 %v2546
        %v3583 = vunpack.c.l.b16 %v2547
        %v3584 = vunpack.c.l.b16 %v2548
        %v3585 = vunpack.c.l.b16 %v2549
        %v3586 = vunpack.c.l.b16 %v2550
        %v3587 = vunpack.c.l.b16 %v2551
        %v3588 = vunpack.c.l.b16 %v2552
        %v3589 = vunpack.c.l.b16 %v2553
        %v3590 = vunpack.c.l.b16 %v2554
        %v3591 = vunpack.c.l.b16 %v2555
        %v3592 = vunpack.c.l.b16 %v2556
        %v3593 = vunpack.c.l.b16 %v2557
        %v3594 = vunpack.c.l.b16 %v2558
        %v3595 = vunpack.c.l.b16 %v2559
        %v3596 = vunpack.c.l.b16 %v2560
        %v3597 = vunpack.c.l.b16 %v2561
        %v3598 = vunpack.c.l.b16 %v2562
        %v3599 = vunpack.c.l.b16 %v2563
        %v3600 = vunpack.c.l.b16 %v2564
        %v3601 = vunpack.c.l.b16 %v2565
        %v3602 = vunpack.c.l.b16 %v2566
        %v3603 = vunpack.c.l.b16 %v2567
        %v3604 = vunpack.c.l.b16 %v2568
        %v3605 = vunpack.c.l.b16 %v2569
        %v3606 = vunpack.c.l.b16 %v2570
        %v3607 = vunpack.c.l.b16 %v2571
        %v3608 = vunpack.c.l.b16 %v2572
        %v3609 = vunpack.c.l.b16 %v2573
        %v3610 = vunpack.c.l.b16 %v2574
        %v3611 = vunpack.c.l.b16 %v2575
        %v3612 = vunpack.c.l.b16 %v2576
        %v3613 = vunpack.c.l.b16 %v2577
        %v3614 = vunpack.c.l.b16 %v2578
        %v3615 = vunpack.c.l.b16 %v2579
        %v3616 = vunpack.c.l.b16 %v2580
        %v3617 = vunpack.c.l.b16 %v2581
        %v3618 = vunpack.c.l.b16 %v2582
        %v3619 = vunpack.c.l.b16 %v2583
        %v3620 = vunpack.c.l.b16 %v2584
        %v3621 = vunpack.c.l.b16 %v2585
        %v3622 = vunpack.c.l.b16 %v2586
        %v3623 = vunpack.c.l.b16 %v2587
        %v3624 = vunpack.c.l.b16 %v2588
        %v3625 = vunpack.c.l.b16 %v2589
        %v3626 = vunpack.c.l.b16 %v2590
        %v3627 = vunpack.c.l.b16 %v2591
        %v3628 = vunpack.c.l.b16 %v2592
        %v3629 = vunpack.c.l.b16 %v2593
        %v3630 = vunpack.c.l.b16 %v2594
        %v3631 = vunpack.c.l.b16 %v2595
        %v3632 = vunpack.c.l.b16 %v2596
        %v3633 = vunpack.c.l.b16 %v2597
        %v3634 = vunpack.c.l.b16 %v2598
        %v3635 = vunpack.c.l.b16 %v2599
        %v3636 = vunpack.c.l.b16 %v2600
        %v3637 = vunpack.c.l.b16 %v2601
        %v3638 = vunpack.c.l.b16 %v2602
        %v3639 = vunpack.c.l.b16 %v2603
        %v3640 = vunpack.c.l.b16 %v2604
        %v3641 = vunpack.c.l.b16 %v2605
        %v3642 = vunpack.c.l.b16 %v2606
        %v3643 = vunpack.c.l.b16 %v2607
        %v3644 = vunpack.c.l.b16 %v2608
        %v3645 = vunpack.c.l.b16 %v2609
        %v3646 = vunpack.c.l.b16 %v2610
        %v3647 = vunpack.c.l.b16 %v2611
        %v3648 = vunpack.c.l.b16 %v2612
        %v3649 = vunpack.c.l.b16 %v2613
        %v3650 = vunpack.c.l.b16 %v2614
        %v3651 = vunpack.c.l.b16 %v2615
        %v3652 = vunpack.c.l.b16 %v2616
        %v3653 = vunpack.c.l.b16 %v2617
        %v3654 = vunpack.c.l.b16 %v2618
        %v3655 = vunpack.c.l.b16 %v2619
        %v3656 = vunpack.c.l.b16 %v2620
        %v3657 = vunpack.c.l.b16 %v2621
        %v3658 = vunpack.c.l.b16 %v2622
        %v3659 = vunpack.c.l.b16 %v2623
        %v3660 = vunpack.c.l.b16 %v2624
        %v3661 = vunpack.c.l.b16 %v2625
        %v3662 = vunpack.c.l.b16 %v2626
        %v3663 = vunpack.c.l.b16 %v2627
        %v3664 = vunpack.c.l.b16 %v2628
        %v3665 = vunpack.c.l.b16 %v2629
        %v3666 = vunpack.c.l.b16 %v2630
        %v3667 = vunpack.c.l.b16 %v2631
        %v3668 = vunpack.c.l.b16 %v2632
        %v3669 = vunpack.c.l.b16 %v2633
        %v3670 = vunpack.c.l.b16 %v2634
        %v3671 = vunpack.c.l.b16 %v2635
        %v3672 = vunpack.c.l.b16 %v2636
        %v3673 = vunpack.c.l.b16 %v2637
        %v3674 = vunpack.c.l.b16 %v2638
        %v3675 = vunpack.c.l.b16 %v2639
        %v3676 = vunpack.c.l.b16 %v2640
        %v3677 = vunpack.c.l.b16 %v2641
        %v3678 = vunpack.c.l.b16 %v2642
        %v3679 = vunpack.c.l.b16 %v2643
        %v3680 = vunpack.c.l.b16 %v2644
        %v3681 = vunpack.c.l.b16 %v2645
        %v3682 = vunpack.c.l.b16 %v2646
        %v3683 = vunpack.c.l.b16 %v2647
        %v3684 = vunpack.c.l.b16 %v2648
        %v3685 = vunpack.c.l.b16 %v2649
        %v3686 = vunpack.c.l.b16 %v2650
        %v3687 = vunpack.c.l.b16 %v2651
        %v3688 = vunpack.c.l.b16 %v2652
        %v3689 = vunpack.c.l.b16 %v2653
        %v3690 = vunpack.c.l.b16 %v2654
        %v3691 = vunpack.c.l.b16 %v2655
        %v3692 = vunpack.c.l.b16 %v2656
        %v3693 = vunpack.c.l.b16 %v2657
        %v3694 = vunpack.c.l.b16 %v2658
        %v3695 = vunpack.c.l.b16 %v2659
        %v3696 = vunpack.c.l.b16 %v2660
        %v3697 = vunpack.c.l.b16 %v2661
        %v3698 = vunpack.c.l.b16 %v2662
        %v3699 = vunpack.c.l.b16 %v2663
        %v3700 = vunpack.c.l.b16 %v2664
        %v3701 = vunpack.c.l.b16 %v2665
        %v3702 = vunpack.c.l.b16 %v2666
        %v3703 = vunpack.c.l.b16 %v2667
        %v3704 = vunpack.c.l.b16 %v2668
        %v3705 = vunpack.c.l.b16 %v2669
        %v3706 = vunpack.c.l.b16 %v2670
        %v3707 = vunpack.c.l.b16 %v2671
        %v3708 = vunpack.c.l.b16 %v2672
        %v3709 = vunpack.c.l.b16 %v2673
        %v3710 = vunpack.c.l.b16 %v2674
        %v3711 = vunpack.c.l.b16 %v2675
        %v3712 = vunpack.c.l.b16 %v2676
        %v3713 = vunpack.c.l.b16 %v2677
        %v3714 = vunpack.c.l.b16 %v2678
        %v3715 = vunpack.c.l.b16 %v2679
        %v3716 = vunpack.c.l.b16 %v2680
        %v3717 = vunpack.c.l.b16 %v2681
        %v3718 = vunpack.c.l.b16 %v2682
        %v3719 = vunpack.c.l.b16 %v2683
        %v3720 = vunpack.c.l.b16 %v2684
        %v3721 = vunpack.c.l.b16 %v2685
        %v3722 = vunpack.c.l.b16 %v2686
        %v3723 = vunpack.c.l.b16 %v2687
        %v3724 = vunpack.c.l.b16 %v2688
        %v3725 = vunpack.c.l.b16 %v2689
        %v3726 = vunpack.c.l.b16 %v2690
        %v3727 = vunpack.c.l.b16 %v2691
        %v3728 = vunpack.c.l.b16 %v2692
        %v3729 = vunpack.c.l.b16 %v2693
        %v3730 = vunpack.c.l.b16 %v2694
        %v3731 = vunpack.c.l.b16 %v2695
        %v3732 = vunpack.c.l.b16 %v2696
        %v3733 = vunpack.c.l.b16 %v2697
        %v3734 = vunpack.c.l.b16 %v2698
        %v3735 = vunpack.c.l.b16 %v2699
        %v3736 = vunpack.c.l.b16 %v2700
        %v3737 = vunpack.c.l.b16 %v2701
        %v3738 = vunpack.c.l.b16 %v2702
        %v3739 = vunpack.c.l.b16 %v2703
        %v3740 = vunpack.c.l.b16 %v2704
        %v3741 = vunpack.c.l.b16 %v2705
        %v3742 = vunpack.c.l.b16 %v2706
        %v3743 = vunpack.c.l.b16 %v2707
        %v3744 = vunpack.c.l.b16 %v2708
        %v3745 = vunpack.c.l.b16 %v2709
        %v3746 = vunpack.c.l.b16 %v2710
        %v3747 = vunpack.c.l.b16 %v2711
        %v3748 = vunpack.c.l.b16 %v2712
        %v3749 = vunpack.c.l.b16 %v2713
        %v3750 = vunpack.c.l.b16 %v2714
        %v3751 = vunpack.c.l.b16 %v2715
        %v3752 = vunpack.c.l.b16 %v2716
        %v3753 = vunpack.c.l.b16 %v2717
        %v3754 = vunpack.c.l.b16 %v2718
        %v3755 = vunpack.c.l.b16 %v2719
        %v3756 = vunpack.c.l.b16 %v2720
        %v3757 = vunpack.c.l.b16 %v2721
        %v3758 = vunpack.c.l.b16 %v2722
        %v3759 = vunpack.c.l.b16 %v2723
        %v3760 = vunpack.c.l.b16 %v2724
        %v3761 = vunpack.c.l.b16 %v2725
        %v3762 = vunpack.c.l.b16 %v2726
        %v3763 = vunpack.c.l.b16 %v2727
        %v3764 = vunpack.c.l.b16 %v2728
        %v3765 = vunpack.c.l.b16 %v2729
        %v3766 = vunpack.c.l.b16 %v2730
        %v3767 = vunpack.c.l.b16 %v2731
        %v3768 = vunpack.c.l.b16 %v2732
        %v3769 = vunpack.c.l.b16 %v2733
        %v3770 = vunpack.c.l.b16 %v2734
        %v3771 = vunpack.c.l.b16 %v2735
        %v3772 = vunpack.c.l.b16 %v2736
        %v3773 = vunpack.c.l.b16 %v2737
        %v3774 = vunpack.c.l.b16 %v2738
        %v3775 = vunpack.c.l.b16 %v2739
        %v3776 = vunpack.c.l.b16 %v2740
        %v3777 = vunpack.c.l.b16 %v2741
        %v3778 = vunpack.c.l.b16 %v2742
        %v3779 = vunpack.c.l.b16 %v2743
        %v3780 = vunpack.c.l.b16 %v2744
        %v3781 = vunpack.c.l.b16 %v2745
        %v3782 = vunpack.c.l.b16 %v2746
        %v3783 = vunpack.c.l.b16 %v2747
        %v3784 = vunpack.c.l.b16 %v2748
        %v3785 = vunpack.c.l.b16 %v2749
        %v3786 = vunpack.c.l.b16 %v2750
        %v3787 = vunpack.c.l.b16 %v2751
        %v3788 = vunpack.c.l.b16 %v2752
        %v3789 = vunpack.c.l.b16 %v2753
        %v3790 = vunpack.c.l.b16 %v2754
        %v3791 = vunpack.c.l.b16 %v2755
        %v3792 = vunpack.c.l.b16 %v2756
        %v3793 = vunpack.c.l.b16 %v2757
        %v3794 = vunpack.c.l.b16 %v2758
        %v3795 = vunpack.c.l.b16 %v2759
        %v3796 = vunpack.c.l.b16 %v2760
        %v3797 = vunpack.c.l.b16 %v2761
        %v3798 = vunpack.c.l.b16 %v2762
        %v3799 = vunpack.c.l.b16 %v2763
        %v3800 = vunpack.c.l.b16 %v2764
        %v3801 = vunpack.c.l.b16 %v2765
        %v3802 = vunpack.c.l.b16 %v2766
        %v3803 = vunpack.c.l.b16 %v2767
        %v3804 = vunpack.c.l.b16 %v2768
        %v3805 = vunpack.c.l.b16 %v2769
        %v3806 = vunpack.c.l.b16 %v2770
        %v3807 = vunpack.c.l.b16 %v2771
        %v3808 = vunpack.c.l.b16 %v2772
        %v3809 = vunpack.c.l.b16 %v2773
        %v3810 = vunpack.c.l.b16 %v2774
        %v3811 = vunpack.c.l.b16 %v2775
        %v3812 = vunpack.c.l.b16 %v2776
        %v3813 = vunpack.c.l.b16 %v2777
        %v3814 = vunpack.c.l.b16 %v2778
        %v3815 = vunpack.c.l.b16 %v2779
        %v3816 = vunpack.c.l.b16 %v2780
        %v3817 = vunpack.c.l.b16 %v2781
        %v3818 = vunpack.c.l.b16 %v2782
        %v3819 = vunpack.c.l.b16 %v2783
        %v3820 = vunpack.c.l.b16 %v2784
        %v3821 = vunpack.c.l.b16 %v2785
        %v3822 = vunpack.c.l.b16 %v2786
        %v3823 = vunpack.c.l.b16 %v2787
        %v3824 = vunpack.c.l.b16 %v2788
        %v3825 = vunpack.c.l.b16 %v2789
        %v3826 = vunpack.c.l.b16 %v2790
        %v3827 = vunpack.c.l.b16 %v2791
        %v3828 = vunpack.c.l.b16 %v2792
        %v3829 = vunpack.c.l.b16 %v2793
        %v3830 = vunpack.c.l.b16 %v2794
        %v3831 = vunpack.c.l.b16 %v2795
        %v3832 = vunpack.c.l.b16 %v2796
        %v3833 = vunpack.c.l.b16 %v2797
        %v3834 = vunpack.c.l.b16 %v2798
        %v3835 = vunpack.c.l.b16 %v2799
        %v3836 = vunpack.c.l.b16 %v2800
        %v3837 = vunpack.c.l.b16 %v2801
        %v3838 = vunpack.c.l.b16 %v2802
        %v3839 = vunpack.c.l.b16 %v2803
        %v3840 = vunpack.c.l.b16 %v2804
        %v3841 = vunpack.c.l.b16 %v2805
        %v3842 = vunpack.c.l.b16 %v2806
        %v3843 = vunpack.c.l.b16 %v2807
        %v3844 = vunpack.c.l.b16 %v2808
        %v3845 = vunpack.c.l.b16 %v2809
        %v3846 = vunpack.c.l.b16 %v2810
        %v3847 = vunpack.c.l.b16 %v2811
        %v3848 = vunpack.c.l.b16 %v2812
        %v3849 = vunpack.c.l.b16 %v2813
        %v3850 = vunpack.c.l.b16 %v2814
        %v3851 = vunpack.c.l.b16 %v2815
        %v3852 = vunpack.c.l.b16 %v2816
        %v3853 = vunpack.c.l.b16 %v2817
        %v3854 = vunpack.c.l.b16 %v2818
        %v3855 = vunpack.c.l.b16 %v2819
        %v3856 = vunpack.c.l.b16 %v2820
        %v3857 = vunpack.c.l.b16 %v2821
        %v3858 = vunpack.c.l.b16 %v2822
        %v3859 = vunpack.c.l.b16 %v2823
        %v3860 = vunpack.c.l.b16 %v2824
        %v3861 = vunpack.c.l.b16 %v2825
        %v3862 = vunpack.c.l.b16 %v2826
        %v3863 = vunpack.c.l.b16 %v2827
        %v3864 = vunpack.c.l.b16 %v2828
        %v3865 = vunpack.c.l.b16 %v2829
        %v3866 = vunpack.c.l.b16 %v2830
        %v3867 = vunpack.c.l.b16 %v2831
        %v3868 = vunpack.c.l.b16 %v2832
        %v3869 = vunpack.c.l.b16 %v2833
        %v3870 = vunpack.c.l.b16 %v2834
        %v3871 = vunpack.c.l.b16 %v2835
        %v3872 = vunpack.c.l.b16 %v2836
        %v3873 = vunpack.c.l.b16 %v2837
        %v3874 = vunpack.c.l.b16 %v2838
        %v3875 = vunpack.c.l.b16 %v2839
        %v3876 = vunpack.c.l.b16 %v2840
        %v3877 = vunpack.c.l.b16 %v2841
        %v3878 = vunpack.c.l.b16 %v2842
        %v3879 = vunpack.c.l.b16 %v2843
        %v3880 = vunpack.c.l.b16 %v2844
        %v3881 = vunpack.c.l.b16 %v2845
        %v3882 = vunpack.c.l.b16 %v2846
        %v3883 = vunpack.c.l.b16 %v2847
        %v3884 = vunpack.c.l.b16 %v2848
        %v3885 = vunpack.c.l.b16 %v2849
        %v3886 = vunpack.c.l.b16 %v2850
        %v3887 = vunpack.c.l.b16 %v2851
        %v3888 = vunpack.c.l.b16 %v2852
        %v3889 = vunpack.c.l.b16 %v2853
        %v3890 = vunpack.c.l.b16 %v2854
        %v3891 = vunpack.c.l.b16 %v2855
        %v3892 = vunpack.c.l.b16 %v2856
        %v3893 = vunpack.c.l.b16 %v2857
        %v3894 = vunpack.c.l.b16 %v2858
        %v3895 = vunpack.c.l.b16 %v2859
        %v3896 = vunpack.c.l.b16 %v2860
        %v3897 = vunpack.c.l.b16 %v2861
        %v3898 = vunpack.c.l.b16 %v2862
        %v3899 = vunpack.c.l.b16 %v2863
        %v3900 = vunpack.c.l.b16 %v2864
        %v3901 = vunpack.c.l.b16 %v2865
        %v3902 = vunpack.c.l.b16 %v2866
        %v3903 = vunpack.c.l.b16 %v2867
        %v3904 = vunpack.c.l.b16 %v2868
        %v3905 = vunpack.c.l.b16 %v2869
        %v3906 = vunpack.c.l.b16 %v2870
        %v3907 = vunpack.c.l.b16 %v2871
        %v3908 = vunpack.c.l.b16 %v2872
        %v3909 = vunpack.c.l.b16 %v2873
        %v3910 = vunpack.c.l.b16 %v2874
        %v3911 = vunpack.c.l.b16 %v2875
        %v3912 = vunpack.c.l.b16 %v2876
        %v3913 = vunpack.c.l.b16 %v2877
        %v3914 = vunpack.c.l.b16 %v2878
        %v3915 = vunpack.c.l.b16 %v2879
        %v3916 = vunpack.c.l.b16 %v2880
        %v3917 = vunpack.c.l.b16 %v2881
        %v3918 = vunpack.c.l.b16 %v2882
        %v3919 = vunpack.c.l.b16 %v2883
        %v3920 = vunpack.c.l.b16 %v2884
        %v3921 = vunpack.c.l.b16 %v2885
        %v3922 = vunpack.c.l.b16 %v2886
        %v3923 = vunpack.c.l.b16 %v2887
        %v3924 = vunpack.c.l.b16 %v2888
        %v3925 = vunpack.c.l.b16 %v2889
        %v3926 = vunpack.c.l.b16 %v2890
        %v3927 = vunpack.c.l.b16 %v2891
        %v3928 = vunpack.c.l.b16 %v2892
        %v3929 = vunpack.c.l.b16 %v2893
        %v3930 = vunpack.c.l.b16 %v2894
        %v3931 = vunpack.c.l.b16 %v2895
        %v3932 = vunpack.c.l.b16 %v2896
        %v3933 = vunpack.c.l.b16 %v2897
        %v3934 = vunpack.c.l.b16 %v2898
        %v3935 = vunpack.c.l.b16 %v2899
        %v3936 = vunpack.c.l.b16 %v2900
        %v3937 = vunpack.c.l.b16 %v2901
        %v3938 = vunpack.c.l.b16 %v2902
        %v3939 = vunpack.c.l.b16 %v2903
        %v3940 = vunpack.c.l.b16 %v2904
        %v3941 = vunpack.c.l.b16 %v2905
        %v3942 = vunpack.c.l.b16 %v2906
        %v3943 = vunpack.c.l.b16 %v2907
        %v3944 = vunpack.c.l.b16 %v2908
        %v3945 = vunpack.c.l.b16 %v2909
        %v3946 = vpack.c.b16 %v3435, %v3434
        %v3947 = vpack.c.b16 %v3437, %v3436
        %v3948 = vpack.c.b16 %v3439, %v3438
        %v3949 = vpack.c.b16 %v3441, %v3440
        %v3950 = vpack.c.b16 %v3443, %v3442
        %v3951 = vpack.c.b16 %v3445, %v3444
        %v3952 = vpack.c.b16 %v3447, %v3446
        %v3953 = vpack.c.b16 %v3449, %v3448
        %v3954 = vpack.c.b16 %v3451, %v3450
        %v3955 = vpack.c.b16 %v3453, %v3452
        %v3956 = vpack.c.b16 %v3455, %v3454
        %v3957 = vpack.c.b16 %v3457, %v3456
        %v3958 = vpack.c.b16 %v3459, %v3458
        %v3959 = vpack.c.b16 %v3461, %v3460
        %v3960 = vpack.c.b16 %v3463, %v3462
        %v3961 = vpack.c.b16 %v3465, %v3464
        %v3962 = vpack.c.b16 %v3467, %v3466
        %v3963 = vpack.c.b16 %v3469, %v3468
        %v3964 = vpack.c.b16 %v3471, %v3470
        %v3965 = vpack.c.b16 %v3473, %v3472
        %v3966 = vpack.c.b16 %v3475, %v3474
        %v3967 = vpack.c.b16 %v3477, %v3476
        %v3968 = vpack.c.b16 %v3479, %v3478
        %v3969 = vpack.c.b16 %v3481, %v3480
        %v3970 = vpack.c.b16 %v3483, %v3482
        %v3971 = vpack.c.b16 %v3485, %v3484
        %v3972 = vpack.c.b16 %v3487, %v3486
        %v3973 = vpack.c.b16 %v3489, %v3488
        %v3974 = vpack.c.b16 %v3491, %v3490
        %v3975 = vpack.c.b16 %v3493, %v3492
        %v3976 = vpack.c.b16 %v3495, %v3494
        %v3977 = vpack.c.b16 %v3497, %v3496
        %v3978 = vpack.c.b16 %v3499, %v3498
        %v3979 = vpack.c.b16 %v3501, %v3500
        %v3980 = vpack.c.b16 %v3503, %v3502
        %v3981 = vpack.c.b16 %v3505, %v3504
        %v3982 = vpack.c.b16 %v3507, %v3506
        %v3983 = vpack.c.b16 %v3509, %v3508
        %v3984 = vpack.c.b16 %v3511, %v3510
        %v3985 = vpack.c.b16 %v3513, %v3512
        %v3986 = vpack.c.b16 %v3515, %v3514
        %v3987 = vpack.c.b16 %v3517, %v3516
        %v3988 = vpack.c.b16 %v3519, %v3518
        %v3989 = vpack.c.b16 %v3521, %v3520
        %v3990 = vpack.c.b16 %v3523, %v3522
        %v3991 = vpack.c.b16 %v3525, %v3524
        %v3992 = vpack.c.b16 %v3527, %v3526
        %v3993 = vpack.c.b16 %v3529, %v3528
        %v3994 = vpack.c.b16 %v3531, %v3530
        %v3995 = vpack.c.b16 %v3533, %v3532
        %v3996 = vpack.c.b16 %v3535, %v3534
        %v3997 = vpack.c.b16 %v3537, %v3536
        %v3998 = vpack.c.b16 %v3539, %v3538
        %v3999 = vpack.c.b16 %v3541, %v3540
        %v4000 = vpack.c.b16 %v3543, %v3542
        %v4001 = vpack.c.b16 %v3545, %v3544
        %v4002 = vpack.c.b16 %v3547, %v3546
        %v4003 = vpack.c.b16 %v3549, %v3548
        %v4004 = vpack.c.b16 %v3551, %v3550
        %v4005 = vpack.c.b16 %v3553, %v3552
        %v4006 = vpack.c.b16 %v3555, %v3554
        %v4007 = vpack.c.b16 %v3557, %v3556
        %v4008 = vpack.c.b16 %v3559, %v3558
        %v4009 = vpack.c.b16 %v3561, %v3560
        %v4010 = vpack.c.b16 %v3563, %v3562
        %v4011 = vpack.c.b16 %v3565, %v3564
        %v4012 = vpack.c.b16 %v3567, %v3566
        %v4013 = vpack.c.b16 %v3569, %v3568
        %v4014 = vpack.c.b16 %v3571, %v3570
        %v4015 = vpack.c.b16 %v3573, %v3572
        %v4016 = vpack.c.b16 %v3575, %v3574
        %v4017 = vpack.c.b16 %v3577, %v3576
        %v4018 = vpack.c.b16 %v3579, %v3578
        %v4019 = vpack.c.b16 %v3581, %v3580
        %v4020 = vpack.c.b16 %v3583, %v3582
        %v4021 = vpack.c.b16 %v3585, %v3584
        %v4022 = vpack.c.b16 %v3587, %v3586
        %v4023 = vpack.c.b16 %v3589, %v3588
        %v4024 = vpack.c.b16 %v3591, %v3590
        %v4025 = vpack.c.b16 %v3593, %v3592
        %v4026 = vpack.c.b16 %v3595, %v3594
        %v4027 = vpack.c.b16 %v3597, %v3596
        %v4028 = vpack.c.b16 %v3599, %v3598
        %v4029 = vpack.c.b16 %v3601, %v3600
        %v4030 = vpack.c.b16 %v3603, %v3602
        %v4031 = vpack.c.b16 %v3605, %v3604
        %v4032 = vpack.c.b16 %v3607, %v3606
        %v4033 = vpack.c.b16 %v3609, %v3608
        %v4034 = vpack.c.b16 %v3611, %v3610
        %v4035 = vpack.c.b16 %v3613, %v3612
        %v4036 = vpack.c.b16 %v3615, %v3614
        %v4037 = vpack.c.b16 %v3617, %v3616
        %v4038 = vpack.c.b16 %v3619, %v3618
        %v4039 = vpack.c.b16 %v3621, %v3620
        %v4040 = vpack.c.b16 %v3623, %v3622
        %v4041 = vpack.c.b16 %v3625, %v3624
        %v4042 = vpack.c.b16 %v3627, %v3626
        %v4043 = vpack.c.b16 %v3629, %v3628
        %v4044 = vpack.c.b16 %v3631, %v3630
        %v4045 = vpack.c.b16 %v3633, %v3632
        %v4046 = vpack.c.b16 %v3635, %v3634
        %v4047 = vpack.c.b16 %v3637, %v3636
        %v4048 = vpack.c.b16 %v3639, %v3638
        %v4049 = vpack.c.b16 %v3641, %v3640
        %v4050 = vpack.c.b16 %v3643, %v3642
        %v4051 = vpack.c.b16 %v3645, %v3644
        %v4052 = vpack.c.b16 %v3647, %v3646
        %v4053 = vpack.c.b16 %v3649, %v3648
        %v4054 = vpack.c.b16 %v3651, %v3650
        %v4055 = vpack.c.b16 %v3653, %v3652
        %v4056 = vpack.c.b16 %v3655, %v3654
        %v4057 = vpack.c.b16 %v3657, %v3656
        %v4058 = vpack.c.b16 %v3659, %v3658
        %v4059 = vpack.c.b16 %v3661, %v3660
        %v4060 = vpack.c.b16 %v3663, %v3662
        %v4061 = vpack.c.b16 %v3665, %v3664
        %v4062 = vpack.c.b16 %v3667, %v3666
        %v4063 = vpack.c.b16 %v3669, %v3668
        %v4064 = vpack.c.b16 %v3671, %v3670
        %v4065 = vpack.c.b16 %v3673, %v3672
        %v4066 = vpack.c.b16 %v3675, %v3674
        %v4067 = vpack.c.b16 %v3677, %v3676
        %v4068 = vpack.c.b16 %v3679, %v3678
        %v4069 = vpack.c.b16 %v3681, %v3680
        %v4070 = vpack.c.b16 %v3683, %v3682
        %v4071 = vpack.c.b16 %v3685, %v3684
        %v4072 = vpack.c.b16 %v3687, %v3686
        %v4073 = vpack.c.b16 %v3689, %v3688
        %v4074 = vpack.c.b16 %v3691, %v3690
        %v4075 = vpack.c.b16 %v3693, %v3692
        %v4076 = vpack.c.b16 %v3695, %v3694
        %v4077 = vpack.c.b16 %v3697, %v3696
        %v4078 = vpack.c.b16 %v3699, %v3698
        %v4079 = vpack.c.b16 %v3701, %v3700
        %v4080 = vpack.c.b16 %v3703, %v3702
        %v4081 = vpack.c.b16 %v3705, %v3704
        %v4082 = vpack.c.b16 %v3707, %v3706
        %v4083 = vpack.c.b16 %v3709, %v3708
        %v4084 = vpack.c.b16 %v3711, %v3710
        %v4085 = vpack.c.b16 %v3713, %v3712
        %v4086 = vpack.c.b16 %v3715, %v3714
        %v4087 = vpack.c.b16 %v3717, %v3716
        %v4088 = vpack.c.b16 %v3719, %v3718
        %v4089 = vpack.c.b16 %v3721, %v3720
        %v4090 = vpack.c.b16 %v3723, %v3722
        %v4091 = vpack.c.b16 %v3725, %v3724
        %v4092 = vpack.c.b16 %v3727, %v3726
        %v4093 = vpack.c.b16 %v3729, %v3728
        %v4094 = vpack.c.b16 %v3731, %v3730
        %v4095 = vpack.c.b16 %v3733, %v3732
        %v4096 = vpack.c.b16 %v3735, %v3734
        %v4097 = vpack.c.b16 %v3737, %v3736
        %v4098 = vpack.c.b16 %v3739, %v3738
        %v4099 = vpack.c.b16 %v3741, %v3740
        %v4100 = vpack.c.b16 %v3743, %v3742
        %v4101 = vpack.c.b16 %v3745, %v3744
        %v4102 = vpack.c.b16 %v3747, %v3746
        %v4103 = vpack.c.b16 %v3749, %v3748
        %v4104 = vpack.c.b16 %v3751, %v3750
        %v4105 = vpack.c.b16 %v3753, %v3752
        %v4106 = vpack.c.b16 %v3755, %v3754
        %v4107 = vpack.c.b16 %v3757, %v3756
        %v4108 = vpack.c.b16 %v3759, %v3758
        %v4109 = vpack.c.b16 %v3761, %v3760
        %v4110 = vpack.c.b16 %v3763, %v3762
        %v4111 = vpack.c.b16 %v3765, %v3764
        %v4112 = vpack.c.b16 %v3767, %v3766
        %v4113 = vpack.c.b16 %v3769, %v3768
        %v4114 = vpack.c.b16 %v3771, %v3770
        %v4115 = vpack.c.b16 %v3773, %v3772
        %v4116 = vpack.c.b16 %v3775, %v3774
        %v4117 = vpack.c.b16 %v3777, %v3776
        %v4118 = vpack.c.b16 %v3779, %v3778
        %v4119 = vpack.c.b16 %v3781, %v3780
        %v4120 = vpack.c.b16 %v3783, %v3782
        %v4121 = vpack.c.b16 %v3785, %v3784
        %v4122 = vpack.c.b16 %v3787, %v3786
        %v4123 = vpack.c.b16 %v3789, %v3788
        %v4124 = vpack.c.b16 %v3791, %v3790
        %v4125 = vpack.c.b16 %v3793, %v3792
        %v4126 = vpack.c.b16 %v3795, %v3794
        %v4127 = vpack.c.b16 %v3797, %v3796
        %v4128 = vpack.c.b16 %v3799, %v3798
        %v4129 = vpack.c.b16 %v3801, %v3800
        %v4130 = vpack.c.b16 %v3803, %v3802
        %v4131 = vpack.c.b16 %v3805, %v3804
        %v4132 = vpack.c.b16 %v3807, %v3806
        %v4133 = vpack.c.b16 %v3809, %v3808
        %v4134 = vpack.c.b16 %v3811, %v3810
        %v4135 = vpack.c.b16 %v3813, %v3812
        %v4136 = vpack.c.b16 %v3815, %v3814
        %v4137 = vpack.c.b16 %v3817, %v3816
        %v4138 = vpack.c.b16 %v3819, %v3818
        %v4139 = vpack.c.b16 %v3821, %v3820
        %v4140 = vpack.c.b16 %v3823, %v3822
        %v4141 = vpack.c.b16 %v3825, %v3824
        %v4142 = vpack.c.b16 %v3827, %v3826
        %v4143 = vpack.c.b16 %v3829, %v3828
        %v4144 = vpack.c.b16 %v3831, %v3830
        %v4145 = vpack.c.b16 %v3833, %v3832
        %v4146 = vpack.c.b16 %v3835, %v3834
        %v4147 = vpack.c.b16 %v3837, %v3836
        %v4148 = vpack.c.b16 %v3839, %v3838
        %v4149 = vpack.c.b16 %v3841, %v3840
        %v4150 = vpack.c.b16 %v3843, %v3842
        %v4151 = vpack.c.b16 %v3845, %v3844
        %v4152 = vpack.c.b16 %v3847, %v3846
        %v4153 = vpack.c.b16 %v3849, %v3848
        %v4154 = vpack.c.b16 %v3851, %v3850
        %v4155 = vpack.c.b16 %v3853, %v3852
        %v4156 = vpack.c.b16 %v3855, %v3854
        %v4157 = vpack.c.b16 %v3857, %v3856
        %v4158 = vpack.c.b16 %v3859, %v3858
        %v4159 = vpack.c.b16 %v3861, %v3860
        %v4160 = vpack.c.b16 %v3863, %v3862
        %v4161 = vpack.c.b16 %v3865, %v3864
        %v4162 = vpack.c.b16 %v3867, %v3866
        %v4163 = vpack.c.b16 %v3869, %v3868
        %v4164 = vpack.c.b16 %v3871, %v3870
        %v4165 = vpack.c.b16 %v3873, %v3872
        %v4166 = vpack.c.b16 %v3875, %v3874
        %v4167 = vpack.c.b16 %v3877, %v3876
        %v4168 = vpack.c.b16 %v3879, %v3878
        %v4169 = vpack.c.b16 %v3881, %v3880
        %v4170 = vpack.c.b16 %v3883, %v3882
        %v4171 = vpack.c.b16 %v3885, %v3884
        %v4172 = vpack.c.b16 %v3887, %v3886
        %v4173 = vpack.c.b16 %v3889, %v3888
        %v4174 = vpack.c.b16 %v3891, %v3890
        %v4175 = vpack.c.b16 %v3893, %v3892
        %v4176 = vpack.c.b16 %v3895, %v3894
        %v4177 = vpack.c.b16 %v3897, %v3896
        %v4178 = vpack.c.b16 %v3899, %v3898
        %v4179 = vpack.c.b16 %v3901, %v3900
        %v4180 = vpack.c.b16 %v3903, %v3902
        %v4181 = vpack.c.b16 %v3905, %v3904
        %v4182 = vpack.c.b16 %v3907, %v3906
        %v4183 = vpack.c.b16 %v3909, %v3908
        %v4184 = vpack.c.b16 %v3911, %v3910
        %v4185 = vpack.c.b16 %v3913, %v3912
        %v4186 = vpack.c.b16 %v3915, %v3914
        %v4187 = vpack.c.b16 %v3917, %v3916
        %v4188 = vpack.c.b16 %v3919, %v3918
        %v4189 = vpack.c.b16 %v3921, %v3920
        %v4190 = vpack.c.b16 %v3923, %v3922
        %v4191 = vpack.c.b16 %v3925, %v3924
        %v4192 = vpack.c.b16 %v3927, %v3926
        %v4193 = vpack.c.b16 %v3929, %v3928
        %v4194 = vpack.c.b16 %v3931, %v3930
        %v4195 = vpack.c.b16 %v3933, %v3932
        %v4196 = vpack.c.b16 %v3935, %v3934
        %v4197 = vpack.c.b16 %v3937, %v3936
        %v4198 = vpack.c.b16 %v3939, %v3938
        %v4199 = vpack.c.b16 %v3941, %v3940
        %v4200 = vpack.c.b16 %v3943, %v3942
        %v4201 = vpack.c.b16 %v3945, %v3944
        %4458 = vmatpush.bf16.msra.mxu0 %v3953
        %4459 = vmatpush.bf16.msra.mxu0 %v3952
        %4460 = vmatpush.bf16.msra.mxu0 %v3951
        %4461 = vmatpush.bf16.msra.mxu0 %v3950
        %4462 = vmatpush.bf16.msra.mxu0 %v3949
        %4463 = vmatpush.bf16.msra.mxu0 %v3948
        %4464 = vmatpush.bf16.msra.mxu0 %v3947
        %4465 = vmatpush.bf16.msra.mxu0 %v3946
        %4466 = vmatmul.bf16.gmra.mxu0 %v1090
        %v4467 = vpop.f32.mrf.mxu0
        %v4468 = vadd.f32 %v2914, %v4467
        %v4469 = vpop.f32.mrf.mxu0
        %v4470 = vadd.f32 %v2915, %v4469
        %4471 = vmatmul.bf16.gmra.mxu0 %v1122
        %v4472 = vpop.f32.mrf.mxu0
        %v4473 = vadd.f32 %v2916, %v4472
        %v4474 = vpop.f32.mrf.mxu0
        %v4475 = vadd.f32 %v2917, %v4474
        %4476 = vmatmul.bf16.gmra.mxu0 %v1154
        %v4477 = vpop.f32.mrf.mxu0
        %v4478 = vadd.f32 %v2918, %v4477
        %v4479 = vpop.f32.mrf.mxu0
        %v4480 = vadd.f32 %v2919, %v4479
        %4481 = vmatmul.bf16.gmra.mxu0 %v1186
        %v4482 = vpop.f32.mrf.mxu0
        %v4483 = vadd.f32 %v2920, %v4482
        %v4484 = vpop.f32.mrf.mxu0
        %v4485 = vadd.f32 %v2921, %v4484
        %4486 = vdwg.mxu0
        %4487 = vmatpush.bf16.msra.mxu0 %v3961
        %4488 = vmatpush.bf16.msra.mxu0 %v3960
        %4489 = vmatpush.bf16.msra.mxu0 %v3959
        %4490 = vmatpush.bf16.msra.mxu0 %v3958
        %4491 = vmatpush.bf16.msra.mxu0 %v3957
        %4492 = vmatpush.bf16.msra.mxu0 %v3956
        %4493 = vmatpush.bf16.msra.mxu0 %v3955
        %4494 = vmatpush.bf16.msra.mxu0 %v3954
        %4495 = vmatmul.bf16.gmra.mxu0 %v1091
        %v4496 = vpop.f32.mrf.mxu0
        %v4497 = vadd.f32 %v4468, %v4496
        %v4498 = vpop.f32.mrf.mxu0
        %v4499 = vadd.f32 %v4470, %v4498
        %4500 = vmatmul.bf16.gmra.mxu0 %v1123
        %v4501 = vpop.f32.mrf.mxu0
        %v4502 = vadd.f32 %v4473, %v4501
        %v4503 = vpop.f32.mrf.mxu0
        %v4504 = vadd.f32 %v4475, %v4503
        %4505 = vmatmul.bf16.gmra.mxu0 %v1155
        %v4506 = vpop.f32.mrf.mxu0
        %v4507 = vadd.f32 %v4478, %v4506
        %v4508 = vpop.f32.mrf.mxu0
        %v4509 = vadd.f32 %v4480, %v4508
        %4510 = vmatmul.bf16.gmra.mxu0 %v1187
        %v4511 = vpop.f32.mrf.mxu0
        %v4512 = vadd.f32 %v4483, %v4511
        %v4513 = vpop.f32.mrf.mxu0
        %v4514 = vadd.f32 %v4485, %v4513
        %4515 = vdwg.mxu0
        %4516 = vmatpush.bf16.msra.mxu0 %v3969
        %4517 = vmatpush.bf16.msra.mxu0 %v3968
        %4518 = vmatpush.bf16.msra.mxu0 %v3967
        %4519 = vmatpush.bf16.msra.mxu0 %v3966
        %4520 = vmatpush.bf16.msra.mxu0 %v3965
        %4521 = vmatpush.bf16.msra.mxu0 %v3964
        %4522 = vmatpush.bf16.msra.mxu0 %v3963
        %4523 = vmatpush.bf16.msra.mxu0 %v3962
        %4524 = vmatmul.bf16.gmra.mxu0 %v1092
        %v4525 = vpop.f32.mrf.mxu0
        %v4526 = vadd.f32 %v4497, %v4525
        %v4527 = vpop.f32.mrf.mxu0
        %v4528 = vadd.f32 %v4499, %v4527
        %4529 = vmatmul.bf16.gmra.mxu0 %v1124
        %v4530 = vpop.f32.mrf.mxu0
        %v4531 = vadd.f32 %v4502, %v4530
        %v4532 = vpop.f32.mrf.mxu0
        %v4533 = vadd.f32 %v4504, %v4532
        %4534 = vmatmul.bf16.gmra.mxu0 %v1156
        %v4535 = vpop.f32.mrf.mxu0
        %v4536 = vadd.f32 %v4507, %v4535
        %v4537 = vpop.f32.mrf.mxu0
        %v4538 = vadd.f32 %v4509, %v4537
        %4539 = vmatmul.bf16.gmra.mxu0 %v1188
        %v4540 = vpop.f32.mrf.mxu0
        %v4541 = vadd.f32 %v4512, %v4540
        %v4542 = vpop.f32.mrf.mxu0
        %v4543 = vadd.f32 %v4514, %v4542
        %4544 = vdwg.mxu0
        %4545 = vmatpush.bf16.msra.mxu0 %v3977
        %4546 = vmatpush.bf16.msra.mxu0 %v3976
        %4547 = vmatpush.bf16.msra.mxu0 %v3975
        %4548 = vmatpush.bf16.msra.mxu0 %v3974
        %4549 = vmatpush.bf16.msra.mxu0 %v3973
        %4550 = vmatpush.bf16.msra.mxu0 %v3972
        %4551 = vmatpush.bf16.msra.mxu0 %v3971
        %4552 = vmatpush.bf16.msra.mxu0 %v3970
        %4553 = vmatmul.bf16.gmra.mxu0 %v1093
        %v4554 = vpop.f32.mrf.mxu0
        %v4555 = vadd.f32 %v4526, %v4554
        %v4556 = vpop.f32.mrf.mxu0
        %v4557 = vadd.f32 %v4528, %v4556
        %4558 = vmatmul.bf16.gmra.mxu0 %v1125
        %v4559 = vpop.f32.mrf.mxu0
        %v4560 = vadd.f32 %v4531, %v4559
        %v4561 = vpop.f32.mrf.mxu0
        %v4562 = vadd.f32 %v4533, %v4561
        %4563 = vmatmul.bf16.gmra.mxu0 %v1157
        %v4564 = vpop.f32.mrf.mxu0
        %v4565 = vadd.f32 %v4536, %v4564
        %v4566 = vpop.f32.mrf.mxu0
        %v4567 = vadd.f32 %v4538, %v4566
        %4568 = vmatmul.bf16.gmra.mxu0 %v1189
        %v4569 = vpop.f32.mrf.mxu0
        %v4570 = vadd.f32 %v4541, %v4569
        %v4571 = vpop.f32.mrf.mxu0
        %v4572 = vadd.f32 %v4543, %v4571
        %4573 = vdwg.mxu0
        %4574 = vmatpush.bf16.msra.mxu0 %v3985
        %4575 = vmatpush.bf16.msra.mxu0 %v3984
        %4576 = vmatpush.bf16.msra.mxu0 %v3983
        %4577 = vmatpush.bf16.msra.mxu0 %v3982
        %4578 = vmatpush.bf16.msra.mxu0 %v3981
        %4579 = vmatpush.bf16.msra.mxu0 %v3980
        %4580 = vmatpush.bf16.msra.mxu0 %v3979
        %4581 = vmatpush.bf16.msra.mxu0 %v3978
        %4582 = vmatmul.bf16.gmra.mxu0 %v1094
        %v4583 = vpop.f32.mrf.mxu0
        %v4584 = vadd.f32 %v4555, %v4583
        %v4585 = vpop.f32.mrf.mxu0
        %v4586 = vadd.f32 %v4557, %v4585
        %4587 = vmatmul.bf16.gmra.mxu0 %v1126
        %v4588 = vpop.f32.mrf.mxu0
        %v4589 = vadd.f32 %v4560, %v4588
        %v4590 = vpop.f32.mrf.mxu0
        %v4591 = vadd.f32 %v4562, %v4590
        %4592 = vmatmul.bf16.gmra.mxu0 %v1158
        %v4593 = vpop.f32.mrf.mxu0
        %v4594 = vadd.f32 %v4565, %v4593
        %v4595 = vpop.f32.mrf.mxu0
        %v4596 = vadd.f32 %v4567, %v4595
        %4597 = vmatmul.bf16.gmra.mxu0 %v1190
        %v4598 = vpop.f32.mrf.mxu0
        %v4599 = vadd.f32 %v4570, %v4598
        %v4600 = vpop.f32.mrf.mxu0
        %v4601 = vadd.f32 %v4572, %v4600
        %4602 = vdwg.mxu0
        %4603 = vmatpush.bf16.msra.mxu0 %v3993
        %4604 = vmatpush.bf16.msra.mxu0 %v3992
        %4605 = vmatpush.bf16.msra.mxu0 %v3991
        %4606 = vmatpush.bf16.msra.mxu0 %v3990
        %4607 = vmatpush.bf16.msra.mxu0 %v3989
        %4608 = vmatpush.bf16.msra.mxu0 %v3988
        %4609 = vmatpush.bf16.msra.mxu0 %v3987
        %4610 = vmatpush.bf16.msra.mxu0 %v3986
        %4611 = vmatmul.bf16.gmra.mxu0 %v1095
        %v4612 = vpop.f32.mrf.mxu0
        %v4613 = vadd.f32 %v4584, %v4612
        %v4614 = vpop.f32.mrf.mxu0
        %v4615 = vadd.f32 %v4586, %v4614
        %4616 = vmatmul.bf16.gmra.mxu0 %v1127
        %v4617 = vpop.f32.mrf.mxu0
        %v4618 = vadd.f32 %v4589, %v4617
        %v4619 = vpop.f32.mrf.mxu0
        %v4620 = vadd.f32 %v4591, %v4619
        %4621 = vmatmul.bf16.gmra.mxu0 %v1159
        %v4622 = vpop.f32.mrf.mxu0
        %v4623 = vadd.f32 %v4594, %v4622
        %v4624 = vpop.f32.mrf.mxu0
        %v4625 = vadd.f32 %v4596, %v4624
        %4626 = vmatmul.bf16.gmra.mxu0 %v1191
        %v4627 = vpop.f32.mrf.mxu0
        %v4628 = vadd.f32 %v4599, %v4627
        %v4629 = vpop.f32.mrf.mxu0
        %v4630 = vadd.f32 %v4601, %v4629
        %4631 = vdwg.mxu0
        %4632 = vmatpush.bf16.msra.mxu0 %v4001
        %4633 = vmatpush.bf16.msra.mxu0 %v4000
        %4634 = vmatpush.bf16.msra.mxu0 %v3999
        %4635 = vmatpush.bf16.msra.mxu0 %v3998
        %4636 = vmatpush.bf16.msra.mxu0 %v3997
        %4637 = vmatpush.bf16.msra.mxu0 %v3996
        %4638 = vmatpush.bf16.msra.mxu0 %v3995
        %4639 = vmatpush.bf16.msra.mxu0 %v3994
        %4640 = vmatmul.bf16.gmra.mxu0 %v1096
        %v4641 = vpop.f32.mrf.mxu0
        %v4642 = vadd.f32 %v4613, %v4641
        %v4643 = vpop.f32.mrf.mxu0
        %v4644 = vadd.f32 %v4615, %v4643
        %4645 = vmatmul.bf16.gmra.mxu0 %v1128
        %v4646 = vpop.f32.mrf.mxu0
        %v4647 = vadd.f32 %v4618, %v4646
        %v4648 = vpop.f32.mrf.mxu0
        %v4649 = vadd.f32 %v4620, %v4648
        %4650 = vmatmul.bf16.gmra.mxu0 %v1160
        %v4651 = vpop.f32.mrf.mxu0
        %v4652 = vadd.f32 %v4623, %v4651
        %v4653 = vpop.f32.mrf.mxu0
        %v4654 = vadd.f32 %v4625, %v4653
        %4655 = vmatmul.bf16.gmra.mxu0 %v1192
        %v4656 = vpop.f32.mrf.mxu0
        %v4657 = vadd.f32 %v4628, %v4656
        %v4658 = vpop.f32.mrf.mxu0
        %v4659 = vadd.f32 %v4630, %v4658
        %4660 = vdwg.mxu0
        %4661 = vmatpush.bf16.msra.mxu0 %v4009
        %4662 = vmatpush.bf16.msra.mxu0 %v4008
        %4663 = vmatpush.bf16.msra.mxu0 %v4007
        %4664 = vmatpush.bf16.msra.mxu0 %v4006
        %4665 = vmatpush.bf16.msra.mxu0 %v4005
        %4666 = vmatpush.bf16.msra.mxu0 %v4004
        %4667 = vmatpush.bf16.msra.mxu0 %v4003
        %4668 = vmatpush.bf16.msra.mxu0 %v4002
        %4669 = vmatmul.bf16.gmra.mxu0 %v1097
        %v4670 = vpop.f32.mrf.mxu0
        %v4671 = vadd.f32 %v4642, %v4670
        %v4672 = vpop.f32.mrf.mxu0
        %v4673 = vadd.f32 %v4644, %v4672
        %4674 = vmatmul.bf16.gmra.mxu0 %v1129
        %v4675 = vpop.f32.mrf.mxu0
        %v4676 = vadd.f32 %v4647, %v4675
        %v4677 = vpop.f32.mrf.mxu0
        %v4678 = vadd.f32 %v4649, %v4677
        %4679 = vmatmul.bf16.gmra.mxu0 %v1161
        %v4680 = vpop.f32.mrf.mxu0
        %v4681 = vadd.f32 %v4652, %v4680
        %v4682 = vpop.f32.mrf.mxu0
        %v4683 = vadd.f32 %v4654, %v4682
        %4684 = vmatmul.bf16.gmra.mxu0 %v1193
        %v4685 = vpop.f32.mrf.mxu0
        %v4686 = vadd.f32 %v4657, %v4685
        %v4687 = vpop.f32.mrf.mxu0
        %v4688 = vadd.f32 %v4659, %v4687
        %4689 = vdwg.mxu0
        %4690 = vmatpush.bf16.msra.mxu0 %v4017
        %4691 = vmatpush.bf16.msra.mxu0 %v4016
        %4692 = vmatpush.bf16.msra.mxu0 %v4015
        %4693 = vmatpush.bf16.msra.mxu0 %v4014
        %4694 = vmatpush.bf16.msra.mxu0 %v4013
        %4695 = vmatpush.bf16.msra.mxu0 %v4012
        %4696 = vmatpush.bf16.msra.mxu0 %v4011
        %4697 = vmatpush.bf16.msra.mxu0 %v4010
        %4698 = vmatmul.bf16.gmra.mxu0 %v1098
        %v4699 = vpop.f32.mrf.mxu0
        %v4700 = vadd.f32 %v4671, %v4699
        %v4701 = vpop.f32.mrf.mxu0
        %v4702 = vadd.f32 %v4673, %v4701
        %4703 = vmatmul.bf16.gmra.mxu0 %v1130
        %v4704 = vpop.f32.mrf.mxu0
        %v4705 = vadd.f32 %v4676, %v4704
        %v4706 = vpop.f32.mrf.mxu0
        %v4707 = vadd.f32 %v4678, %v4706
        %4708 = vmatmul.bf16.gmra.mxu0 %v1162
        %v4709 = vpop.f32.mrf.mxu0
        %v4710 = vadd.f32 %v4681, %v4709
        %v4711 = vpop.f32.mrf.mxu0
        %v4712 = vadd.f32 %v4683, %v4711
        %4713 = vmatmul.bf16.gmra.mxu0 %v1194
        %v4714 = vpop.f32.mrf.mxu0
        %v4715 = vadd.f32 %v4686, %v4714
        %v4716 = vpop.f32.mrf.mxu0
        %v4717 = vadd.f32 %v4688, %v4716
        %4718 = vdwg.mxu0
        %4719 = vmatpush.bf16.msra.mxu0 %v4025
        %4720 = vmatpush.bf16.msra.mxu0 %v4024
        %4721 = vmatpush.bf16.msra.mxu0 %v4023
        %4722 = vmatpush.bf16.msra.mxu0 %v4022
        %4723 = vmatpush.bf16.msra.mxu0 %v4021
        %4724 = vmatpush.bf16.msra.mxu0 %v4020
        %4725 = vmatpush.bf16.msra.mxu0 %v4019
        %4726 = vmatpush.bf16.msra.mxu0 %v4018
        %4727 = vmatmul.bf16.gmra.mxu0 %v1099
        %v4728 = vpop.f32.mrf.mxu0
        %v4729 = vadd.f32 %v4700, %v4728
        %v4730 = vpop.f32.mrf.mxu0
        %v4731 = vadd.f32 %v4702, %v4730
        %4732 = vmatmul.bf16.gmra.mxu0 %v1131
        %v4733 = vpop.f32.mrf.mxu0
        %v4734 = vadd.f32 %v4705, %v4733
        %v4735 = vpop.f32.mrf.mxu0
        %v4736 = vadd.f32 %v4707, %v4735
        %4737 = vmatmul.bf16.gmra.mxu0 %v1163
        %v4738 = vpop.f32.mrf.mxu0
        %v4739 = vadd.f32 %v4710, %v4738
        %v4740 = vpop.f32.mrf.mxu0
        %v4741 = vadd.f32 %v4712, %v4740
        %4742 = vmatmul.bf16.gmra.mxu0 %v1195
        %v4743 = vpop.f32.mrf.mxu0
        %v4744 = vadd.f32 %v4715, %v4743
        %v4745 = vpop.f32.mrf.mxu0
        %v4746 = vadd.f32 %v4717, %v4745
        %4747 = vdwg.mxu0
        %4748 = vmatpush.bf16.msra.mxu0 %v4033
        %4749 = vmatpush.bf16.msra.mxu0 %v4032
        %4750 = vmatpush.bf16.msra.mxu0 %v4031
        %4751 = vmatpush.bf16.msra.mxu0 %v4030
        %4752 = vmatpush.bf16.msra.mxu0 %v4029
        %4753 = vmatpush.bf16.msra.mxu0 %v4028
        %4754 = vmatpush.bf16.msra.mxu0 %v4027
        %4755 = vmatpush.bf16.msra.mxu0 %v4026
        %4756 = vmatmul.bf16.gmra.mxu0 %v1100
        %v4757 = vpop.f32.mrf.mxu0
        %v4758 = vadd.f32 %v4729, %v4757
        %v4759 = vpop.f32.mrf.mxu0
        %v4760 = vadd.f32 %v4731, %v4759
        %4761 = vmatmul.bf16.gmra.mxu0 %v1132
        %v4762 = vpop.f32.mrf.mxu0
        %v4763 = vadd.f32 %v4734, %v4762
        %v4764 = vpop.f32.mrf.mxu0
        %v4765 = vadd.f32 %v4736, %v4764
        %4766 = vmatmul.bf16.gmra.mxu0 %v1164
        %v4767 = vpop.f32.mrf.mxu0
        %v4768 = vadd.f32 %v4739, %v4767
        %v4769 = vpop.f32.mrf.mxu0
        %v4770 = vadd.f32 %v4741, %v4769
        %4771 = vmatmul.bf16.gmra.mxu0 %v1196
        %v4772 = vpop.f32.mrf.mxu0
        %v4773 = vadd.f32 %v4744, %v4772
        %v4774 = vpop.f32.mrf.mxu0
        %v4775 = vadd.f32 %v4746, %v4774
        %4776 = vdwg.mxu0
        %4777 = vmatpush.bf16.msra.mxu0 %v4041
        %4778 = vmatpush.bf16.msra.mxu0 %v4040
        %4779 = vmatpush.bf16.msra.mxu0 %v4039
        %4780 = vmatpush.bf16.msra.mxu0 %v4038
        %4781 = vmatpush.bf16.msra.mxu0 %v4037
        %4782 = vmatpush.bf16.msra.mxu0 %v4036
        %4783 = vmatpush.bf16.msra.mxu0 %v4035
        %4784 = vmatpush.bf16.msra.mxu0 %v4034
        %4785 = vmatmul.bf16.gmra.mxu0 %v1101
        %v4786 = vpop.f32.mrf.mxu0
        %v4787 = vadd.f32 %v4758, %v4786
        %v4788 = vpop.f32.mrf.mxu0
        %v4789 = vadd.f32 %v4760, %v4788
        %4790 = vmatmul.bf16.gmra.mxu0 %v1133
        %v4791 = vpop.f32.mrf.mxu0
        %v4792 = vadd.f32 %v4763, %v4791
        %v4793 = vpop.f32.mrf.mxu0
        %v4794 = vadd.f32 %v4765, %v4793
        %4795 = vmatmul.bf16.gmra.mxu0 %v1165
        %v4796 = vpop.f32.mrf.mxu0
        %v4797 = vadd.f32 %v4768, %v4796
        %v4798 = vpop.f32.mrf.mxu0
        %v4799 = vadd.f32 %v4770, %v4798
        %4800 = vmatmul.bf16.gmra.mxu0 %v1197
        %v4801 = vpop.f32.mrf.mxu0
        %v4802 = vadd.f32 %v4773, %v4801
        %v4803 = vpop.f32.mrf.mxu0
        %v4804 = vadd.f32 %v4775, %v4803
        %4805 = vdwg.mxu0
        %4806 = vmatpush.bf16.msra.mxu0 %v4049
        %4807 = vmatpush.bf16.msra.mxu0 %v4048
        %4808 = vmatpush.bf16.msra.mxu0 %v4047
        %4809 = vmatpush.bf16.msra.mxu0 %v4046
        %4810 = vmatpush.bf16.msra.mxu0 %v4045
        %4811 = vmatpush.bf16.msra.mxu0 %v4044
        %4812 = vmatpush.bf16.msra.mxu0 %v4043
        %4813 = vmatpush.bf16.msra.mxu0 %v4042
        %4814 = vmatmul.bf16.gmra.mxu0 %v1102
        %v4815 = vpop.f32.mrf.mxu0
        %v4816 = vadd.f32 %v4787, %v4815
        %v4817 = vpop.f32.mrf.mxu0
        %v4818 = vadd.f32 %v4789, %v4817
        %4819 = vmatmul.bf16.gmra.mxu0 %v1134
        %v4820 = vpop.f32.mrf.mxu0
        %v4821 = vadd.f32 %v4792, %v4820
        %v4822 = vpop.f32.mrf.mxu0
        %v4823 = vadd.f32 %v4794, %v4822
        %4824 = vmatmul.bf16.gmra.mxu0 %v1166
        %v4825 = vpop.f32.mrf.mxu0
        %v4826 = vadd.f32 %v4797, %v4825
        %v4827 = vpop.f32.mrf.mxu0
        %v4828 = vadd.f32 %v4799, %v4827
        %4829 = vmatmul.bf16.gmra.mxu0 %v1198
        %v4830 = vpop.f32.mrf.mxu0
        %v4831 = vadd.f32 %v4802, %v4830
        %v4832 = vpop.f32.mrf.mxu0
        %v4833 = vadd.f32 %v4804, %v4832
        %4834 = vdwg.mxu0
        %4835 = vmatpush.bf16.msra.mxu0 %v4057
        %4836 = vmatpush.bf16.msra.mxu0 %v4056
        %4837 = vmatpush.bf16.msra.mxu0 %v4055
        %4838 = vmatpush.bf16.msra.mxu0 %v4054
        %4839 = vmatpush.bf16.msra.mxu0 %v4053
        %4840 = vmatpush.bf16.msra.mxu0 %v4052
        %4841 = vmatpush.bf16.msra.mxu0 %v4051
        %4842 = vmatpush.bf16.msra.mxu0 %v4050
        %4843 = vmatmul.bf16.gmra.mxu0 %v1103
        %v4844 = vpop.f32.mrf.mxu0
        %v4845 = vadd.f32 %v4816, %v4844
        %v4846 = vpop.f32.mrf.mxu0
        %v4847 = vadd.f32 %v4818, %v4846
        %4848 = vmatmul.bf16.gmra.mxu0 %v1135
        %v4849 = vpop.f32.mrf.mxu0
        %v4850 = vadd.f32 %v4821, %v4849
        %v4851 = vpop.f32.mrf.mxu0
        %v4852 = vadd.f32 %v4823, %v4851
        %4853 = vmatmul.bf16.gmra.mxu0 %v1167
        %v4854 = vpop.f32.mrf.mxu0
        %v4855 = vadd.f32 %v4826, %v4854
        %v4856 = vpop.f32.mrf.mxu0
        %v4857 = vadd.f32 %v4828, %v4856
        %4858 = vmatmul.bf16.gmra.mxu0 %v1199
        %v4859 = vpop.f32.mrf.mxu0
        %v4860 = vadd.f32 %v4831, %v4859
        %v4861 = vpop.f32.mrf.mxu0
        %v4862 = vadd.f32 %v4833, %v4861
        %4863 = vdwg.mxu0
        %4864 = vmatpush.bf16.msra.mxu0 %v4065
        %4865 = vmatpush.bf16.msra.mxu0 %v4064
        %4866 = vmatpush.bf16.msra.mxu0 %v4063
        %4867 = vmatpush.bf16.msra.mxu0 %v4062
        %4868 = vmatpush.bf16.msra.mxu0 %v4061
        %4869 = vmatpush.bf16.msra.mxu0 %v4060
        %4870 = vmatpush.bf16.msra.mxu0 %v4059
        %4871 = vmatpush.bf16.msra.mxu0 %v4058
        %4872 = vmatmul.bf16.gmra.mxu0 %v1104
        %v4873 = vpop.f32.mrf.mxu0
        %v4874 = vadd.f32 %v4845, %v4873
        %v4875 = vpop.f32.mrf.mxu0
        %v4876 = vadd.f32 %v4847, %v4875
        %4877 = vmatmul.bf16.gmra.mxu0 %v1136
        %v4878 = vpop.f32.mrf.mxu0
        %v4879 = vadd.f32 %v4850, %v4878
        %v4880 = vpop.f32.mrf.mxu0
        %v4881 = vadd.f32 %v4852, %v4880
        %4882 = vmatmul.bf16.gmra.mxu0 %v1168
        %v4883 = vpop.f32.mrf.mxu0
        %v4884 = vadd.f32 %v4855, %v4883
        %v4885 = vpop.f32.mrf.mxu0
        %v4886 = vadd.f32 %v4857, %v4885
        %4887 = vmatmul.bf16.gmra.mxu0 %v1200
        %v4888 = vpop.f32.mrf.mxu0
        %v4889 = vadd.f32 %v4860, %v4888
        %v4890 = vpop.f32.mrf.mxu0
        %v4891 = vadd.f32 %v4862, %v4890
        %4892 = vdwg.mxu0
        %4893 = vmatpush.bf16.msra.mxu0 %v4073
        %4894 = vmatpush.bf16.msra.mxu0 %v4072
        %4895 = vmatpush.bf16.msra.mxu0 %v4071
        %4896 = vmatpush.bf16.msra.mxu0 %v4070
        %4897 = vmatpush.bf16.msra.mxu0 %v4069
        %4898 = vmatpush.bf16.msra.mxu0 %v4068
        %4899 = vmatpush.bf16.msra.mxu0 %v4067
        %4900 = vmatpush.bf16.msra.mxu0 %v4066
        %4901 = vmatmul.bf16.gmra.mxu0 %v1105
        %v4902 = vpop.f32.mrf.mxu0
        %v4903 = vadd.f32 %v4874, %v4902
        %v4904 = vpop.f32.mrf.mxu0
        %v4905 = vadd.f32 %v4876, %v4904
        %4906 = vmatmul.bf16.gmra.mxu0 %v1137
        %v4907 = vpop.f32.mrf.mxu0
        %v4908 = vadd.f32 %v4879, %v4907
        %v4909 = vpop.f32.mrf.mxu0
        %v4910 = vadd.f32 %v4881, %v4909
        %4911 = vmatmul.bf16.gmra.mxu0 %v1169
        %v4912 = vpop.f32.mrf.mxu0
        %v4913 = vadd.f32 %v4884, %v4912
        %v4914 = vpop.f32.mrf.mxu0
        %v4915 = vadd.f32 %v4886, %v4914
        %4916 = vmatmul.bf16.gmra.mxu0 %v1201
        %v4917 = vpop.f32.mrf.mxu0
        %v4918 = vadd.f32 %v4889, %v4917
        %v4919 = vpop.f32.mrf.mxu0
        %v4920 = vadd.f32 %v4891, %v4919
        %4921 = vdwg.mxu0
        %4922 = vmatpush.bf16.msra.mxu0 %v4081
        %4923 = vmatpush.bf16.msra.mxu0 %v4080
        %4924 = vmatpush.bf16.msra.mxu0 %v4079
        %4925 = vmatpush.bf16.msra.mxu0 %v4078
        %4926 = vmatpush.bf16.msra.mxu0 %v4077
        %4927 = vmatpush.bf16.msra.mxu0 %v4076
        %4928 = vmatpush.bf16.msra.mxu0 %v4075
        %4929 = vmatpush.bf16.msra.mxu0 %v4074
        %4930 = vmatmul.bf16.gmra.mxu0 %v1106
        %v4931 = vpop.f32.mrf.mxu0
        %v4932 = vadd.f32 %v4903, %v4931
        %v4933 = vpop.f32.mrf.mxu0
        %v4934 = vadd.f32 %v4905, %v4933
        %4935 = vmatmul.bf16.gmra.mxu0 %v1138
        %v4936 = vpop.f32.mrf.mxu0
        %v4937 = vadd.f32 %v4908, %v4936
        %v4938 = vpop.f32.mrf.mxu0
        %v4939 = vadd.f32 %v4910, %v4938
        %4940 = vmatmul.bf16.gmra.mxu0 %v1170
        %v4941 = vpop.f32.mrf.mxu0
        %v4942 = vadd.f32 %v4913, %v4941
        %v4943 = vpop.f32.mrf.mxu0
        %v4944 = vadd.f32 %v4915, %v4943
        %4945 = vmatmul.bf16.gmra.mxu0 %v1202
        %v4946 = vpop.f32.mrf.mxu0
        %v4947 = vadd.f32 %v4918, %v4946
        %v4948 = vpop.f32.mrf.mxu0
        %v4949 = vadd.f32 %v4920, %v4948
        %4950 = vdwg.mxu0
        %4951 = vmatpush.bf16.msra.mxu0 %v4089
        %4952 = vmatpush.bf16.msra.mxu0 %v4088
        %4953 = vmatpush.bf16.msra.mxu0 %v4087
        %4954 = vmatpush.bf16.msra.mxu0 %v4086
        %4955 = vmatpush.bf16.msra.mxu0 %v4085
        %4956 = vmatpush.bf16.msra.mxu0 %v4084
        %4957 = vmatpush.bf16.msra.mxu0 %v4083
        %4958 = vmatpush.bf16.msra.mxu0 %v4082
        %4959 = vmatmul.bf16.gmra.mxu0 %v1107
        %v4960 = vpop.f32.mrf.mxu0
        %v4961 = vadd.f32 %v4932, %v4960
        %v4962 = vpop.f32.mrf.mxu0
        %v4963 = vadd.f32 %v4934, %v4962
        %4964 = vmatmul.bf16.gmra.mxu0 %v1139
        %v4965 = vpop.f32.mrf.mxu0
        %v4966 = vadd.f32 %v4937, %v4965
        %v4967 = vpop.f32.mrf.mxu0
        %v4968 = vadd.f32 %v4939, %v4967
        %4969 = vmatmul.bf16.gmra.mxu0 %v1171
        %v4970 = vpop.f32.mrf.mxu0
        %v4971 = vadd.f32 %v4942, %v4970
        %v4972 = vpop.f32.mrf.mxu0
        %v4973 = vadd.f32 %v4944, %v4972
        %4974 = vmatmul.bf16.gmra.mxu0 %v1203
        %v4975 = vpop.f32.mrf.mxu0
        %v4976 = vadd.f32 %v4947, %v4975
        %v4977 = vpop.f32.mrf.mxu0
        %v4978 = vadd.f32 %v4949, %v4977
        %4979 = vdwg.mxu0
        %4980 = vmatpush.bf16.msra.mxu0 %v4097
        %4981 = vmatpush.bf16.msra.mxu0 %v4096
        %4982 = vmatpush.bf16.msra.mxu0 %v4095
        %4983 = vmatpush.bf16.msra.mxu0 %v4094
        %4984 = vmatpush.bf16.msra.mxu0 %v4093
        %4985 = vmatpush.bf16.msra.mxu0 %v4092
        %4986 = vmatpush.bf16.msra.mxu0 %v4091
        %4987 = vmatpush.bf16.msra.mxu0 %v4090
        %4988 = vmatmul.bf16.gmra.mxu0 %v1108
        %v4989 = vpop.f32.mrf.mxu0
        %v4990 = vadd.f32 %v4961, %v4989
        %v4991 = vpop.f32.mrf.mxu0
        %v4992 = vadd.f32 %v4963, %v4991
        %4993 = vmatmul.bf16.gmra.mxu0 %v1140
        %v4994 = vpop.f32.mrf.mxu0
        %v4995 = vadd.f32 %v4966, %v4994
        %v4996 = vpop.f32.mrf.mxu0
        %v4997 = vadd.f32 %v4968, %v4996
        %4998 = vmatmul.bf16.gmra.mxu0 %v1172
        %v4999 = vpop.f32.mrf.mxu0
        %v5000 = vadd.f32 %v4971, %v4999
        %v5001 = vpop.f32.mrf.mxu0
        %v5002 = vadd.f32 %v4973, %v5001
        %5003 = vmatmul.bf16.gmra.mxu0 %v1204
        %v5004 = vpop.f32.mrf.mxu0
        %v5005 = vadd.f32 %v4976, %v5004
        %v5006 = vpop.f32.mrf.mxu0
        %v5007 = vadd.f32 %v4978, %v5006
        %5008 = vdwg.mxu0
        %5009 = vmatpush.bf16.msra.mxu0 %v4105
        %5010 = vmatpush.bf16.msra.mxu0 %v4104
        %5011 = vmatpush.bf16.msra.mxu0 %v4103
        %5012 = vmatpush.bf16.msra.mxu0 %v4102
        %5013 = vmatpush.bf16.msra.mxu0 %v4101
        %5014 = vmatpush.bf16.msra.mxu0 %v4100
        %5015 = vmatpush.bf16.msra.mxu0 %v4099
        %5016 = vmatpush.bf16.msra.mxu0 %v4098
        %5017 = vmatmul.bf16.gmra.mxu0 %v1109
        %v5018 = vpop.f32.mrf.mxu0
        %v5019 = vadd.f32 %v4990, %v5018
        %v5020 = vpop.f32.mrf.mxu0
        %v5021 = vadd.f32 %v4992, %v5020
        %5022 = vmatmul.bf16.gmra.mxu0 %v1141
        %v5023 = vpop.f32.mrf.mxu0
        %v5024 = vadd.f32 %v4995, %v5023
        %v5025 = vpop.f32.mrf.mxu0
        %v5026 = vadd.f32 %v4997, %v5025
        %5027 = vmatmul.bf16.gmra.mxu0 %v1173
        %v5028 = vpop.f32.mrf.mxu0
        %v5029 = vadd.f32 %v5000, %v5028
        %v5030 = vpop.f32.mrf.mxu0
        %v5031 = vadd.f32 %v5002, %v5030
        %5032 = vmatmul.bf16.gmra.mxu0 %v1205
        %v5033 = vpop.f32.mrf.mxu0
        %v5034 = vadd.f32 %v5005, %v5033
        %v5035 = vpop.f32.mrf.mxu0
        %v5036 = vadd.f32 %v5007, %v5035
        %5037 = vdwg.mxu0
        %5038 = vmatpush.bf16.msra.mxu0 %v4113
        %5039 = vmatpush.bf16.msra.mxu0 %v4112
        %5040 = vmatpush.bf16.msra.mxu0 %v4111
        %5041 = vmatpush.bf16.msra.mxu0 %v4110
        %5042 = vmatpush.bf16.msra.mxu0 %v4109
        %5043 = vmatpush.bf16.msra.mxu0 %v4108
        %5044 = vmatpush.bf16.msra.mxu0 %v4107
        %5045 = vmatpush.bf16.msra.mxu0 %v4106
        %5046 = vmatmul.bf16.gmra.mxu0 %v1110
        %v5047 = vpop.f32.mrf.mxu0
        %v5048 = vadd.f32 %v5019, %v5047
        %v5049 = vpop.f32.mrf.mxu0
        %v5050 = vadd.f32 %v5021, %v5049
        %5051 = vmatmul.bf16.gmra.mxu0 %v1142
        %v5052 = vpop.f32.mrf.mxu0
        %v5053 = vadd.f32 %v5024, %v5052
        %v5054 = vpop.f32.mrf.mxu0
        %v5055 = vadd.f32 %v5026, %v5054
        %5056 = vmatmul.bf16.gmra.mxu0 %v1174
        %v5057 = vpop.f32.mrf.mxu0
        %v5058 = vadd.f32 %v5029, %v5057
        %v5059 = vpop.f32.mrf.mxu0
        %v5060 = vadd.f32 %v5031, %v5059
        %5061 = vmatmul.bf16.gmra.mxu0 %v1206
        %v5062 = vpop.f32.mrf.mxu0
        %v5063 = vadd.f32 %v5034, %v5062
        %v5064 = vpop.f32.mrf.mxu0
        %v5065 = vadd.f32 %v5036, %v5064
        %5066 = vdwg.mxu0
        %5067 = vmatpush.bf16.msra.mxu0 %v4121
        %5068 = vmatpush.bf16.msra.mxu0 %v4120
        %5069 = vmatpush.bf16.msra.mxu0 %v4119
        %5070 = vmatpush.bf16.msra.mxu0 %v4118
        %5071 = vmatpush.bf16.msra.mxu0 %v4117
        %5072 = vmatpush.bf16.msra.mxu0 %v4116
        %5073 = vmatpush.bf16.msra.mxu0 %v4115
        %5074 = vmatpush.bf16.msra.mxu0 %v4114
        %5075 = vmatmul.bf16.gmra.mxu0 %v1111
        %v5076 = vpop.f32.mrf.mxu0
        %v5077 = vadd.f32 %v5048, %v5076
        %v5078 = vpop.f32.mrf.mxu0
        %v5079 = vadd.f32 %v5050, %v5078
        %5080 = vmatmul.bf16.gmra.mxu0 %v1143
        %v5081 = vpop.f32.mrf.mxu0
        %v5082 = vadd.f32 %v5053, %v5081
        %v5083 = vpop.f32.mrf.mxu0
        %v5084 = vadd.f32 %v5055, %v5083
        %5085 = vmatmul.bf16.gmra.mxu0 %v1175
        %v5086 = vpop.f32.mrf.mxu0
        %v5087 = vadd.f32 %v5058, %v5086
        %v5088 = vpop.f32.mrf.mxu0
        %v5089 = vadd.f32 %v5060, %v5088
        %5090 = vmatmul.bf16.gmra.mxu0 %v1207
        %v5091 = vpop.f32.mrf.mxu0
        %v5092 = vadd.f32 %v5063, %v5091
        %v5093 = vpop.f32.mrf.mxu0
        %v5094 = vadd.f32 %v5065, %v5093
        %5095 = vdwg.mxu0
        %5096 = vmatpush.bf16.msra.mxu0 %v4129
        %5097 = vmatpush.bf16.msra.mxu0 %v4128
        %5098 = vmatpush.bf16.msra.mxu0 %v4127
        %5099 = vmatpush.bf16.msra.mxu0 %v4126
        %5100 = vmatpush.bf16.msra.mxu0 %v4125
        %5101 = vmatpush.bf16.msra.mxu0 %v4124
        %5102 = vmatpush.bf16.msra.mxu0 %v4123
        %5103 = vmatpush.bf16.msra.mxu0 %v4122
        %5104 = vmatmul.bf16.gmra.mxu0 %v1112
        %v5105 = vpop.f32.mrf.mxu0
        %v5106 = vadd.f32 %v5077, %v5105
        %v5107 = vpop.f32.mrf.mxu0
        %v5108 = vadd.f32 %v5079, %v5107
        %5109 = vmatmul.bf16.gmra.mxu0 %v1144
        %v5110 = vpop.f32.mrf.mxu0
        %v5111 = vadd.f32 %v5082, %v5110
        %v5112 = vpop.f32.mrf.mxu0
        %v5113 = vadd.f32 %v5084, %v5112
        %5114 = vmatmul.bf16.gmra.mxu0 %v1176
        %v5115 = vpop.f32.mrf.mxu0
        %v5116 = vadd.f32 %v5087, %v5115
        %v5117 = vpop.f32.mrf.mxu0
        %v5118 = vadd.f32 %v5089, %v5117
        %5119 = vmatmul.bf16.gmra.mxu0 %v1208
        %v5120 = vpop.f32.mrf.mxu0
        %v5121 = vadd.f32 %v5092, %v5120
        %v5122 = vpop.f32.mrf.mxu0
        %v5123 = vadd.f32 %v5094, %v5122
        %5124 = vdwg.mxu0
        %5125 = vmatpush.bf16.msra.mxu0 %v4137
        %5126 = vmatpush.bf16.msra.mxu0 %v4136
        %5127 = vmatpush.bf16.msra.mxu0 %v4135
        %5128 = vmatpush.bf16.msra.mxu0 %v4134
        %5129 = vmatpush.bf16.msra.mxu0 %v4133
        %5130 = vmatpush.bf16.msra.mxu0 %v4132
        %5131 = vmatpush.bf16.msra.mxu0 %v4131
        %5132 = vmatpush.bf16.msra.mxu0 %v4130
        %5133 = vmatmul.bf16.gmra.mxu0 %v1113
        %v5134 = vpop.f32.mrf.mxu0
        %v5135 = vadd.f32 %v5106, %v5134
        %v5136 = vpop.f32.mrf.mxu0
        %v5137 = vadd.f32 %v5108, %v5136
        %5138 = vmatmul.bf16.gmra.mxu0 %v1145
        %v5139 = vpop.f32.mrf.mxu0
        %v5140 = vadd.f32 %v5111, %v5139
        %v5141 = vpop.f32.mrf.mxu0
        %v5142 = vadd.f32 %v5113, %v5141
        %5143 = vmatmul.bf16.gmra.mxu0 %v1177
        %v5144 = vpop.f32.mrf.mxu0
        %v5145 = vadd.f32 %v5116, %v5144
        %v5146 = vpop.f32.mrf.mxu0
        %v5147 = vadd.f32 %v5118, %v5146
        %5148 = vmatmul.bf16.gmra.mxu0 %v1209
        %v5149 = vpop.f32.mrf.mxu0
        %v5150 = vadd.f32 %v5121, %v5149
        %v5151 = vpop.f32.mrf.mxu0
        %v5152 = vadd.f32 %v5123, %v5151
        %5153 = vdwg.mxu0
        %5154 = vmatpush.bf16.msra.mxu0 %v4145
        %5155 = vmatpush.bf16.msra.mxu0 %v4144
        %5156 = vmatpush.bf16.msra.mxu0 %v4143
        %5157 = vmatpush.bf16.msra.mxu0 %v4142
        %5158 = vmatpush.bf16.msra.mxu0 %v4141
        %5159 = vmatpush.bf16.msra.mxu0 %v4140
        %5160 = vmatpush.bf16.msra.mxu0 %v4139
        %5161 = vmatpush.bf16.msra.mxu0 %v4138
        %5162 = vmatmul.bf16.gmra.mxu0 %v1114
        %v5163 = vpop.f32.mrf.mxu0
        %v5164 = vadd.f32 %v5135, %v5163
        %v5165 = vpop.f32.mrf.mxu0
        %v5166 = vadd.f32 %v5137, %v5165
        %5167 = vmatmul.bf16.gmra.mxu0 %v1146
        %v5168 = vpop.f32.mrf.mxu0
        %v5169 = vadd.f32 %v5140, %v5168
        %v5170 = vpop.f32.mrf.mxu0
        %v5171 = vadd.f32 %v5142, %v5170
        %5172 = vmatmul.bf16.gmra.mxu0 %v1178
        %v5173 = vpop.f32.mrf.mxu0
        %v5174 = vadd.f32 %v5145, %v5173
        %v5175 = vpop.f32.mrf.mxu0
        %v5176 = vadd.f32 %v5147, %v5175
        %5177 = vmatmul.bf16.gmra.mxu0 %v1210
        %v5178 = vpop.f32.mrf.mxu0
        %v5179 = vadd.f32 %v5150, %v5178
        %v5180 = vpop.f32.mrf.mxu0
        %v5181 = vadd.f32 %v5152, %v5180
        %5182 = vdwg.mxu0
        %5183 = vmatpush.bf16.msra.mxu0 %v4153
        %5184 = vmatpush.bf16.msra.mxu0 %v4152
        %5185 = vmatpush.bf16.msra.mxu0 %v4151
        %5186 = vmatpush.bf16.msra.mxu0 %v4150
        %5187 = vmatpush.bf16.msra.mxu0 %v4149
        %5188 = vmatpush.bf16.msra.mxu0 %v4148
        %5189 = vmatpush.bf16.msra.mxu0 %v4147
        %5190 = vmatpush.bf16.msra.mxu0 %v4146
        %5191 = vmatmul.bf16.gmra.mxu0 %v1115
        %v5192 = vpop.f32.mrf.mxu0
        %v5193 = vadd.f32 %v5164, %v5192
        %v5194 = vpop.f32.mrf.mxu0
        %v5195 = vadd.f32 %v5166, %v5194
        %5196 = vmatmul.bf16.gmra.mxu0 %v1147
        %v5197 = vpop.f32.mrf.mxu0
        %v5198 = vadd.f32 %v5169, %v5197
        %v5199 = vpop.f32.mrf.mxu0
        %v5200 = vadd.f32 %v5171, %v5199
        %5201 = vmatmul.bf16.gmra.mxu0 %v1179
        %v5202 = vpop.f32.mrf.mxu0
        %v5203 = vadd.f32 %v5174, %v5202
        %v5204 = vpop.f32.mrf.mxu0
        %v5205 = vadd.f32 %v5176, %v5204
        %5206 = vmatmul.bf16.gmra.mxu0 %v1211
        %v5207 = vpop.f32.mrf.mxu0
        %v5208 = vadd.f32 %v5179, %v5207
        %v5209 = vpop.f32.mrf.mxu0
        %v5210 = vadd.f32 %v5181, %v5209
        %5211 = vdwg.mxu0
        %5212 = vmatpush.bf16.msra.mxu0 %v4161
        %5213 = vmatpush.bf16.msra.mxu0 %v4160
        %5214 = vmatpush.bf16.msra.mxu0 %v4159
        %5215 = vmatpush.bf16.msra.mxu0 %v4158
        %5216 = vmatpush.bf16.msra.mxu0 %v4157
        %5217 = vmatpush.bf16.msra.mxu0 %v4156
        %5218 = vmatpush.bf16.msra.mxu0 %v4155
        %5219 = vmatpush.bf16.msra.mxu0 %v4154
        %5220 = vmatmul.bf16.gmra.mxu0 %v1116
        %v5221 = vpop.f32.mrf.mxu0
        %v5222 = vadd.f32 %v5193, %v5221
        %v5223 = vpop.f32.mrf.mxu0
        %v5224 = vadd.f32 %v5195, %v5223
        %5225 = vmatmul.bf16.gmra.mxu0 %v1148
        %v5226 = vpop.f32.mrf.mxu0
        %v5227 = vadd.f32 %v5198, %v5226
        %v5228 = vpop.f32.mrf.mxu0
        %v5229 = vadd.f32 %v5200, %v5228
        %5230 = vmatmul.bf16.gmra.mxu0 %v1180
        %v5231 = vpop.f32.mrf.mxu0
        %v5232 = vadd.f32 %v5203, %v5231
        %v5233 = vpop.f32.mrf.mxu0
        %v5234 = vadd.f32 %v5205, %v5233
        %5235 = vmatmul.bf16.gmra.mxu0 %v1212
        %v5236 = vpop.f32.mrf.mxu0
        %v5237 = vadd.f32 %v5208, %v5236
        %v5238 = vpop.f32.mrf.mxu0
        %v5239 = vadd.f32 %v5210, %v5238
        %5240 = vdwg.mxu0
        %5241 = vmatpush.bf16.msra.mxu0 %v4169
        %5242 = vmatpush.bf16.msra.mxu0 %v4168
        %5243 = vmatpush.bf16.msra.mxu0 %v4167
        %5244 = vmatpush.bf16.msra.mxu0 %v4166
        %5245 = vmatpush.bf16.msra.mxu0 %v4165
        %5246 = vmatpush.bf16.msra.mxu0 %v4164
        %5247 = vmatpush.bf16.msra.mxu0 %v4163
        %5248 = vmatpush.bf16.msra.mxu0 %v4162
        %5249 = vmatmul.bf16.gmra.mxu0 %v1117
        %v5250 = vpop.f32.mrf.mxu0
        %v5251 = vadd.f32 %v5222, %v5250
        %v5252 = vpop.f32.mrf.mxu0
        %v5253 = vadd.f32 %v5224, %v5252
        %5254 = vmatmul.bf16.gmra.mxu0 %v1149
        %v5255 = vpop.f32.mrf.mxu0
        %v5256 = vadd.f32 %v5227, %v5255
        %v5257 = vpop.f32.mrf.mxu0
        %v5258 = vadd.f32 %v5229, %v5257
        %5259 = vmatmul.bf16.gmra.mxu0 %v1181
        %v5260 = vpop.f32.mrf.mxu0
        %v5261 = vadd.f32 %v5232, %v5260
        %v5262 = vpop.f32.mrf.mxu0
        %v5263 = vadd.f32 %v5234, %v5262
        %5264 = vmatmul.bf16.gmra.mxu0 %v1213
        %v5265 = vpop.f32.mrf.mxu0
        %v5266 = vadd.f32 %v5237, %v5265
        %v5267 = vpop.f32.mrf.mxu0
        %v5268 = vadd.f32 %v5239, %v5267
        %5269 = vdwg.mxu0
        %5270 = vmatpush.bf16.msra.mxu0 %v4177
        %5271 = vmatpush.bf16.msra.mxu0 %v4176
        %5272 = vmatpush.bf16.msra.mxu0 %v4175
        %5273 = vmatpush.bf16.msra.mxu0 %v4174
        %5274 = vmatpush.bf16.msra.mxu0 %v4173
        %5275 = vmatpush.bf16.msra.mxu0 %v4172
        %5276 = vmatpush.bf16.msra.mxu0 %v4171
        %5277 = vmatpush.bf16.msra.mxu0 %v4170
        %5278 = vmatmul.bf16.gmra.mxu0 %v1118
        %v5279 = vpop.f32.mrf.mxu0
        %v5280 = vadd.f32 %v5251, %v5279
        %v5281 = vpop.f32.mrf.mxu0
        %v5282 = vadd.f32 %v5253, %v5281
        %5283 = vmatmul.bf16.gmra.mxu0 %v1150
        %v5284 = vpop.f32.mrf.mxu0
        %v5285 = vadd.f32 %v5256, %v5284
        %v5286 = vpop.f32.mrf.mxu0
        %v5287 = vadd.f32 %v5258, %v5286
        %5288 = vmatmul.bf16.gmra.mxu0 %v1182
        %v5289 = vpop.f32.mrf.mxu0
        %v5290 = vadd.f32 %v5261, %v5289
        %v5291 = vpop.f32.mrf.mxu0
        %v5292 = vadd.f32 %v5263, %v5291
        %5293 = vmatmul.bf16.gmra.mxu0 %v1214
        %v5294 = vpop.f32.mrf.mxu0
        %v5295 = vadd.f32 %v5266, %v5294
        %v5296 = vpop.f32.mrf.mxu0
        %v5297 = vadd.f32 %v5268, %v5296
        %5298 = vdwg.mxu0
        %5299 = vmatpush.bf16.msra.mxu0 %v4185
        %5300 = vmatpush.bf16.msra.mxu0 %v4184
        %5301 = vmatpush.bf16.msra.mxu0 %v4183
        %5302 = vmatpush.bf16.msra.mxu0 %v4182
        %5303 = vmatpush.bf16.msra.mxu0 %v4181
        %5304 = vmatpush.bf16.msra.mxu0 %v4180
        %5305 = vmatpush.bf16.msra.mxu0 %v4179
        %5306 = vmatpush.bf16.msra.mxu0 %v4178
        %5307 = vmatmul.bf16.gmra.mxu0 %v1119
        %v5308 = vpop.f32.mrf.mxu0
        %v5309 = vadd.f32 %v5280, %v5308
        %v5310 = vpop.f32.mrf.mxu0
        %v5311 = vadd.f32 %v5282, %v5310
        %5312 = vmatmul.bf16.gmra.mxu0 %v1151
        %v5313 = vpop.f32.mrf.mxu0
        %v5314 = vadd.f32 %v5285, %v5313
        %v5315 = vpop.f32.mrf.mxu0
        %v5316 = vadd.f32 %v5287, %v5315
        %5317 = vmatmul.bf16.gmra.mxu0 %v1183
        %v5318 = vpop.f32.mrf.mxu0
        %v5319 = vadd.f32 %v5290, %v5318
        %v5320 = vpop.f32.mrf.mxu0
        %v5321 = vadd.f32 %v5292, %v5320
        %5322 = vmatmul.bf16.gmra.mxu0 %v1215
        %v5323 = vpop.f32.mrf.mxu0
        %v5324 = vadd.f32 %v5295, %v5323
        %v5325 = vpop.f32.mrf.mxu0
        %v5326 = vadd.f32 %v5297, %v5325
        %5327 = vdwg.mxu0
        %5328 = vmatpush.bf16.msra.mxu0 %v4193
        %5329 = vmatpush.bf16.msra.mxu0 %v4192
        %5330 = vmatpush.bf16.msra.mxu0 %v4191
        %5331 = vmatpush.bf16.msra.mxu0 %v4190
        %5332 = vmatpush.bf16.msra.mxu0 %v4189
        %5333 = vmatpush.bf16.msra.mxu0 %v4188
        %5334 = vmatpush.bf16.msra.mxu0 %v4187
        %5335 = vmatpush.bf16.msra.mxu0 %v4186
        %5336 = vmatmul.bf16.gmra.mxu0 %v1120
        %v5337 = vpop.f32.mrf.mxu0
        %v5338 = vadd.f32 %v5309, %v5337
        %v5339 = vpop.f32.mrf.mxu0
        %v5340 = vadd.f32 %v5311, %v5339
        %5341 = vmatmul.bf16.gmra.mxu0 %v1152
        %v5342 = vpop.f32.mrf.mxu0
        %v5343 = vadd.f32 %v5314, %v5342
        %v5344 = vpop.f32.mrf.mxu0
        %v5345 = vadd.f32 %v5316, %v5344
        %5346 = vmatmul.bf16.gmra.mxu0 %v1184
        %v5347 = vpop.f32.mrf.mxu0
        %v5348 = vadd.f32 %v5319, %v5347
        %v5349 = vpop.f32.mrf.mxu0
        %v5350 = vadd.f32 %v5321, %v5349
        %5351 = vmatmul.bf16.gmra.mxu0 %v1216
        %v5352 = vpop.f32.mrf.mxu0
        %v5353 = vadd.f32 %v5324, %v5352
        %v5354 = vpop.f32.mrf.mxu0
        %v5355 = vadd.f32 %v5326, %v5354
        %5356 = vdwg.mxu0
        %5357 = vmatpush.bf16.msra.mxu0 %v4201
        %5358 = vmatpush.bf16.msra.mxu0 %v4200
        %5359 = vmatpush.bf16.msra.mxu0 %v4199
        %5360 = vmatpush.bf16.msra.mxu0 %v4198
        %5361 = vmatpush.bf16.msra.mxu0 %v4197
        %5362 = vmatpush.bf16.msra.mxu0 %v4196
        %5363 = vmatpush.bf16.msra.mxu0 %v4195
        %5364 = vmatpush.bf16.msra.mxu0 %v4194
        %5365 = vmatmul.bf16.gmra.mxu0 %v1121
        %v5366 = vpop.f32.mrf.mxu0
        %v5367 = vadd.f32 %v5338, %v5366
        %v5368 = vpop.f32.mrf.mxu0
        %v5369 = vadd.f32 %v5340, %v5368
        %5370 = vmatmul.bf16.gmra.mxu0 %v1153
        %v5371 = vpop.f32.mrf.mxu0
        %v5372 = vadd.f32 %v5343, %v5371
        %v5373 = vpop.f32.mrf.mxu0
        %v5374 = vadd.f32 %v5345, %v5373
        %5375 = vmatmul.bf16.gmra.mxu0 %v1185
        %v5376 = vpop.f32.mrf.mxu0
        %v5377 = vadd.f32 %v5348, %v5376
        %v5378 = vpop.f32.mrf.mxu0
        %v5379 = vadd.f32 %v5350, %v5378
        %5380 = vmatmul.bf16.gmra.mxu0 %v1217
        %v5381 = vpop.f32.mrf.mxu0
        %v5382 = vadd.f32 %v5353, %v5381
        %v5383 = vpop.f32.mrf.mxu0
        %v5384 = vadd.f32 %v5355, %v5383
        %5385 = vdwg.mxu0
        %v5386 = vmul.f32 %v5367, %v5367
        %v5387 = vmul.f32 %v5369, %v5369
        %v5388 = vmul.f32 %v5372, %v5372
        %v5389 = vmul.f32 %v5374, %v5374
        %v5390 = vmul.f32 %v5377, %v5377
        %v5391 = vmul.f32 %v5379, %v5379
        %v5392 = vmul.f32 %v5382, %v5382
        %v5393 = vmul.f32 %v5384, %v5384
        %v5394 = vmul.f32 %v5367, %v5386
        %v5395 = vmul.f32 %v5369, %v5387
        %v5396 = vmul.f32 %v5372, %v5388
        %v5397 = vmul.f32 %v5374, %v5389
        %v5398 = vmul.f32 %v5377, %v5390
        %v5399 = vmul.f32 %v5379, %v5391
        %v5400 = vmul.f32 %v5382, %v5392
        %v5401 = vmul.f32 %v5384, %v5393
        %v5402 = vmul.f32 %v5394, 0.044715
        %v5403 = vmul.f32 %v5395, 0.044715
        %v5404 = vmul.f32 %v5396, 0.044715
        %v5405 = vmul.f32 %v5397, 0.044715
        %v5406 = vmul.f32 %v5398, 0.044715
        %v5407 = vmul.f32 %v5399, 0.044715
        %v5408 = vmul.f32 %v5400, 0.044715
        %v5409 = vmul.f32 %v5401, 0.044715
        %v5410 = vadd.f32 %v5367, %v5402
        %v5411 = vadd.f32 %v5369, %v5403
        %v5412 = vadd.f32 %v5372, %v5404
        %v5413 = vadd.f32 %v5374, %v5405
        %v5414 = vadd.f32 %v5377, %v5406
        %v5415 = vadd.f32 %v5379, %v5407
        %v5416 = vadd.f32 %v5382, %v5408
        %v5417 = vadd.f32 %v5384, %v5409
        %v5418 = vmul.f32 %v5410, 0.7978846
        %v5419 = vmul.f32 %v5411, 0.7978846
        %v5420 = vmul.f32 %v5412, 0.7978846
        %v5421 = vmul.f32 %v5413, 0.7978846
        %v5422 = vmul.f32 %v5414, 0.7978846
        %v5423 = vmul.f32 %v5415, 0.7978846
        %v5424 = vmul.f32 %v5416, 0.7978846
        %v5425 = vmul.f32 %v5417, 0.7978846
        %v5426 = vtanh.pop %v5418
        %v5427 = vtanh.pop %v5419
        %v5428 = vtanh.pop %v5420
        %v5429 = vtanh.pop %v5421
        %v5430 = vtanh.pop %v5422
        %v5431 = vtanh.pop %v5423
        %v5432 = vtanh.pop %v5424
        %v5433 = vtanh.pop %v5425
        %v5434 = vadd.f32 %v5426, 1.0
        %v5435 = vadd.f32 %v5427, 1.0
        %v5436 = vadd.f32 %v5428, 1.0
        %v5437 = vadd.f32 %v5429, 1.0
        %v5438 = vadd.f32 %v5430, 1.0
        %v5439 = vadd.f32 %v5431, 1.0
        %v5440 = vadd.f32 %v5432, 1.0
        %v5441 = vadd.f32 %v5433, 1.0
        %v5442 = vmul.f32 %v5434, 0.5
        %v5443 = vmul.f32 %v5435, 0.5
        %v5444 = vmul.f32 %v5436, 0.5
        %v5445 = vmul.f32 %v5437, 0.5
        %v5446 = vmul.f32 %v5438, 0.5
        %v5447 = vmul.f32 %v5439, 0.5
        %v5448 = vmul.f32 %v5440, 0.5
        %v5449 = vmul.f32 %v5441, 0.5
        %v5450 = vmul.f32 %v5367, %v5442
        %v5451 = vmul.f32 %v5369, %v5443
        %v5452 = vmul.f32 %v5372, %v5444
        %v5453 = vmul.f32 %v5374, %v5445
        %v5454 = vmul.f32 %v5377, %v5446
        %v5455 = vmul.f32 %v5379, %v5447
        %v5456 = vmul.f32 %v5382, %v5448
        %v5457 = vmul.f32 %v5384, %v5449
        %v5458 = vpack.c.bf16 %v5451, %v5450
        %v5459 = vpack.c.bf16 %v5453, %v5452
        %v5460 = vpack.c.bf16 %v5455, %v5454
        %v5461 = vpack.c.bf16 %v5457, %v5456
        %v5462 = vld [vmem:[%s329] sm:$0xff]
        %v5463 = vld [vmem:[%s329 + $0x8] sm:$0xff]
        %v5464 = vld [vmem:[%s329 + $0x10] sm:$0xff]
        %v5465 = vld [vmem:[%s329 + $0x18] sm:$0xff]
        %v5466 = vld [vmem:[%s329 + $0x20] sm:$0xff]
        %v5467 = vld [vmem:[%s329 + $0x28] sm:$0xff]
        %v5468 = vld [vmem:[%s329 + $0x30] sm:$0xff]
        %v5469 = vld [vmem:[%s329 + $0x38] sm:$0xff]
        %v5470 = vld [vmem:[%s329 + $0x40] sm:$0xff]
        %v5471 = vld [vmem:[%s329 + $0x48] sm:$0xff]
        %v5472 = vld [vmem:[%s329 + $0x50] sm:$0xff]
        %v5473 = vld [vmem:[%s329 + $0x58] sm:$0xff]
        %v5474 = vld [vmem:[%s329 + $0x60] sm:$0xff]
        %v5475 = vld [vmem:[%s329 + $0x68] sm:$0xff]
        %v5476 = vld [vmem:[%s329 + $0x70] sm:$0xff]
        %v5477 = vld [vmem:[%s329 + $0x78] sm:$0xff]
        %v5478 = vld [vmem:[%s329 + $0x80] sm:$0xff]
        %v5479 = vld [vmem:[%s329 + $0x88] sm:$0xff]
        %v5480 = vld [vmem:[%s329 + $0x90] sm:$0xff]
        %v5481 = vld [vmem:[%s329 + $0x98] sm:$0xff]
        %v5482 = vld [vmem:[%s329 + $0xa0] sm:$0xff]
        %v5483 = vld [vmem:[%s329 + $0xa8] sm:$0xff]
        %v5484 = vld [vmem:[%s329 + $0xb0] sm:$0xff]
        %v5485 = vld [vmem:[%s329 + $0xb8] sm:$0xff]
        %v5486 = vld [vmem:[%s329 + $0xc0] sm:$0xff]
        %v5487 = vld [vmem:[%s329 + $0xc8] sm:$0xff]
        %v5488 = vld [vmem:[%s329 + $0xd0] sm:$0xff]
        %v5489 = vld [vmem:[%s329 + $0xd8] sm:$0xff]
        %v5490 = vld [vmem:[%s329 + $0xe0] sm:$0xff]
        %v5491 = vld [vmem:[%s329 + $0xe8] sm:$0xff]
        %v5492 = vld [vmem:[%s329 + $0xf0] sm:$0xff]
        %v5493 = vld [vmem:[%s329 + $0xf8] sm:$0xff]
        %v5494 = vpack.c.bf16 %v5464, %v5462
        %v5495 = vpack.c.bf16 %v5465, %v5463
        %v5496 = vpack.c.bf16 %v5468, %v5466
        %v5497 = vpack.c.bf16 %v5469, %v5467
        %v5498 = vpack.c.bf16 %v5472, %v5470
        %v5499 = vpack.c.bf16 %v5473, %v5471
        %v5500 = vpack.c.bf16 %v5476, %v5474
        %v5501 = vpack.c.bf16 %v5477, %v5475
        %v5502 = vpack.c.bf16 %v5480, %v5478
        %v5503 = vpack.c.bf16 %v5481, %v5479
        %v5504 = vpack.c.bf16 %v5484, %v5482
        %v5505 = vpack.c.bf16 %v5485, %v5483
        %v5506 = vpack.c.bf16 %v5488, %v5486
        %v5507 = vpack.c.bf16 %v5489, %v5487
        %v5508 = vpack.c.bf16 %v5492, %v5490
        %v5509 = vpack.c.bf16 %v5493, %v5491
        %v5510 = vld [vmem:[%s400] sm:$0x3]
        %v5512 = vperm.slane %v5510, 0
        %v5513 = vperm.slane %v5510, 1
        %5516 = vmatpush.bf16.msra.mxu0 %v5508
        %5517 = vmatpush.bf16.msra.mxu0 %v5506
        %5518 = vmatpush.bf16.msra.mxu0 %v5504
        %5519 = vmatpush.bf16.msra.mxu0 %v5502
        %5520 = vmatpush.bf16.msra.mxu0 %v5500
        %5521 = vmatpush.bf16.msra.mxu0 %v5498
        %5522 = vmatpush.bf16.msra.mxu0 %v5496
        %5523 = vmatpush.bf16.msra.mxu0 %v5494
        %5524 = vmatmul.bf16.gmra.mxu0 %v5458
        %v5525 = vpop.f32.mrf.mxu0
        %v5526 = vadd.f32 %v5512, %v5525
        %v5527 = vpop.f32.mrf.mxu0
        %v5528 = vadd.f32 %v5512, %v5527
        %5529 = vmatmul.bf16.gmra.mxu0 %v5459
        %v5530 = vpop.f32.mrf.mxu0
        %v5531 = vadd.f32 %v5512, %v5530
        %v5532 = vpop.f32.mrf.mxu0
        %v5533 = vadd.f32 %v5512, %v5532
        %5534 = vmatmul.bf16.gmra.mxu0 %v5460
        %v5535 = vpop.f32.mrf.mxu0
        %v5536 = vadd.f32 %v5512, %v5535
        %v5537 = vpop.f32.mrf.mxu0
        %v5538 = vadd.f32 %v5512, %v5537
        %5539 = vmatmul.bf16.gmra.mxu0 %v5461
        %v5540 = vpop.f32.mrf.mxu0
        %v5541 = vadd.f32 %v5512, %v5540
        %v5542 = vpop.f32.mrf.mxu0
        %v5543 = vadd.f32 %v5512, %v5542
        %5544 = vdwg.mxu0
        %5545 = vmatpush.bf16.msra.mxu0 %v5509
        %5546 = vmatpush.bf16.msra.mxu0 %v5507
        %5547 = vmatpush.bf16.msra.mxu0 %v5505
        %5548 = vmatpush.bf16.msra.mxu0 %v5503
        %5549 = vmatpush.bf16.msra.mxu0 %v5501
        %5550 = vmatpush.bf16.msra.mxu0 %v5499
        %5551 = vmatpush.bf16.msra.mxu0 %v5497
        %5552 = vmatpush.bf16.msra.mxu0 %v5495
        %5553 = vmatmul.bf16.gmra.mxu0 %v5458
        %v5554 = vpop.f32.mrf.mxu0
        %v5555 = vadd.f32 %v5513, %v5554
        %v5556 = vpop.f32.mrf.mxu0
        %v5557 = vadd.f32 %v5513, %v5556
        %5558 = vmatmul.bf16.gmra.mxu0 %v5459
        %v5559 = vpop.f32.mrf.mxu0
        %v5560 = vadd.f32 %v5513, %v5559
        %v5561 = vpop.f32.mrf.mxu0
        %v5562 = vadd.f32 %v5513, %v5561
        %5563 = vmatmul.bf16.gmra.mxu0 %v5460
        %v5564 = vpop.f32.mrf.mxu0
        %v5565 = vadd.f32 %v5513, %v5564
        %v5566 = vpop.f32.mrf.mxu0
        %v5567 = vadd.f32 %v5513, %v5566
        %5568 = vmatmul.bf16.gmra.mxu0 %v5461
        %v5569 = vpop.f32.mrf.mxu0
        %v5570 = vadd.f32 %v5513, %v5569
        %v5571 = vpop.f32.mrf.mxu0
        %v5572 = vadd.f32 %v5513, %v5571
        %5573 = vdwg.mxu0
        %v5574 = vxor.u32 %v5555, 2147483648
        %v5575 = vxor.u32 %v5557, 2147483648
        %v5576 = vxor.u32 %v5560, 2147483648
        %v5577 = vxor.u32 %v5562, 2147483648
        %v5578 = vxor.u32 %v5565, 2147483648
        %v5579 = vxor.u32 %v5567, 2147483648
        %v5580 = vxor.u32 %v5570, 2147483648
        %v5581 = vxor.u32 %v5572, 2147483648
        %v5582 = vmul.f32 %v5574, 1.442695
        %v5583 = vpow.pop %v5582
        %v5584 = vmul.f32 %v5575, 1.442695
        %v5585 = vpow.pop %v5584
        %v5586 = vmul.f32 %v5576, 1.442695
        %v5587 = vpow.pop %v5586
        %v5588 = vmul.f32 %v5577, 1.442695
        %v5589 = vpow.pop %v5588
        %v5590 = vmul.f32 %v5578, 1.442695
        %v5591 = vpow.pop %v5590
        %v5592 = vmul.f32 %v5579, 1.442695
        %v5593 = vpow.pop %v5592
        %v5594 = vmul.f32 %v5580, 1.442695
        %v5595 = vpow.pop %v5594
        %v5596 = vmul.f32 %v5581, 1.442695
        %v5597 = vpow.pop %v5596
        %v5598 = vadd.f32 %v5583, 1.0
        %v5599 = vadd.f32 %v5585, 1.0
        %v5600 = vadd.f32 %v5587, 1.0
        %v5601 = vadd.f32 %v5589, 1.0
        %v5602 = vadd.f32 %v5591, 1.0
        %v5603 = vadd.f32 %v5593, 1.0
        %v5604 = vadd.f32 %v5595, 1.0
        %v5605 = vadd.f32 %v5597, 1.0
        %v5606 = vrcp.pop %v5598
        %v5607 = vmul.f32 %v5598, %v5606
        %v5608 = vsub.f32 1.0, %v5607
        %v5609 = vmul.f32 %v5606, %v5608
        %v5610 = vadd.f32 %v5606, %v5609
        %vm5611 = vweird.f32 %v5598
        %vm5612 = vweird.f32 %v5606
        %vm5613 = vmor %vm5611, %vm5612
        %v5614 = vsel %vm5613, %v5606, %v5610
        %v5615 = vand.u32 2147483647, %v5598
        %vm5616 = vcmp.eq.f32.partialorder %v5615, 8.507059e+37
        %v5617 = vand.u32 %v5598, 2147483648
        %v5618 = vor.u32 1.1754944e-38, %v5617
        %v5619 = vsel %vm5616, %v5618, %v5614
        %v5620 = vmul.f32 1.0, %v5619
        %v5621 = vrcp.pop %v5599
        %v5622 = vmul.f32 %v5599, %v5621
        %v5623 = vsub.f32 1.0, %v5622
        %v5624 = vmul.f32 %v5621, %v5623
        %v5625 = vadd.f32 %v5621, %v5624
        %vm5626 = vweird.f32 %v5599
        %vm5627 = vweird.f32 %v5621
        %vm5628 = vmor %vm5626, %vm5627
        %v5629 = vsel %vm5628, %v5621, %v5625
        %v5630 = vand.u32 2147483647, %v5599
        %vm5631 = vcmp.eq.f32.partialorder %v5630, 8.507059e+37
        %v5632 = vand.u32 %v5599, 2147483648
        %v5633 = vor.u32 1.1754944e-38, %v5632
        %v5634 = vsel %vm5631, %v5633, %v5629
        %v5635 = vmul.f32 1.0, %v5634
        %v5636 = vrcp.pop %v5600
        %v5637 = vmul.f32 %v5600, %v5636
        %v5638 = vsub.f32 1.0, %v5637
        %v5639 = vmul.f32 %v5636, %v5638
        %v5640 = vadd.f32 %v5636, %v5639
        %vm5641 = vweird.f32 %v5600
        %vm5642 = vweird.f32 %v5636
        %vm5643 = vmor %vm5641, %vm5642
        %v5644 = vsel %vm5643, %v5636, %v5640
        %v5645 = vand.u32 2147483647, %v5600
        %vm5646 = vcmp.eq.f32.partialorder %v5645, 8.507059e+37
        %v5647 = vand.u32 %v5600, 2147483648
        %v5648 = vor.u32 1.1754944e-38, %v5647
        %v5649 = vsel %vm5646, %v5648, %v5644
        %v5650 = vmul.f32 1.0, %v5649
        %v5651 = vrcp.pop %v5601
        %v5652 = vmul.f32 %v5601, %v5651
        %v5653 = vsub.f32 1.0, %v5652
        %v5654 = vmul.f32 %v5651, %v5653
        %v5655 = vadd.f32 %v5651, %v5654
        %vm5656 = vweird.f32 %v5601
        %vm5657 = vweird.f32 %v5651
        %vm5658 = vmor %vm5656, %vm5657
        %v5659 = vsel %vm5658, %v5651, %v5655
        %v5660 = vand.u32 2147483647, %v5601
        %vm5661 = vcmp.eq.f32.partialorder %v5660, 8.507059e+37
        %v5662 = vand.u32 %v5601, 2147483648
        %v5663 = vor.u32 1.1754944e-38, %v5662
        %v5664 = vsel %vm5661, %v5663, %v5659
        %v5665 = vmul.f32 1.0, %v5664
        %v5666 = vrcp.pop %v5602
        %v5667 = vmul.f32 %v5602, %v5666
        %v5668 = vsub.f32 1.0, %v5667
        %v5669 = vmul.f32 %v5666, %v5668
        %v5670 = vadd.f32 %v5666, %v5669
        %vm5671 = vweird.f32 %v5602
        %vm5672 = vweird.f32 %v5666
        %vm5673 = vmor %vm5671, %vm5672
        %v5674 = vsel %vm5673, %v5666, %v5670
        %v5675 = vand.u32 2147483647, %v5602
        %vm5676 = vcmp.eq.f32.partialorder %v5675, 8.507059e+37
        %v5677 = vand.u32 %v5602, 2147483648
        %v5678 = vor.u32 1.1754944e-38, %v5677
        %v5679 = vsel %vm5676, %v5678, %v5674
        %v5680 = vmul.f32 1.0, %v5679
        %v5681 = vrcp.pop %v5603
        %v5682 = vmul.f32 %v5603, %v5681
        %v5683 = vsub.f32 1.0, %v5682
        %v5684 = vmul.f32 %v5681, %v5683
        %v5685 = vadd.f32 %v5681, %v5684
        %vm5686 = vweird.f32 %v5603
        %vm5687 = vweird.f32 %v5681
        %vm5688 = vmor %vm5686, %vm5687
        %v5689 = vsel %vm5688, %v5681, %v5685
        %v5690 = vand.u32 2147483647, %v5603
        %vm5691 = vcmp.eq.f32.partialorder %v5690, 8.507059e+37
        %v5692 = vand.u32 %v5603, 2147483648
        %v5693 = vor.u32 1.1754944e-38, %v5692
        %v5694 = vsel %vm5691, %v5693, %v5689
        %v5695 = vmul.f32 1.0, %v5694
        %v5696 = vrcp.pop %v5604
        %v5697 = vmul.f32 %v5604, %v5696
        %v5698 = vsub.f32 1.0, %v5697
        %v5699 = vmul.f32 %v5696, %v5698
        %v5700 = vadd.f32 %v5696, %v5699
        %vm5701 = vweird.f32 %v5604
        %vm5702 = vweird.f32 %v5696
        %vm5703 = vmor %vm5701, %vm5702
        %v5704 = vsel %vm5703, %v5696, %v5700
        %v5705 = vand.u32 2147483647, %v5604
        %vm5706 = vcmp.eq.f32.partialorder %v5705, 8.507059e+37
        %v5707 = vand.u32 %v5604, 2147483648
        %v5708 = vor.u32 1.1754944e-38, %v5707
        %v5709 = vsel %vm5706, %v5708, %v5704
        %v5710 = vmul.f32 1.0, %v5709
        %v5711 = vrcp.pop %v5605
        %v5712 = vmul.f32 %v5605, %v5711
        %v5713 = vsub.f32 1.0, %v5712
        %v5714 = vmul.f32 %v5711, %v5713
        %v5715 = vadd.f32 %v5711, %v5714
        %vm5716 = vweird.f32 %v5605
        %vm5717 = vweird.f32 %v5711
        %vm5718 = vmor %vm5716, %vm5717
        %v5719 = vsel %vm5718, %v5711, %v5715
        %v5720 = vand.u32 2147483647, %v5605
        %vm5721 = vcmp.eq.f32.partialorder %v5720, 8.507059e+37
        %v5722 = vand.u32 %v5605, 2147483648
        %v5723 = vor.u32 1.1754944e-38, %v5722
        %v5724 = vsel %vm5721, %v5723, %v5719
        %v5725 = vmul.f32 1.0, %v5724
        %v5726 = vmul.f32 %v5526, %v5620
        %v5727 = vmul.f32 %v5528, %v5635
        %v5728 = vmul.f32 %v5531, %v5650
        %v5729 = vmul.f32 %v5533, %v5665
        %v5730 = vmul.f32 %v5536, %v5680
        %v5731 = vmul.f32 %v5538, %v5695
        %v5732 = vmul.f32 %v5541, %v5710
        %v5733 = vmul.f32 %v5543, %v5725
        %v5734 = vadd.f32 %v432, %v5726
        %v5735 = vadd.f32 %v433, %v5727
        %v5736 = vadd.f32 %v434, %v5728
        %v5737 = vadd.f32 %v435, %v5729
        %v5738 = vadd.f32 %v436, %v5730
        %v5739 = vadd.f32 %v437, %v5731
        %v5740 = vadd.f32 %v438, %v5732
        %v5741 = vadd.f32 %v439, %v5733
        %v5742 = vld [vmem:[%s403] sm:$0x1]
        %v5743 = vld [vmem:[%s406] sm:$0x1]
        %5744 = vadd.xlane.f32.xlu0 %v5734
        %v5745 = vpop.xlane.xlu0 %5744
        %5746 = vadd.xlane.f32.xlu0 %v5735
        %v5747 = vpop.xlane.xlu0 %5746
        %5748 = vadd.xlane.f32.xlu0 %v5736
        %v5749 = vpop.xlane.xlu0 %5748
        %5750 = vadd.xlane.f32.xlu0 %v5737
        %v5751 = vpop.xlane.xlu0 %5750
        %5752 = vadd.xlane.f32.xlu0 %v5738
        %v5753 = vpop.xlane.xlu0 %5752
        %5754 = vadd.xlane.f32.xlu0 %v5739
        %v5755 = vpop.xlane.xlu0 %5754
        %5756 = vadd.xlane.f32.xlu0 %v5740
        %v5757 = vpop.xlane.xlu0 %5756
        %5758 = vadd.xlane.f32.xlu0 %v5741
        %v5759 = vpop.xlane.xlu0 %5758
        %v5760 = vrcp.pop 128.0
        %v5761 = vmul.f32 128.0, %v5760
        %v5762 = vsub.f32 1.0, %v5761
        %v5763 = vmul.f32 %v5760, %v5762
        %v5764 = vadd.f32 %v5760, %v5763
        %vm5765 = vweird.f32 %v5760
        %v5766 = vsel %vm5765, %v5760, %v5764
        %v5767 = vmul.f32 %v5745, %v5766
        %v5768 = vmul.f32 %v5747, %v5766
        %v5769 = vmul.f32 %v5749, %v5766
        %v5770 = vmul.f32 %v5751, %v5766
        %v5771 = vmul.f32 %v5753, %v5766
        %v5772 = vmul.f32 %v5755, %v5766
        %v5773 = vmul.f32 %v5757, %v5766
        %v5774 = vmul.f32 %v5759, %v5766
        %v5775 = vsub.f32 %v5734, %v5767
        %v5776 = vsub.f32 %v5735, %v5768
        %v5777 = vsub.f32 %v5736, %v5769
        %v5778 = vsub.f32 %v5737, %v5770
        %v5779 = vsub.f32 %v5738, %v5771
        %v5780 = vsub.f32 %v5739, %v5772
        %v5781 = vsub.f32 %v5740, %v5773
        %v5782 = vsub.f32 %v5741, %v5774
        %v5783 = vmul.f32 %v5775, %v5775
        %v5784 = vmul.f32 %v5776, %v5776
        %v5785 = vmul.f32 %v5777, %v5777
        %v5786 = vmul.f32 %v5778, %v5778
        %v5787 = vmul.f32 %v5779, %v5779
        %v5788 = vmul.f32 %v5780, %v5780
        %v5789 = vmul.f32 %v5781, %v5781
        %v5790 = vmul.f32 %v5782, %v5782
        %5791 = vadd.xlane.f32.xlu0 %v5783
        %v5792 = vpop.xlane.xlu0 %5791
        %5793 = vadd.xlane.f32.xlu0 %v5784
        %v5794 = vpop.xlane.xlu0 %5793
        %5795 = vadd.xlane.f32.xlu0 %v5785
        %v5796 = vpop.xlane.xlu0 %5795
        %5797 = vadd.xlane.f32.xlu0 %v5786
        %v5798 = vpop.xlane.xlu0 %5797
        %5799 = vadd.xlane.f32.xlu0 %v5787
        %v5800 = vpop.xlane.xlu0 %5799
        %5801 = vadd.xlane.f32.xlu0 %v5788
        %v5802 = vpop.xlane.xlu0 %5801
        %5803 = vadd.xlane.f32.xlu0 %v5789
        %v5804 = vpop.xlane.xlu0 %5803
        %5805 = vadd.xlane.f32.xlu0 %v5790
        %v5806 = vpop.xlane.xlu0 %5805
        %v5807 = vmul.f32 %v5792, %v5766
        %v5808 = vmul.f32 %v5794, %v5766
        %v5809 = vmul.f32 %v5796, %v5766
        %v5810 = vmul.f32 %v5798, %v5766
        %v5811 = vmul.f32 %v5800, %v5766
        %v5812 = vmul.f32 %v5802, %v5766
        %v5813 = vmul.f32 %v5804, %v5766
        %v5814 = vmul.f32 %v5806, %v5766
        %v5815 = vadd.f32 %v5807, 1e-05
        %v5816 = vadd.f32 %v5808, 1e-05
        %v5817 = vadd.f32 %v5809, 1e-05
        %v5818 = vadd.f32 %v5810, 1e-05
        %v5819 = vadd.f32 %v5811, 1e-05
        %v5820 = vadd.f32 %v5812, 1e-05
        %v5821 = vadd.f32 %v5813, 1e-05
        %v5822 = vadd.f32 %v5814, 1e-05
        %v5823 = vrsqrt.pop %v5815
        %v5824 = vmul.f32 %v5823, %v5815
        %v5825 = vmul.f32 %v5824, %v5823
        %v5826 = vmul.f32 0.5, %v5825
        %v5827 = vsub.f32 1.5, %v5826
        %v5828 = vmul.f32 %v5823, %v5827
        %vm5829 = vweird.f32 %v5815
        %vm5830 = vweird.f32 %v5823
        %vm5831 = vmor %vm5829, %vm5830
        %v5832 = vsel %vm5831, %v5823, %v5828
        %v5833 = vrsqrt.pop %v5816
        %v5834 = vmul.f32 %v5833, %v5816
        %v5835 = vmul.f32 %v5834, %v5833
        %v5836 = vmul.f32 0.5, %v5835
        %v5837 = vsub.f32 1.5, %v5836
        %v5838 = vmul.f32 %v5833, %v5837
        %vm5839 = vweird.f32 %v5816
        %vm5840 = vweird.f32 %v5833
        %vm5841 = vmor %vm5839, %vm5840
        %v5842 = vsel %vm5841, %v5833, %v5838
        %v5843 = vrsqrt.pop %v5817
        %v5844 = vmul.f32 %v5843, %v5817
        %v5845 = vmul.f32 %v5844, %v5843
        %v5846 = vmul.f32 0.5, %v5845
        %v5847 = vsub.f32 1.5, %v5846
        %v5848 = vmul.f32 %v5843, %v5847
        %vm5849 = vweird.f32 %v5817
        %vm5850 = vweird.f32 %v5843
        %vm5851 = vmor %vm5849, %vm5850
        %v5852 = vsel %vm5851, %v5843, %v5848
        %v5853 = vrsqrt.pop %v5818
        %v5854 = vmul.f32 %v5853, %v5818
        %v5855 = vmul.f32 %v5854, %v5853
        %v5856 = vmul.f32 0.5, %v5855
        %v5857 = vsub.f32 1.5, %v5856
        %v5858 = vmul.f32 %v5853, %v5857
        %vm5859 = vweird.f32 %v5818
        %vm5860 = vweird.f32 %v5853
        %vm5861 = vmor %vm5859, %vm5860
        %v5862 = vsel %vm5861, %v5853, %v5858
        %v5863 = vrsqrt.pop %v5819
        %v5864 = vmul.f32 %v5863, %v5819
        %v5865 = vmul.f32 %v5864, %v5863
        %v5866 = vmul.f32 0.5, %v5865
        %v5867 = vsub.f32 1.5, %v5866
        %v5868 = vmul.f32 %v5863, %v5867
        %vm5869 = vweird.f32 %v5819
        %vm5870 = vweird.f32 %v5863
        %vm5871 = vmor %vm5869, %vm5870
        %v5872 = vsel %vm5871, %v5863, %v5868
        %v5873 = vrsqrt.pop %v5820
        %v5874 = vmul.f32 %v5873, %v5820
        %v5875 = vmul.f32 %v5874, %v5873
        %v5876 = vmul.f32 0.5, %v5875
        %v5877 = vsub.f32 1.5, %v5876
        %v5878 = vmul.f32 %v5873, %v5877
        %vm5879 = vweird.f32 %v5820
        %vm5880 = vweird.f32 %v5873
        %vm5881 = vmor %vm5879, %vm5880
        %v5882 = vsel %vm5881, %v5873, %v5878
        %v5883 = vrsqrt.pop %v5821
        %v5884 = vmul.f32 %v5883, %v5821
        %v5885 = vmul.f32 %v5884, %v5883
        %v5886 = vmul.f32 0.5, %v5885
        %v5887 = vsub.f32 1.5, %v5886
        %v5888 = vmul.f32 %v5883, %v5887
        %vm5889 = vweird.f32 %v5821
        %vm5890 = vweird.f32 %v5883
        %vm5891 = vmor %vm5889, %vm5890
        %v5892 = vsel %vm5891, %v5883, %v5888
        %v5893 = vrsqrt.pop %v5822
        %v5894 = vmul.f32 %v5893, %v5822
        %v5895 = vmul.f32 %v5894, %v5893
        %v5896 = vmul.f32 0.5, %v5895
        %v5897 = vsub.f32 1.5, %v5896
        %v5898 = vmul.f32 %v5893, %v5897
        %vm5899 = vweird.f32 %v5822
        %vm5900 = vweird.f32 %v5893
        %vm5901 = vmor %vm5899, %vm5900
        %v5902 = vsel %vm5901, %v5893, %v5898
        %v5903 = vmul.f32 %v5775, %v5832
        %v5904 = vmul.f32 %v5776, %v5842
        %v5905 = vmul.f32 %v5777, %v5852
        %v5906 = vmul.f32 %v5778, %v5862
        %v5907 = vmul.f32 %v5779, %v5872
        %v5908 = vmul.f32 %v5780, %v5882
        %v5909 = vmul.f32 %v5781, %v5892
        %v5910 = vmul.f32 %v5782, %v5902
        %v5912 = vperm.slane %v5742, 0
        %v5914 = vmul.f32 %v5903, %v5912
        %v5915 = vmul.f32 %v5904, %v5912
        %v5916 = vmul.f32 %v5905, %v5912
        %v5917 = vmul.f32 %v5906, %v5912
        %v5918 = vmul.f32 %v5907, %v5912
        %v5919 = vmul.f32 %v5908, %v5912
        %v5920 = vmul.f32 %v5909, %v5912
        %v5921 = vmul.f32 %v5910, %v5912
        %v5923 = vperm.slane %v5743, 0
        %v5925 = vadd.f32 %v5914, %v5923
        %v5926 = vadd.f32 %v5915, %v5923
        %v5927 = vadd.f32 %v5916, %v5923
        %v5928 = vadd.f32 %v5917, %v5923
        %v5929 = vadd.f32 %v5918, %v5923
        %v5930 = vadd.f32 %v5919, %v5923
        %v5931 = vadd.f32 %v5920, %v5923
        %v5932 = vadd.f32 %v5921, %v5923
        %5933 = vst [vmem:[#allocation2] sm:$0xff] %v5925
        %5934 = vst [vmem:[#allocation2 + $0x8] sm:$0xff] %v5926
        %5935 = vst [vmem:[#allocation2 + $0x10] sm:$0xff] %v5927
        %5936 = vst [vmem:[#allocation2 + $0x18] sm:$0xff] %v5928
        %5937 = vst [vmem:[#allocation2 + $0x20] sm:$0xff] %v5929
        %5938 = vst [vmem:[#allocation2 + $0x28] sm:$0xff] %v5930
        %5939 = vst [vmem:[#allocation2 + $0x30] sm:$0xff] %v5931
        %5940 = vst [vmem:[#allocation2 + $0x38] sm:$0xff] %v5932
        %5941 = vst [vmem:[%s411] sm:$0xff] %v5925
        %5942 = vst [vmem:[%s411 + $0x8] sm:$0xff] %v5926
        %5943 = vst [vmem:[%s411 + $0x10] sm:$0xff] %v5927
        %5944 = vst [vmem:[%s411 + $0x18] sm:$0xff] %v5928
        %5945 = vst [vmem:[%s411 + $0x20] sm:$0xff] %v5929
        %5946 = vst [vmem:[%s411 + $0x28] sm:$0xff] %v5930
        %5947 = vst [vmem:[%s411 + $0x30] sm:$0xff] %v5931
        %5948 = vst [vmem:[%s411 + $0x38] sm:$0xff] %v5932
        %p5949 = scmp.lt.s32.totalorder %s25, 1
        %s5950 = scalar_select %p5949, %s25, 1
        %s5951 = smul.addr %s5950, 8
        %s5952 = smul.addr %s5951, 8
        %s5953 = scalar_lea.vmem %s7, %s5952
        // Predicated region
        $region57: #{ssm_forward.1} parent=47 // pred_check
          %p5954 = pneg %p233
        $region58: #{ssm_forward.1} parent=47 // pred_check_branch
          %5956 = sbr.rel (%p5954) target = $region60
        $region59: #{ssm_forward.1} parent=47 // pred_region
          _
        $region60: #{ssm_forward.1} parent=47 // pred_fallthru
          _
      $region48: #{ssm_forward.1} parent=5 // pred_fallthru
        _
      %p5957 = scmp.le.s32.totalorder 2, %s16
      // Predicated region
      $region61: #{ssm_forward.1} parent=5 // pred_check
        %p5958 = pneg %p5957
      $region62: #{ssm_forward.1} parent=5 // pred_check_branch
        %5960 = sbr.rel (%p5958) target = $region64
      $region63: #{ssm_forward.1} parent=5 // pred_region
        %s5961 = ssub.s32 %s16, 2
        // Predicated region
        $region65: #{ssm_forward.1} parent=63 // pred_check
          %p5962 = pneg %p239
        $region66: #{ssm_forward.1} parent=63 // pred_check_branch
          %5964 = sbr.rel (%p5962) target = $region68
        $region67: #{ssm_forward.1} parent=63 // pred_region
          %p5965 = scmp.lt.s32.totalorder %s27, 1
          %s5966 = scalar_select %p5965, %s27, 1
          %s5967 = smul.addr %s5966, 8
          %s5968 = smul.addr %s5967, 8
          %s5969 = scalar_lea.vmem %s7, %s5968
        $region68: #{ssm_forward.1} parent=63 // pred_fallthru
          _
      $region64: #{ssm_forward.1} parent=5 // pred_fallthru
        _
    $region6: #{ssm_forward.1} parent=1 // loop_footer
      %s20 = sadd.s32 1, %s16
    $region7: #{ssm_forward.1} parent=1 // loop_footer_branch
      %15 = sbr.rel target = $region3
    $region8: #{ssm_forward.1} parent=1 // loop_exit
      _
    %5970 = vsyncpa [#allocation4], 1
    %s5971 = scalar_lea.sflag [#allocation4], 1
    %5972 = vsyncpa %s5971, 1

</llo_original>
